<compile_context>
chip_gen: v7x
topology: tpu7x:2x2x1
jax: 0.10.0
libtpu: 0.0.40
codegen_flags: <defaults>
</compile_context>

<pallas_src>
import functools

import jax
import jax.numpy as jnp
from jax.experimental import pallas as pl
from jax.experimental.pallas import tpu as pltpu


# ----------------------------------------------------------------------------
# Pallas kernels
# ----------------------------------------------------------------------------
def _bilstm_kernel(x_ref, wih_ref, whh_ref, b_ref, out_ref, h_ref, c_ref, *, Tc, B, H):
    """One (direction, time-chunk) grid step of a bidirectional LSTM.

    grid = (2, T//Tc): dim 0 = direction (parallel; fwd reads the forward time-major slab,
    bwd reads the pre-reversed slab), dim 1 = time chunk (arbitrary; h/c carried in scratch).

    x_ref   : [Tc*B, E]  time-major rows of this chunk for this direction
    wih_ref : [E, 4H]    gate columns repacked to (i, f, o, g)
    whh_ref : [H, 4H]
    b_ref   : [1, 4H]    b_ih + b_hh
    out_ref : [B, H]     this direction's half of concat(final fwd h, final bwd h)
    h_ref/c_ref : [B, H] f32 carries
    """
    chunk = pl.program_id(1)

    @pl.when(chunk == 0)
    def _():
        h_ref[...] = jnp.zeros_like(h_ref)
        c_ref[...] = jnp.zeros_like(c_ref)

    # Hoisted input projection for the whole chunk: bf16 MXU operands, f32 accumulate.
    x = x_ref[...].astype(jnp.bfloat16)                                    # [Tc*B, E]
    wih = wih_ref[...].astype(jnp.bfloat16)                                # [E, 4H]
    gx = jnp.dot(x, wih, preferred_element_type=jnp.float32) + b_ref[...]  # [Tc*B, 4H] f32

    whh = whh_ref[...].astype(jnp.bfloat16)                                # [H, 4H]

    h = h_ref[...]
    c = c_ref[...]
    # TODO(synk): at real chunk sizes (Tc >> 8) use lax.fori_loop(unroll=2..4) to bound
    #             vreg live ranges; full static unroll is fine at Tc=4.
    for s in range(Tc):
        gates = gx[s * B:(s + 1) * B, :] + jnp.dot(
            h.astype(jnp.bfloat16), whh, preferred_element_type=jnp.float32)  # [B, 4H] f32
        # Gate columns repacked host-side to (i, f, o, g): one contiguous sigmoid over 3H
        # lanes + one tanh over H lanes.
        sig = jax.nn.sigmoid(gates[:, :3 * H])
        i_g = sig[:, 0 * H:1 * H]
        f_g = sig[:, 1 * H:2 * H]
        o_g = sig[:, 2 * H:3 * H]
        g_g = jnp.tanh(gates[:, 3 * H:])
        c = f_g * c + i_g * g_g            # elementwise gate math stays f32 (v5e-friendly)
        h = o_g * jnp.tanh(c)
    h_ref[...] = h
    c_ref[...] = c

    @pl.when(chunk == pl.num_programs(1) - 1)
    def _():
        out_ref[...] = h.astype(out_ref.dtype)


def _fuse_loss_kernel(name_ref, api_ref, tok_ref, desc_ref,
                      w_name_ref, w_api_ref, w_tok_ref, b_ref, out_ref, *, margin):
    """BOW max-pool + fuse Linear + tanh + cosine similarities + margin ranking loss."""
    B = name_ref.shape[0]
    bf = jnp.bfloat16

    # BOWEncoder fused in: max over sequence then tanh.
    tok = jnp.tanh(jnp.max(tok_ref[...], axis=1))                          # [B, E]

    # concat(name, api, tok) @ W == name@W_n + api@W_a + tok@W_t  (W split row-wise).
    z = (jnp.dot(name_ref[...].astype(bf), w_name_ref[...].astype(bf),
                 preferred_element_type=jnp.float32)
         + jnp.dot(api_ref[...].astype(bf), w_api_ref[...].astype(bf),
                   preferred_element_type=jnp.float32)
         + jnp.dot(tok.astype(bf), w_tok_ref[...].astype(bf),
                   preferred_element_type=jnp.float32)
         + b_ref[...])
    code = jnp.tanh(z)                                                     # [B, n_hidden] f32

    desc = desc_ref[...]                                                   # [2B, 2H] f32
    dg = desc[:B]
    db = desc[B:]
    eps = jnp.float32(1e-8)

    def cos(a, b):
        # F.cosine_similarity(dim=1), modern PyTorch: each norm clamped separately.
        num = jnp.sum(a * b, axis=1)
        na = jnp.maximum(jnp.sqrt(jnp.sum(a * a, axis=1)), eps)
        nb = jnp.maximum(jnp.sqrt(jnp.sum(b * b, axis=1)), eps)
        return num / (na * nb)

    good_sim = cos(code, dg)
    bad_sim = cos(code, db)
    loss = jnp.maximum(jnp.float32(margin) - good_sim + bad_sim, jnp.float32(1e-6))
    out_ref[...] = loss[None, :]                                           # [1, B]


# ----------------------------------------------------------------------------
# Pallas wrappers
# ----------------------------------------------------------------------------
def bilstm_encode(x_both, batch, seq_len, wih, whh, b, *, t_chunk):
    """x_both: [2, T*B, E] (slab 0 forward time-major, slab 1 reversed). Returns [B, 2H]."""
    assert seq_len % t_chunk == 0
    H = whh.shape[1]
    E = x_both.shape[-1]
    n_chunks = seq_len // t_chunk

    flops = 4 * seq_len * batch * 4 * H * (E + H)            # 2 dirs * 2 * T*B*4H*(E+H)
    transcendentals = 2 * seq_len * batch * 5 * H            # sigmoid(3H)+tanh(H)+tanh(H)
    bytes_accessed = 4 * (x_both.size + wih.size + whh.size + b.size + batch * 2 * H)

    return pl.pallas_call(
        functools.partial(_bilstm_kernel, Tc=t_chunk, B=batch, H=H),
        out_shape=jax.ShapeDtypeStruct((batch, 2 * H), jnp.float32),
        grid_spec=pltpu.PrefetchScalarGridSpec(
            num_scalar_prefetch=0,
            grid=(2, n_chunks),
            in_specs=[
                pl.BlockSpec((None, t_chunk * batch, E), lambda d, c: (d, c, 0)),
                pl.BlockSpec((None, E, 4 * H), lambda d, c: (d, 0, 0)),
                pl.BlockSpec((None, H, 4 * H), lambda d, c: (d, 0, 0)),
                pl.BlockSpec((None, 1, 4 * H), lambda d, c: (d, 0, 0)),
            ],
            out_specs=pl.BlockSpec((batch, H), lambda d, c: (0, d)),
            scratch_shapes=[pltpu.VMEM((batch, H), jnp.float32),
                            pltpu.VMEM((batch, H), jnp.float32)],
        ),
        compiler_params=pltpu.CompilerParams(
            dimension_semantics=("parallel", "arbitrary"),
            vmem_limit_bytes=32 * 1024 * 1024),
        cost_estimate=pl.CostEstimate(flops=int(flops),
                                      transcendentals=int(transcendentals),
                                      bytes_accessed=int(bytes_accessed)),
    )(x_both, wih, whh, b)


def fuse_and_loss(margin, name_repr, api_repr, tok_emb, desc_repr,
                  w_name, w_api, w_tok, b_fuse):
    B = name_repr.shape[0]
    # TODO(synk): at real sizes (B>=256, Lt~50) tile this over B (grid=(B//128,)) so the
    #             tok_emb block fits v7x's 64 MiB VMEM; whole-array blocks are fine here.
    out = pl.pallas_call(
        functools.partial(_fuse_loss_kernel, margin=margin),
        out_shape=jax.ShapeDtypeStruct((1, B), jnp.float32),
        compiler_params=pltpu.CompilerParams(vmem_limit_bytes=32 * 1024 * 1024),
    )(name_repr, api_repr, tok_emb, desc_repr, w_name, w_api, w_tok, b_fuse)
    return out[0]                                                          # [B]


# ----------------------------------------------------------------------------
# Model: parameters + forward
# ----------------------------------------------------------------------------
def _repack_gates(w, H):
    """Reorder gate columns from PyTorch (i, f, g, o) to (i, f, o, g)."""
    return jnp.concatenate([w[:, :2 * H], w[:, 3 * H:], w[:, 2 * H:3 * H]], axis=1)


def init_params(key, n_words, emb_size, lstm_dims, n_hidden):
    """Deterministic synthetic init matching the PyTorch parameter shapes."""
    params = {}
    ks = iter(jax.random.split(key, 64))

    def rnd(shape, scale=0.1):
        return (scale * jax.random.normal(next(ks), shape)).astype(jnp.float32)

    def seq_encoder(prefix):
        params[f"{prefix}_emb"] = rnd((n_words, emb_size))
        wihs, whhs, bs = [], [], []
        for _d in ("fwd", "bwd"):
            # PyTorch shapes: weight_ih [4H, E], weight_hh [4H, H], biases [4H] each.
            w_ih = rnd((4 * lstm_dims, emb_size))
            w_hh = rnd((4 * lstm_dims, lstm_dims))
            b_ih = rnd((4 * lstm_dims,))
            b_hh = rnd((4 * lstm_dims,))
            wihs.append(_repack_gates(jnp.transpose(w_ih), lstm_dims))     # [E, 4H]
            whhs.append(_repack_gates(jnp.transpose(w_hh), lstm_dims))     # [H, 4H]
            bs.append(_repack_gates((b_ih + b_hh)[None, :], lstm_dims))    # [1, 4H]
        params[f"{prefix}_wih"] = jnp.stack(wihs)                          # [2, E, 4H]
        params[f"{prefix}_whh"] = jnp.stack(whhs)                          # [2, H, 4H]
        params[f"{prefix}_b"] = jnp.stack(bs)                              # [2, 1, 4H]

    seq_encoder("name")
    seq_encoder("api")
    seq_encoder("desc")
    params["tok_emb"] = rnd((n_words, emb_size))

    # fuse: nn.Linear(emb_size + 4*lstm_dims, n_hidden); PyTorch weight is [out, in].
    w_fuse = rnd((n_hidden, emb_size + 4 * lstm_dims))
    b_fuse = rnd((n_hidden,))
    wt = jnp.transpose(w_fuse)                                             # [in, out]
    two_h = 2 * lstm_dims
    params["fuse_w_name"] = wt[:two_h]                                     # [2H, n_hidden]
    params["fuse_w_api"] = wt[two_h:2 * two_h]                             # [2H, n_hidden]
    params["fuse_w_tok"] = wt[2 * two_h:]                                  # [E,  n_hidden]
    params["fuse_b"] = b_fuse[None, :]                                     # [1, n_hidden]
    return params


def _gather_time_major_both(emb_table, ids):
    """ids [B, T] -> [2, T*B, E]: slab 0 forward time-major, slab 1 time-reversed.

    The reversal happens on the tiny int id matrix before the gather, so the backward
    LSTM direction consumes its chunks in plain forward order (no runtime branching in
    the kernel and no activation transpose/reverse in XLA).
    """
    B, T = ids.shape
    ids_t = jnp.transpose(ids)                                             # [T, B]
    both = jnp.stack([ids_t.reshape(T * B),
                      ids_t[::-1].reshape(T * B)], axis=0)                 # [2, T*B]
    return jnp.take(emb_table, both, axis=0)                               # [2, T*B, E]


def seq_encode(params, prefix, ids, *, t_chunk=4):
    """SeqEncoder: embedding -> BiLSTM -> concat(final fwd h, final bwd h)."""
    B, T = ids.shape
    x_both = _gather_time_major_both(params[f"{prefix}_emb"], ids)
    tc = t_chunk if T % t_chunk == 0 else T
    return bilstm_encode(x_both, B, T,
                         params[f"{prefix}_wih"], params[f"{prefix}_whh"],
                         params[f"{prefix}_b"], t_chunk=tc)                # [B, 2H]


def joint_embeder_forward(params, margin, name, apiseq, tokens, desc_good, desc_bad):
    name_repr = seq_encode(params, "name", name)                           # [B, 2H]
    api_repr = seq_encode(params, "api", apiseq)                           # [B, 2H]
    # desc_good / desc_bad share the desc encoder weights -> one BiLSTM pass at batch 2B.
    desc_ids = jnp.concatenate([desc_good, desc_bad], axis=0)              # [2B, T]
    desc_repr = seq_encode(params, "desc", desc_ids)                       # [2B, 2H]
    tok_emb = jnp.take(params["tok_emb"], tokens, axis=0)                  # [B, Lt, E]
    return fuse_and_loss(margin, name_repr, api_repr, tok_emb, desc_repr,
                         params["fuse_w_name"], params["fuse_w_api"],
                         params["fuse_w_tok"], params["fuse_b"])           # [B]


# ----------------------------------------------------------------------------
# Main
# ----------------------------------------------------------------------------
if __name__ == "__main__":
    # Small but hardware-aligned config (n_hidden == 2*lstm_dims, required by cosine).
    n_words, emb_size, lstm_dims, n_hidden, margin = 50, 128, 128, 256, 0.6
    B, T_seq, T_tok = 8, 8, 16

    key = jax.random.PRNGKey(0)
    k_param, k_name, k_api, k_tok, k_dg, k_db = jax.random.split(key, 6)
    params = init_params(k_param, n_words, emb_size, lstm_dims, n_hidden)

    name = jax.random.randint(k_name, (B, T_seq), 0, n_words, dtype=jnp.int32)
    apiseq = jax.random.randint(k_api, (B, T_seq), 0, n_words, dtype=jnp.int32)
    tokens = jax.random.randint(k_tok, (B, T_tok), 0, n_words, dtype=jnp.int32)
    desc_good = jax.random.randint(k_dg, (B, T_seq), 0, n_words, dtype=jnp.int32)
    desc_bad = jax.random.randint(k_db, (B, T_seq), 0, n_words, dtype=jnp.int32)

    forward = jax.jit(joint_embeder_forward, static_argnums=(1,))
    loss = forward(params, margin, name, apiseq, tokens, desc_good, desc_bad)
    loss = jax.block_until_ready(loss)
    assert loss.shape == (B,) and loss.dtype == jnp.float32
    assert bool(jnp.all(loss >= 1e-6))
    print("KERNEL_OK")
</pallas_src>

<mosaic_0001>
module attributes {stable_mosaic.version = 11 : i64} {
  func.func @_bilstm_kernel(%arg0: i32, %arg1: i32, %arg2: memref<1x64x128xf32, #tpu.memory_space<vmem>>, %arg3: memref<1x128x512xf32, #tpu.memory_space<vmem>>, %arg4: memref<1x128x512xf32, #tpu.memory_space<vmem>>, %arg5: memref<1x1x512xf32, #tpu.memory_space<vmem>>, %arg6: memref<16x128xf32, #tpu.memory_space<vmem>>, %arg7: memref<16x128xf32, #tpu.memory_space<vmem>>, %arg8: memref<16x128xf32, #tpu.memory_space<vmem>>) attributes {dimension_semantics = [#tpu.dimension_semantics<parallel>, #tpu.dimension_semantics<arbitrary>], iteration_bounds = array<i64: 2, 2>, scalar_prefetch = 0 : i64, scratch_operands = 2 : i64, tpu.core_type = #tpu.core_type<tc>, window_params = [{transform_indices = @transform_0, window_bounds = array<i64: 1, 64, 128>}, {transform_indices = @transform_1, window_bounds = array<i64: 1, 128, 512>}, {transform_indices = @transform_2, window_bounds = array<i64: 1, 128, 512>}, {transform_indices = @transform_3, window_bounds = array<i64: 1, 1, 512>}, {transform_indices = @transform_4, window_bounds = array<i64: 16, 128>}]} {
    %c0_i32 = arith.constant 0 : i32
    %0 = arith.cmpi eq, %arg1, %c0_i32 : i32
    %1 = arith.extui %0 : i1 to i32
    %c0_i32_0 = arith.constant 0 : i32
    %2 = arith.cmpi ne, %1, %c0_i32_0 : i32
    scf.if %2 {
      %cst_29 = arith.constant 0.000000e+00 : f32
      %104 = vector.broadcast %cst_29 : f32 to vector<16x128xf32>
      %c0_30 = arith.constant 0 : index
      %c0_31 = arith.constant 0 : index
      %105 = vector.load %arg7[%c0_30, %c0_31] : memref<16x128xf32, #tpu.memory_space<vmem>>, vector<16x128xf32>
      tpu.vector_store %arg7[%c0_30, %c0_31], %104 {strides = array<i32>} : memref<16x128xf32, #tpu.memory_space<vmem>>, vector<16x128xf32>,
      %cst_32 = arith.constant 0.000000e+00 : f32
      %106 = vector.broadcast %cst_32 : f32 to vector<16x128xf32>
      %c0_33 = arith.constant 0 : index
      %c0_34 = arith.constant 0 : index
      %107 = vector.load %arg8[%c0_33, %c0_34] : memref<16x128xf32, #tpu.memory_space<vmem>>, vector<16x128xf32>
      tpu.vector_store %arg8[%c0_33, %c0_34], %106 {strides = array<i32>} : memref<16x128xf32, #tpu.memory_space<vmem>>, vector<16x128xf32>,
    } else {
    }
    %c0 = arith.constant 0 : index
    %c0_1 = arith.constant 0 : index
    %c0_2 = arith.constant 0 : index
    %3 = vector.load %arg2[%c0, %c0_1, %c0_2] : memref<1x64x128xf32, #tpu.memory_space<vmem>>, vector<1x64x128xf32>
    %4 = vector.shape_cast %3 : vector<1x64x128xf32> to vector<64x128xf32>
    %5 = arith.truncf %4 : vector<64x128xf32> to vector<64x128xbf16>
    %c0_3 = arith.constant 0 : index
    %c0_4 = arith.constant 0 : index
    %c0_5 = arith.constant 0 : index
    %6 = vector.load %arg3[%c0_3, %c0_4, %c0_5] : memref<1x128x512xf32, #tpu.memory_space<vmem>>, vector<1x128x512xf32>
    %7 = vector.shape_cast %6 : vector<1x128x512xf32> to vector<128x512xf32>
    %8 = arith.truncf %7 : vector<128x512xf32> to vector<128x512xbf16>
    %cst = arith.constant dense<0.000000e+00> : vector<64x512xf32>
    %9 = tpu.matmul %5, %8, %cst {dimension_numbers = #tpu.dot_dimension_numbers<[1], [0], [0], [1], [0, 0, 1, 1], [], []>} : vector<64x128xbf16>, vector<128x512xbf16>, vector<64x512xf32> -> vector<64x512xf32>
    %c0_6 = arith.constant 0 : index
    %c0_7 = arith.constant 0 : index
    %c0_8 = arith.constant 0 : index
    %10 = vector.load %arg5[%c0_6, %c0_7, %c0_8] : memref<1x1x512xf32, #tpu.memory_space<vmem>>, vector<1x1x512xf32>
    %11 = vector.shape_cast %10 : vector<1x1x512xf32> to vector<1x512xf32>
    %12 = vector.broadcast %11 : vector<1x512xf32> to vector<64x512xf32>
    %13 = arith.addf %9, %12 : vector<64x512xf32>
    %c0_9 = arith.constant 0 : index
    %c0_10 = arith.constant 0 : index
    %c0_11 = arith.constant 0 : index
    %14 = vector.load %arg4[%c0_9, %c0_10, %c0_11] : memref<1x128x512xf32, #tpu.memory_space<vmem>>, vector<1x128x512xf32>
    %15 = vector.shape_cast %14 : vector<1x128x512xf32> to vector<128x512xf32>
    %16 = arith.truncf %15 : vector<128x512xf32> to vector<128x512xbf16>
    %c0_12 = arith.constant 0 : index
    %c0_13 = arith.constant 0 : index
    %17 = vector.load %arg7[%c0_12, %c0_13] : memref<16x128xf32, #tpu.memory_space<vmem>>, vector<16x128xf32>
    %c0_14 = arith.constant 0 : index
    %c0_15 = arith.constant 0 : index
    %18 = vector.load %arg8[%c0_14, %c0_15] : memref<16x128xf32, #tpu.memory_space<vmem>>, vector<16x128xf32>
    %19 = vector.extract_strided_slice %13 {offsets = [0, 0], sizes = [16, 512], strides = [1, 1]} : vector<64x512xf32> to vector<16x512xf32>
    %20 = arith.truncf %17 : vector<16x128xf32> to vector<16x128xbf16>
    %cst_16 = arith.constant dense<0.000000e+00> : vector<16x512xf32>
    %21 = tpu.matmul %20, %16, %cst_16 {dimension_numbers = #tpu.dot_dimension_numbers<[1], [0], [0], [1], [0, 0, 1, 1], [], []>} : vector<16x128xbf16>, vector<128x512xbf16>, vector<16x512xf32> -> vector<16x512xf32>
    %22 = arith.addf %19, %21 : vector<16x512xf32>
    %23 = vector.extract_strided_slice %22 {offsets = [0, 0], sizes = [16, 384], strides = [1, 1]} : vector<16x512xf32> to vector<16x384xf32>
    %24 = arith.negf %23 : vector<16x384xf32>
    %25 = math.exp %24 : vector<16x384xf32>
    %cst_17 = arith.constant 1.000000e+00 : f32
    %26 = vector.broadcast %cst_17 : f32 to vector<16x384xf32>
    %27 = arith.addf %26, %25 : vector<16x384xf32>
    %28 = arith.divf %26, %27 : vector<16x384xf32>
    %29 = vector.extract_strided_slice %28 {offsets = [0, 0], sizes = [16, 128], strides = [1, 1]} : vector<16x384xf32> to vector<16x128xf32>
    %30 = vector.extract_strided_slice %28 {offsets = [0, 128], sizes = [16, 128], strides = [1, 1]} : vector<16x384xf32> to vector<16x128xf32>
    %31 = vector.extract_strided_slice %28 {offsets = [0, 256], sizes = [16, 128], strides = [1, 1]} : vector<16x384xf32> to vector<16x128xf32>
    %32 = vector.extract_strided_slice %22 {offsets = [0, 384], sizes = [16, 128], strides = [1, 1]} : vector<16x512xf32> to vector<16x128xf32>
    %33 = math.tanh %32 : vector<16x128xf32>
    %34 = arith.mulf %30, %18 : vector<16x128xf32>
    %35 = arith.mulf %29, %33 : vector<16x128xf32>
    %36 = arith.addf %34, %35 : vector<16x128xf32>
    %37 = math.tanh %36 : vector<16x128xf32>
    %38 = arith.mulf %31, %37 : vector<16x128xf32>
    %39 = vector.extract_strided_slice %13 {offsets = [16, 0], sizes = [16, 512], strides = [1, 1]} : vector<64x512xf32> to vector<16x512xf32>
    %40 = arith.truncf %38 : vector<16x128xf32> to vector<16x128xbf16>
    %cst_18 = arith.constant dense<0.000000e+00> : vector<16x512xf32>
    %41 = tpu.matmul %40, %16, %cst_18 {dimension_numbers = #tpu.dot_dimension_numbers<[1], [0], [0], [1], [0, 0, 1, 1], [], []>} : vector<16x128xbf16>, vector<128x512xbf16>, vector<16x512xf32> -> vector<16x512xf32>
    %42 = arith.addf %39, %41 : vector<16x512xf32>
    %43 = vector.extract_strided_slice %42 {offsets = [0, 0], sizes = [16, 384], strides = [1, 1]} : vector<16x512xf32> to vector<16x384xf32>
    %44 = arith.negf %43 : vector<16x384xf32>
    %45 = math.exp %44 : vector<16x384xf32>
    %cst_19 = arith.constant 1.000000e+00 : f32
    %46 = vector.broadcast %cst_19 : f32 to vector<16x384xf32>
    %47 = arith.addf %46, %45 : vector<16x384xf32>
    %48 = arith.divf %46, %47 : vector<16x384xf32>
    %49 = vector.extract_strided_slice %48 {offsets = [0, 0], sizes = [16, 128], strides = [1, 1]} : vector<16x384xf32> to vector<16x128xf32>
    %50 = vector.extract_strided_slice %48 {offsets = [0, 128], sizes = [16, 128], strides = [1, 1]} : vector<16x384xf32> to vector<16x128xf32>
    %51 = vector.extract_strided_slice %48 {offsets = [0, 256], sizes = [16, 128], strides = [1, 1]} : vector<16x384xf32> to vector<16x128xf32>
    %52 = vector.extract_strided_slice %42 {offsets = [0, 384], sizes = [16, 128], strides = [1, 1]} : vector<16x512xf32> to vector<16x128xf32>
    %53 = math.tanh %52 : vector<16x128xf32>
    %54 = arith.mulf %50, %36 : vector<16x128xf32>
    %55 = arith.mulf %49, %53 : vector<16x128xf32>
    %56 = arith.addf %54, %55 : vector<16x128xf32>
    %57 = math.tanh %56 : vector<16x128xf32>
    %58 = arith.mulf %51, %57 : vector<16x128xf32>
    %59 = vector.extract_strided_slice %13 {offsets = [32, 0], sizes = [16, 512], strides = [1, 1]} : vector<64x512xf32> to vector<16x512xf32>
    %60 = arith.truncf %58 : vector<16x128xf32> to vector<16x128xbf16>
    %cst_20 = arith.constant dense<0.000000e+00> : vector<16x512xf32>
    %61 = tpu.matmul %60, %16, %cst_20 {dimension_numbers = #tpu.dot_dimension_numbers<[1], [0], [0], [1], [0, 0, 1, 1], [], []>} : vector<16x128xbf16>, vector<128x512xbf16>, vector<16x512xf32> -> vector<16x512xf32>
    %62 = arith.addf %59, %61 : vector<16x512xf32>
    %63 = vector.extract_strided_slice %62 {offsets = [0, 0], sizes = [16, 384], strides = [1, 1]} : vector<16x512xf32> to vector<16x384xf32>
    %64 = arith.negf %63 : vector<16x384xf32>
    %65 = math.exp %64 : vector<16x384xf32>
    %cst_21 = arith.constant 1.000000e+00 : f32
    %66 = vector.broadcast %cst_21 : f32 to vector<16x384xf32>
    %67 = arith.addf %66, %65 : vector<16x384xf32>
    %68 = arith.divf %66, %67 : vector<16x384xf32>
    %69 = vector.extract_strided_slice %68 {offsets = [0, 0], sizes = [16, 128], strides = [1, 1]} : vector<16x384xf32> to vector<16x128xf32>
    %70 = vector.extract_strided_slice %68 {offsets = [0, 128], sizes = [16, 128], strides = [1, 1]} : vector<16x384xf32> to vector<16x128xf32>
    %71 = vector.extract_strided_slice %68 {offsets = [0, 256], sizes = [16, 128], strides = [1, 1]} : vector<16x384xf32> to vector<16x128xf32>
    %72 = vector.extract_strided_slice %62 {offsets = [0, 384], sizes = [16, 128], strides = [1, 1]} : vector<16x512xf32> to vector<16x128xf32>
    %73 = math.tanh %72 : vector<16x128xf32>
    %74 = arith.mulf %70, %56 : vector<16x128xf32>
    %75 = arith.mulf %69, %73 : vector<16x128xf32>
    %76 = arith.addf %74, %75 : vector<16x128xf32>
    %77 = math.tanh %76 : vector<16x128xf32>
    %78 = arith.mulf %71, %77 : vector<16x128xf32>
    %79 = vector.extract_strided_slice %13 {offsets = [48, 0], sizes = [16, 512], strides = [1, 1]} : vector<64x512xf32> to vector<16x512xf32>
    %80 = arith.truncf %78 : vector<16x128xf32> to vector<16x128xbf16>
    %cst_22 = arith.constant dense<0.000000e+00> : vector<16x512xf32>
    %81 = tpu.matmul %80, %16, %cst_22 {dimension_numbers = #tpu.dot_dimension_numbers<[1], [0], [0], [1], [0, 0, 1, 1], [], []>} : vector<16x128xbf16>, vector<128x512xbf16>, vector<16x512xf32> -> vector<16x512xf32>
    %82 = arith.addf %79, %81 : vector<16x512xf32>
    %83 = vector.extract_strided_slice %82 {offsets = [0, 0], sizes = [16, 384], strides = [1, 1]} : vector<16x512xf32> to vector<16x384xf32>
    %84 = arith.negf %83 : vector<16x384xf32>
    %85 = math.exp %84 : vector<16x384xf32>
    %cst_23 = arith.constant 1.000000e+00 : f32
    %86 = vector.broadcast %cst_23 : f32 to vector<16x384xf32>
    %87 = arith.addf %86, %85 : vector<16x384xf32>
    %88 = arith.divf %86, %87 : vector<16x384xf32>
    %89 = vector.extract_strided_slice %88 {offsets = [0, 0], sizes = [16, 128], strides = [1, 1]} : vector<16x384xf32> to vector<16x128xf32>
    %90 = vector.extract_strided_slice %88 {offsets = [0, 128], sizes = [16, 128], strides = [1, 1]} : vector<16x384xf32> to vector<16x128xf32>
    %91 = vector.extract_strided_slice %88 {offsets = [0, 256], sizes = [16, 128], strides = [1, 1]} : vector<16x384xf32> to vector<16x128xf32>
    %92 = vector.extract_strided_slice %82 {offsets = [0, 384], sizes = [16, 128], strides = [1, 1]} : vector<16x512xf32> to vector<16x128xf32>
    %93 = math.tanh %92 : vector<16x128xf32>
    %94 = arith.mulf %90, %76 : vector<16x128xf32>
    %95 = arith.mulf %89, %93 : vector<16x128xf32>
    %96 = arith.addf %94, %95 : vector<16x128xf32>
    %97 = math.tanh %96 : vector<16x128xf32>
    %98 = arith.mulf %91, %97 : vector<16x128xf32>
    %c0_24 = arith.constant 0 : index
    %c0_25 = arith.constant 0 : index
    %99 = vector.load %arg7[%c0_24, %c0_25] : memref<16x128xf32, #tpu.memory_space<vmem>>, vector<16x128xf32>
    tpu.vector_store %arg7[%c0_24, %c0_25], %98 {strides = array<i32>} : memref<16x128xf32, #tpu.memory_space<vmem>>, vector<16x128xf32>,
    %c0_26 = arith.constant 0 : index
    %c0_27 = arith.constant 0 : index
    %100 = vector.load %arg8[%c0_26, %c0_27] : memref<16x128xf32, #tpu.memory_space<vmem>>, vector<16x128xf32>
    tpu.vector_store %arg8[%c0_26, %c0_27], %96 {strides = array<i32>} : memref<16x128xf32, #tpu.memory_space<vmem>>, vector<16x128xf32>,
    %c1_i32 = arith.constant 1 : i32
    %101 = arith.cmpi eq, %arg1, %c1_i32 : i32
    %102 = arith.extui %101 : i1 to i32
    %c0_i32_28 = arith.constant 0 : i32
    %103 = arith.cmpi ne, %102, %c0_i32_28 : i32
    scf.if %103 {
      %c0_29 = arith.constant 0 : index
      %c0_30 = arith.constant 0 : index
      %104 = vector.load %arg6[%c0_29, %c0_30] : memref<16x128xf32, #tpu.memory_space<vmem>>, vector<16x128xf32>
      tpu.vector_store %arg6[%c0_29, %c0_30], %98 {strides = array<i32>} : memref<16x128xf32, #tpu.memory_space<vmem>>, vector<16x128xf32>,
    } else {
    }
    return
  }
  func.func @transform_0(%arg0: i32, %arg1: i32) -> (i32, i32, i32) {
    %c0_i32 = arith.constant 0 : i32
    %c0_i32_0 = arith.constant 0 : i32
    return %arg0, %arg1, %c0_i32 : i32, i32, i32
  }
  func.func @transform_1(%arg0: i32, %arg1: i32) -> (i32, i32, i32) {
    %c0_i32 = arith.constant 0 : i32
    %c0_i32_0 = arith.constant 0 : i32
    %c0_i32_1 = arith.constant 0 : i32
    return %arg0, %c0_i32, %c0_i32_0 : i32, i32, i32
  }
  func.func @transform_2(%arg0: i32, %arg1: i32) -> (i32, i32, i32) {
    %c0_i32 = arith.constant 0 : i32
    %c0_i32_0 = arith.constant 0 : i32
    %c0_i32_1 = arith.constant 0 : i32
    return %arg0, %c0_i32, %c0_i32_0 : i32, i32, i32
  }
  func.func @transform_3(%arg0: i32, %arg1: i32) -> (i32, i32, i32) {
    %c0_i32 = arith.constant 0 : i32
    %c0_i32_0 = arith.constant 0 : i32
    %c0_i32_1 = arith.constant 0 : i32
    return %arg0, %c0_i32, %c0_i32_0 : i32, i32, i32
  }
  func.func @transform_4(%arg0: i32, %arg1: i32) -> (i32, i32) {
    %c0_i32 = arith.constant 0 : i32
    %c0_i32_0 = arith.constant 0 : i32
    return %c0_i32, %arg0 : i32, i32
  }
}

module attributes {stable_mosaic.version = 11 : i64} {
  func.func @_bilstm_kernel(%arg0: i32, %arg1: i32, %arg2: memref<1x32x128xf32, #tpu.memory_space<vmem>>, %arg3: memref<1x128x512xf32, #tpu.memory_space<vmem>>, %arg4: memref<1x128x512xf32, #tpu.memory_space<vmem>>, %arg5: memref<1x1x512xf32, #tpu.memory_space<vmem>>, %arg6: memref<8x128xf32, #tpu.memory_space<vmem>>, %arg7: memref<8x128xf32, #tpu.memory_space<vmem>>, %arg8: memref<8x128xf32, #tpu.memory_space<vmem>>) attributes {dimension_semantics = [#tpu.dimension_semantics<parallel>, #tpu.dimension_semantics<arbitrary>], iteration_bounds = array<i64: 2, 2>, scalar_prefetch = 0 : i64, scratch_operands = 2 : i64, tpu.core_type = #tpu.core_type<tc>, window_params = [{transform_indices = @transform_0, window_bounds = array<i64: 1, 32, 128>}, {transform_indices = @transform_1, window_bounds = array<i64: 1, 128, 512>}, {transform_indices = @transform_2, window_bounds = array<i64: 1, 128, 512>}, {transform_indices = @transform_3, window_bounds = array<i64: 1, 1, 512>}, {transform_indices = @transform_4, window_bounds = array<i64: 8, 128>}]} {
    %c0_i32 = arith.constant 0 : i32
    %0 = arith.cmpi eq, %arg1, %c0_i32 : i32
    %1 = arith.extui %0 : i1 to i32
    %c0_i32_0 = arith.constant 0 : i32
    %2 = arith.cmpi ne, %1, %c0_i32_0 : i32
    scf.if %2 {
      %cst_29 = arith.constant 0.000000e+00 : f32
      %104 = vector.broadcast %cst_29 : f32 to vector<8x128xf32>
      %c0_30 = arith.constant 0 : index
      %c0_31 = arith.constant 0 : index
      %105 = vector.load %arg7[%c0_30, %c0_31] : memref<8x128xf32, #tpu.memory_space<vmem>>, vector<8x128xf32>
      tpu.vector_store %arg7[%c0_30, %c0_31], %104 {strides = array<i32>} : memref<8x128xf32, #tpu.memory_space<vmem>>, vector<8x128xf32>,
      %cst_32 = arith.constant 0.000000e+00 : f32
      %106 = vector.broadcast %cst_32 : f32 to vector<8x128xf32>
      %c0_33 = arith.constant 0 : index
      %c0_34 = arith.constant 0 : index
      %107 = vector.load %arg8[%c0_33, %c0_34] : memref<8x128xf32, #tpu.memory_space<vmem>>, vector<8x128xf32>
      tpu.vector_store %arg8[%c0_33, %c0_34], %106 {strides = array<i32>} : memref<8x128xf32, #tpu.memory_space<vmem>>, vector<8x128xf32>,
    } else {
    }
    %c0 = arith.constant 0 : index
    %c0_1 = arith.constant 0 : index
    %c0_2 = arith.constant 0 : index
    %3 = vector.load %arg2[%c0, %c0_1, %c0_2] : memref<1x32x128xf32, #tpu.memory_space<vmem>>, vector<1x32x128xf32>
    %4 = vector.shape_cast %3 : vector<1x32x128xf32> to vector<32x128xf32>
    %5 = arith.truncf %4 : vector<32x128xf32> to vector<32x128xbf16>
    %c0_3 = arith.constant 0 : index
    %c0_4 = arith.constant 0 : index
    %c0_5 = arith.constant 0 : index
    %6 = vector.load %arg3[%c0_3, %c0_4, %c0_5] : memref<1x128x512xf32, #tpu.memory_space<vmem>>, vector<1x128x512xf32>
    %7 = vector.shape_cast %6 : vector<1x128x512xf32> to vector<128x512xf32>
    %8 = arith.truncf %7 : vector<128x512xf32> to vector<128x512xbf16>
    %cst = arith.constant dense<0.000000e+00> : vector<32x512xf32>
    %9 = tpu.matmul %5, %8, %cst {dimension_numbers = #tpu.dot_dimension_numbers<[1], [0], [0], [1], [0, 0, 1, 1], [], []>} : vector<32x128xbf16>, vector<128x512xbf16>, vector<32x512xf32> -> vector<32x512xf32>
    %c0_6 = arith.constant 0 : index
    %c0_7 = arith.constant 0 : index
    %c0_8 = arith.constant 0 : index
    %10 = vector.load %arg5[%c0_6, %c0_7, %c0_8] : memref<1x1x512xf32, #tpu.memory_space<vmem>>, vector<1x1x512xf32>
    %11 = vector.shape_cast %10 : vector<1x1x512xf32> to vector<1x512xf32>
    %12 = vector.broadcast %11 : vector<1x512xf32> to vector<32x512xf32>
    %13 = arith.addf %9, %12 : vector<32x512xf32>
    %c0_9 = arith.constant 0 : index
    %c0_10 = arith.constant 0 : index
    %c0_11 = arith.constant 0 : index
    %14 = vector.load %arg4[%c0_9, %c0_10, %c0_11] : memref<1x128x512xf32, #tpu.memory_space<vmem>>, vector<1x128x512xf32>
    %15 = vector.shape_cast %14 : vector<1x128x512xf32> to vector<128x512xf32>
    %16 = arith.truncf %15 : vector<128x512xf32> to vector<128x512xbf16>
    %c0_12 = arith.constant 0 : index
    %c0_13 = arith.constant 0 : index
    %17 = vector.load %arg7[%c0_12, %c0_13] : memref<8x128xf32, #tpu.memory_space<vmem>>, vector<8x128xf32>
    %c0_14 = arith.constant 0 : index
    %c0_15 = arith.constant 0 : index
    %18 = vector.load %arg8[%c0_14, %c0_15] : memref<8x128xf32, #tpu.memory_space<vmem>>, vector<8x128xf32>
    %19 = vector.extract_strided_slice %13 {offsets = [0, 0], sizes = [8, 512], strides = [1, 1]} : vector<32x512xf32> to vector<8x512xf32>
    %20 = arith.truncf %17 : vector<8x128xf32> to vector<8x128xbf16>
    %cst_16 = arith.constant dense<0.000000e+00> : vector<8x512xf32>
    %21 = tpu.matmul %20, %16, %cst_16 {dimension_numbers = #tpu.dot_dimension_numbers<[1], [0], [0], [1], [0, 0, 1, 1], [], []>} : vector<8x128xbf16>, vector<128x512xbf16>, vector<8x512xf32> -> vector<8x512xf32>
    %22 = arith.addf %19, %21 : vector<8x512xf32>
    %23 = vector.extract_strided_slice %22 {offsets = [0, 0], sizes = [8, 384], strides = [1, 1]} : vector<8x512xf32> to vector<8x384xf32>
    %24 = arith.negf %23 : vector<8x384xf32>
    %25 = math.exp %24 : vector<8x384xf32>
    %cst_17 = arith.constant 1.000000e+00 : f32
    %26 = vector.broadcast %cst_17 : f32 to vector<8x384xf32>
    %27 = arith.addf %26, %25 : vector<8x384xf32>
    %28 = arith.divf %26, %27 : vector<8x384xf32>
    %29 = vector.extract_strided_slice %28 {offsets = [0, 0], sizes = [8, 128], strides = [1, 1]} : vector<8x384xf32> to vector<8x128xf32>
    %30 = vector.extract_strided_slice %28 {offsets = [0, 128], sizes = [8, 128], strides = [1, 1]} : vector<8x384xf32> to vector<8x128xf32>
    %31 = vector.extract_strided_slice %28 {offsets = [0, 256], sizes = [8, 128], strides = [1, 1]} : vector<8x384xf32> to vector<8x128xf32>
    %32 = vector.extract_strided_slice %22 {offsets = [0, 384], sizes = [8, 128], strides = [1, 1]} : vector<8x512xf32> to vector<8x128xf32>
    %33 = math.tanh %32 : vector<8x128xf32>
    %34 = arith.mulf %30, %18 : vector<8x128xf32>
    %35 = arith.mulf %29, %33 : vector<8x128xf32>
    %36 = arith.addf %34, %35 : vector<8x128xf32>
    %37 = math.tanh %36 : vector<8x128xf32>
    %38 = arith.mulf %31, %37 : vector<8x128xf32>
    %39 = vector.extract_strided_slice %13 {offsets = [8, 0], sizes = [8, 512], strides = [1, 1]} : vector<32x512xf32> to vector<8x512xf32>
    %40 = arith.truncf %38 : vector<8x128xf32> to vector<8x128xbf16>
    %cst_18 = arith.constant dense<0.000000e+00> : vector<8x512xf32>
    %41 = tpu.matmul %40, %16, %cst_18 {dimension_numbers = #tpu.dot_dimension_numbers<[1], [0], [0], [1], [0, 0, 1, 1], [], []>} : vector<8x128xbf16>, vector<128x512xbf16>, vector<8x512xf32> -> vector<8x512xf32>
    %42 = arith.addf %39, %41 : vector<8x512xf32>
    %43 = vector.extract_strided_slice %42 {offsets = [0, 0], sizes = [8, 384], strides = [1, 1]} : vector<8x512xf32> to vector<8x384xf32>
    %44 = arith.negf %43 : vector<8x384xf32>
    %45 = math.exp %44 : vector<8x384xf32>
    %cst_19 = arith.constant 1.000000e+00 : f32
    %46 = vector.broadcast %cst_19 : f32 to vector<8x384xf32>
    %47 = arith.addf %46, %45 : vector<8x384xf32>
    %48 = arith.divf %46, %47 : vector<8x384xf32>
    %49 = vector.extract_strided_slice %48 {offsets = [0, 0], sizes = [8, 128], strides = [1, 1]} : vector<8x384xf32> to vector<8x128xf32>
    %50 = vector.extract_strided_slice %48 {offsets = [0, 128], sizes = [8, 128], strides = [1, 1]} : vector<8x384xf32> to vector<8x128xf32>
    %51 = vector.extract_strided_slice %48 {offsets = [0, 256], sizes = [8, 128], strides = [1, 1]} : vector<8x384xf32> to vector<8x128xf32>
    %52 = vector.extract_strided_slice %42 {offsets = [0, 384], sizes = [8, 128], strides = [1, 1]} : vector<8x512xf32> to vector<8x128xf32>
    %53 = math.tanh %52 : vector<8x128xf32>
    %54 = arith.mulf %50, %36 : vector<8x128xf32>
    %55 = arith.mulf %49, %53 : vector<8x128xf32>
    %56 = arith.addf %54, %55 : vector<8x128xf32>
    %57 = math.tanh %56 : vector<8x128xf32>
    %58 = arith.mulf %51, %57 : vector<8x128xf32>
    %59 = vector.extract_strided_slice %13 {offsets = [16, 0], sizes = [8, 512], strides = [1, 1]} : vector<32x512xf32> to vector<8x512xf32>
    %60 = arith.truncf %58 : vector<8x128xf32> to vector<8x128xbf16>
    %cst_20 = arith.constant dense<0.000000e+00> : vector<8x512xf32>
    %61 = tpu.matmul %60, %16, %cst_20 {dimension_numbers = #tpu.dot_dimension_numbers<[1], [0], [0], [1], [0, 0, 1, 1], [], []>} : vector<8x128xbf16>, vector<128x512xbf16>, vector<8x512xf32> -> vector<8x512xf32>
    %62 = arith.addf %59, %61 : vector<8x512xf32>
    %63 = vector.extract_strided_slice %62 {offsets = [0, 0], sizes = [8, 384], strides = [1, 1]} : vector<8x512xf32> to vector<8x384xf32>
    %64 = arith.negf %63 : vector<8x384xf32>
    %65 = math.exp %64 : vector<8x384xf32>
    %cst_21 = arith.constant 1.000000e+00 : f32
    %66 = vector.broadcast %cst_21 : f32 to vector<8x384xf32>
    %67 = arith.addf %66, %65 : vector<8x384xf32>
    %68 = arith.divf %66, %67 : vector<8x384xf32>
    %69 = vector.extract_strided_slice %68 {offsets = [0, 0], sizes = [8, 128], strides = [1, 1]} : vector<8x384xf32> to vector<8x128xf32>
    %70 = vector.extract_strided_slice %68 {offsets = [0, 128], sizes = [8, 128], strides = [1, 1]} : vector<8x384xf32> to vector<8x128xf32>
    %71 = vector.extract_strided_slice %68 {offsets = [0, 256], sizes = [8, 128], strides = [1, 1]} : vector<8x384xf32> to vector<8x128xf32>
    %72 = vector.extract_strided_slice %62 {offsets = [0, 384], sizes = [8, 128], strides = [1, 1]} : vector<8x512xf32> to vector<8x128xf32>
    %73 = math.tanh %72 : vector<8x128xf32>
    %74 = arith.mulf %70, %56 : vector<8x128xf32>
    %75 = arith.mulf %69, %73 : vector<8x128xf32>
    %76 = arith.addf %74, %75 : vector<8x128xf32>
    %77 = math.tanh %76 : vector<8x128xf32>
    %78 = arith.mulf %71, %77 : vector<8x128xf32>
    %79 = vector.extract_strided_slice %13 {offsets = [24, 0], sizes = [8, 512], strides = [1, 1]} : vector<32x512xf32> to vector<8x512xf32>
    %80 = arith.truncf %78 : vector<8x128xf32> to vector<8x128xbf16>
    %cst_22 = arith.constant dense<0.000000e+00> : vector<8x512xf32>
    %81 = tpu.matmul %80, %16, %cst_22 {dimension_numbers = #tpu.dot_dimension_numbers<[1], [0], [0], [1], [0, 0, 1, 1], [], []>} : vector<8x128xbf16>, vector<128x512xbf16>, vector<8x512xf32> -> vector<8x512xf32>
    %82 = arith.addf %79, %81 : vector<8x512xf32>
    %83 = vector.extract_strided_slice %82 {offsets = [0, 0], sizes = [8, 384], strides = [1, 1]} : vector<8x512xf32> to vector<8x384xf32>
    %84 = arith.negf %83 : vector<8x384xf32>
    %85 = math.exp %84 : vector<8x384xf32>
    %cst_23 = arith.constant 1.000000e+00 : f32
    %86 = vector.broadcast %cst_23 : f32 to vector<8x384xf32>
    %87 = arith.addf %86, %85 : vector<8x384xf32>
    %88 = arith.divf %86, %87 : vector<8x384xf32>
    %89 = vector.extract_strided_slice %88 {offsets = [0, 0], sizes = [8, 128], strides = [1, 1]} : vector<8x384xf32> to vector<8x128xf32>
    %90 = vector.extract_strided_slice %88 {offsets = [0, 128], sizes = [8, 128], strides = [1, 1]} : vector<8x384xf32> to vector<8x128xf32>
    %91 = vector.extract_strided_slice %88 {offsets = [0, 256], sizes = [8, 128], strides = [1, 1]} : vector<8x384xf32> to vector<8x128xf32>
    %92 = vector.extract_strided_slice %82 {offsets = [0, 384], sizes = [8, 128], strides = [1, 1]} : vector<8x512xf32> to vector<8x128xf32>
    %93 = math.tanh %92 : vector<8x128xf32>
    %94 = arith.mulf %90, %76 : vector<8x128xf32>
    %95 = arith.mulf %89, %93 : vector<8x128xf32>
    %96 = arith.addf %94, %95 : vector<8x128xf32>
    %97 = math.tanh %96 : vector<8x128xf32>
    %98 = arith.mulf %91, %97 : vector<8x128xf32>
    %c0_24 = arith.constant 0 : index
    %c0_25 = arith.constant 0 : index
    %99 = vector.load %arg7[%c0_24, %c0_25] : memref<8x128xf32, #tpu.memory_space<vmem>>, vector<8x128xf32>
    tpu.vector_store %arg7[%c0_24, %c0_25], %98 {strides = array<i32>} : memref<8x128xf32, #tpu.memory_space<vmem>>, vector<8x128xf32>,
    %c0_26 = arith.constant 0 : index
    %c0_27 = arith.constant 0 : index
    %100 = vector.load %arg8[%c0_26, %c0_27] : memref<8x128xf32, #tpu.memory_space<vmem>>, vector<8x128xf32>
    tpu.vector_store %arg8[%c0_26, %c0_27], %96 {strides = array<i32>} : memref<8x128xf32, #tpu.memory_space<vmem>>, vector<8x128xf32>,
    %c1_i32 = arith.constant 1 : i32
    %101 = arith.cmpi eq, %arg1, %c1_i32 : i32
    %102 = arith.extui %101 : i1 to i32
    %c0_i32_28 = arith.constant 0 : i32
    %103 = arith.cmpi ne, %102, %c0_i32_28 : i32
    scf.if %103 {
      %c0_29 = arith.constant 0 : index
      %c0_30 = arith.constant 0 : index
      %104 = vector.load %arg6[%c0_29, %c0_30] : memref<8x128xf32, #tpu.memory_space<vmem>>, vector<8x128xf32>
      tpu.vector_store %arg6[%c0_29, %c0_30], %98 {strides = array<i32>} : memref<8x128xf32, #tpu.memory_space<vmem>>, vector<8x128xf32>,
    } else {
    }
    return
  }
  func.func @transform_0(%arg0: i32, %arg1: i32) -> (i32, i32, i32) {
    %c0_i32 = arith.constant 0 : i32
    %c0_i32_0 = arith.constant 0 : i32
    return %arg0, %arg1, %c0_i32 : i32, i32, i32
  }
  func.func @transform_1(%arg0: i32, %arg1: i32) -> (i32, i32, i32) {
    %c0_i32 = arith.constant 0 : i32
    %c0_i32_0 = arith.constant 0 : i32
    %c0_i32_1 = arith.constant 0 : i32
    return %arg0, %c0_i32, %c0_i32_0 : i32, i32, i32
  }
  func.func @transform_2(%arg0: i32, %arg1: i32) -> (i32, i32, i32) {
    %c0_i32 = arith.constant 0 : i32
    %c0_i32_0 = arith.constant 0 : i32
    %c0_i32_1 = arith.constant 0 : i32
    return %arg0, %c0_i32, %c0_i32_0 : i32, i32, i32
  }
  func.func @transform_3(%arg0: i32, %arg1: i32) -> (i32, i32, i32) {
    %c0_i32 = arith.constant 0 : i32
    %c0_i32_0 = arith.constant 0 : i32
    %c0_i32_1 = arith.constant 0 : i32
    return %arg0, %c0_i32, %c0_i32_0 : i32, i32, i32
  }
  func.func @transform_4(%arg0: i32, %arg1: i32) -> (i32, i32) {
    %c0_i32 = arith.constant 0 : i32
    %c0_i32_0 = arith.constant 0 : i32
    return %c0_i32, %arg0 : i32, i32
  }
}

module attributes {stable_mosaic.version = 11 : i64} {
  func.func @_bilstm_kernel(%arg0: i32, %arg1: i32, %arg2: memref<1x32x128xf32, #tpu.memory_space<vmem>>, %arg3: memref<1x128x512xf32, #tpu.memory_space<vmem>>, %arg4: memref<1x128x512xf32, #tpu.memory_space<vmem>>, %arg5: memref<1x1x512xf32, #tpu.memory_space<vmem>>, %arg6: memref<8x128xf32, #tpu.memory_space<vmem>>, %arg7: memref<8x128xf32, #tpu.memory_space<vmem>>, %arg8: memref<8x128xf32, #tpu.memory_space<vmem>>) attributes {dimension_semantics = [#tpu.dimension_semantics<parallel>, #tpu.dimension_semantics<arbitrary>], iteration_bounds = array<i64: 2, 2>, scalar_prefetch = 0 : i64, scratch_operands = 2 : i64, tpu.core_type = #tpu.core_type<tc>, window_params = [{transform_indices = @transform_0, window_bounds = array<i64: 1, 32, 128>}, {transform_indices = @transform_1, window_bounds = array<i64: 1, 128, 512>}, {transform_indices = @transform_2, window_bounds = array<i64: 1, 128, 512>}, {transform_indices = @transform_3, window_bounds = array<i64: 1, 1, 512>}, {transform_indices = @transform_4, window_bounds = array<i64: 8, 128>}]} {
    %c0_i32 = arith.constant 0 : i32
    %0 = arith.cmpi eq, %arg1, %c0_i32 : i32
    %1 = arith.extui %0 : i1 to i32
    %c0_i32_0 = arith.constant 0 : i32
    %2 = arith.cmpi ne, %1, %c0_i32_0 : i32
    scf.if %2 {
      %cst_29 = arith.constant 0.000000e+00 : f32
      %104 = vector.broadcast %cst_29 : f32 to vector<8x128xf32>
      %c0_30 = arith.constant 0 : index
      %c0_31 = arith.constant 0 : index
      %105 = vector.load %arg7[%c0_30, %c0_31] : memref<8x128xf32, #tpu.memory_space<vmem>>, vector<8x128xf32>
      tpu.vector_store %arg7[%c0_30, %c0_31], %104 {strides = array<i32>} : memref<8x128xf32, #tpu.memory_space<vmem>>, vector<8x128xf32>,
      %cst_32 = arith.constant 0.000000e+00 : f32
      %106 = vector.broadcast %cst_32 : f32 to vector<8x128xf32>
      %c0_33 = arith.constant 0 : index
      %c0_34 = arith.constant 0 : index
      %107 = vector.load %arg8[%c0_33, %c0_34] : memref<8x128xf32, #tpu.memory_space<vmem>>, vector<8x128xf32>
      tpu.vector_store %arg8[%c0_33, %c0_34], %106 {strides = array<i32>} : memref<8x128xf32, #tpu.memory_space<vmem>>, vector<8x128xf32>,
    } else {
    }
    %c0 = arith.constant 0 : index
    %c0_1 = arith.constant 0 : index
    %c0_2 = arith.constant 0 : index
    %3 = vector.load %arg2[%c0, %c0_1, %c0_2] : memref<1x32x128xf32, #tpu.memory_space<vmem>>, vector<1x32x128xf32>
    %4 = vector.shape_cast %3 : vector<1x32x128xf32> to vector<32x128xf32>
    %5 = arith.truncf %4 : vector<32x128xf32> to vector<32x128xbf16>
    %c0_3 = arith.constant 0 : index
    %c0_4 = arith.constant 0 : index
    %c0_5 = arith.constant 0 : index
    %6 = vector.load %arg3[%c0_3, %c0_4, %c0_5] : memref<1x128x512xf32, #tpu.memory_space<vmem>>, vector<1x128x512xf32>
    %7 = vector.shape_cast %6 : vector<1x128x512xf32> to vector<128x512xf32>
    %8 = arith.truncf %7 : vector<128x512xf32> to vector<128x512xbf16>
    %cst = arith.constant dense<0.000000e+00> : vector<32x512xf32>
    %9 = tpu.matmul %5, %8, %cst {dimension_numbers = #tpu.dot_dimension_numbers<[1], [0], [0], [1], [0, 0, 1, 1], [], []>} : vector<32x128xbf16>, vector<128x512xbf16>, vector<32x512xf32> -> vector<32x512xf32>
    %c0_6 = arith.constant 0 : index
    %c0_7 = arith.constant 0 : index
    %c0_8 = arith.constant 0 : index
    %10 = vector.load %arg5[%c0_6, %c0_7, %c0_8] : memref<1x1x512xf32, #tpu.memory_space<vmem>>, vector<1x1x512xf32>
    %11 = vector.shape_cast %10 : vector<1x1x512xf32> to vector<1x512xf32>
    %12 = vector.broadcast %11 : vector<1x512xf32> to vector<32x512xf32>
    %13 = arith.addf %9, %12 : vector<32x512xf32>
    %c0_9 = arith.constant 0 : index
    %c0_10 = arith.constant 0 : index
    %c0_11 = arith.constant 0 : index
    %14 = vector.load %arg4[%c0_9, %c0_10, %c0_11] : memref<1x128x512xf32, #tpu.memory_space<vmem>>, vector<1x128x512xf32>
    %15 = vector.shape_cast %14 : vector<1x128x512xf32> to vector<128x512xf32>
    %16 = arith.truncf %15 : vector<128x512xf32> to vector<128x512xbf16>
    %c0_12 = arith.constant 0 : index
    %c0_13 = arith.constant 0 : index
    %17 = vector.load %arg7[%c0_12, %c0_13] : memref<8x128xf32, #tpu.memory_space<vmem>>, vector<8x128xf32>
    %c0_14 = arith.constant 0 : index
    %c0_15 = arith.constant 0 : index
    %18 = vector.load %arg8[%c0_14, %c0_15] : memref<8x128xf32, #tpu.memory_space<vmem>>, vector<8x128xf32>
    %19 = vector.extract_strided_slice %13 {offsets = [0, 0], sizes = [8, 512], strides = [1, 1]} : vector<32x512xf32> to vector<8x512xf32>
    %20 = arith.truncf %17 : vector<8x128xf32> to vector<8x128xbf16>
    %cst_16 = arith.constant dense<0.000000e+00> : vector<8x512xf32>
    %21 = tpu.matmul %20, %16, %cst_16 {dimension_numbers = #tpu.dot_dimension_numbers<[1], [0], [0], [1], [0, 0, 1, 1], [], []>} : vector<8x128xbf16>, vector<128x512xbf16>, vector<8x512xf32> -> vector<8x512xf32>
    %22 = arith.addf %19, %21 : vector<8x512xf32>
    %23 = vector.extract_strided_slice %22 {offsets = [0, 0], sizes = [8, 384], strides = [1, 1]} : vector<8x512xf32> to vector<8x384xf32>
    %24 = arith.negf %23 : vector<8x384xf32>
    %25 = math.exp %24 : vector<8x384xf32>
    %cst_17 = arith.constant 1.000000e+00 : f32
    %26 = vector.broadcast %cst_17 : f32 to vector<8x384xf32>
    %27 = arith.addf %26, %25 : vector<8x384xf32>
    %28 = arith.divf %26, %27 : vector<8x384xf32>
    %29 = vector.extract_strided_slice %28 {offsets = [0, 0], sizes = [8, 128], strides = [1, 1]} : vector<8x384xf32> to vector<8x128xf32>
    %30 = vector.extract_strided_slice %28 {offsets = [0, 128], sizes = [8, 128], strides = [1, 1]} : vector<8x384xf32> to vector<8x128xf32>
    %31 = vector.extract_strided_slice %28 {offsets = [0, 256], sizes = [8, 128], strides = [1, 1]} : vector<8x384xf32> to vector<8x128xf32>
    %32 = vector.extract_strided_slice %22 {offsets = [0, 384], sizes = [8, 128], strides = [1, 1]} : vector<8x512xf32> to vector<8x128xf32>
    %33 = math.tanh %32 : vector<8x128xf32>
    %34 = arith.mulf %30, %18 : vector<8x128xf32>
    %35 = arith.mulf %29, %33 : vector<8x128xf32>
    %36 = arith.addf %34, %35 : vector<8x128xf32>
    %37 = math.tanh %36 : vector<8x128xf32>
    %38 = arith.mulf %31, %37 : vector<8x128xf32>
    %39 = vector.extract_strided_slice %13 {offsets = [8, 0], sizes = [8, 512], strides = [1, 1]} : vector<32x512xf32> to vector<8x512xf32>
    %40 = arith.truncf %38 : vector<8x128xf32> to vector<8x128xbf16>
    %cst_18 = arith.constant dense<0.000000e+00> : vector<8x512xf32>
    %41 = tpu.matmul %40, %16, %cst_18 {dimension_numbers = #tpu.dot_dimension_numbers<[1], [0], [0], [1], [0, 0, 1, 1], [], []>} : vector<8x128xbf16>, vector<128x512xbf16>, vector<8x512xf32> -> vector<8x512xf32>
    %42 = arith.addf %39, %41 : vector<8x512xf32>
    %43 = vector.extract_strided_slice %42 {offsets = [0, 0], sizes = [8, 384], strides = [1, 1]} : vector<8x512xf32> to vector<8x384xf32>
    %44 = arith.negf %43 : vector<8x384xf32>
    %45 = math.exp %44 : vector<8x384xf32>
    %cst_19 = arith.constant 1.000000e+00 : f32
    %46 = vector.broadcast %cst_19 : f32 to vector<8x384xf32>
    %47 = arith.addf %46, %45 : vector<8x384xf32>
    %48 = arith.divf %46, %47 : vector<8x384xf32>
    %49 = vector.extract_strided_slice %48 {offsets = [0, 0], sizes = [8, 128], strides = [1, 1]} : vector<8x384xf32> to vector<8x128xf32>
    %50 = vector.extract_strided_slice %48 {offsets = [0, 128], sizes = [8, 128], strides = [1, 1]} : vector<8x384xf32> to vector<8x128xf32>
    %51 = vector.extract_strided_slice %48 {offsets = [0, 256], sizes = [8, 128], strides = [1, 1]} : vector<8x384xf32> to vector<8x128xf32>
    %52 = vector.extract_strided_slice %42 {offsets = [0, 384], sizes = [8, 128], strides = [1, 1]} : vector<8x512xf32> to vector<8x128xf32>
    %53 = math.tanh %52 : vector<8x128xf32>
    %54 = arith.mulf %50, %36 : vector<8x128xf32>
    %55 = arith.mulf %49, %53 : vector<8x128xf32>
    %56 = arith.addf %54, %55 : vector<8x128xf32>
    %57 = math.tanh %56 : vector<8x128xf32>
    %58 = arith.mulf %51, %57 : vector<8x128xf32>
    %59 = vector.extract_strided_slice %13 {offsets = [16, 0], sizes = [8, 512], strides = [1, 1]} : vector<32x512xf32> to vector<8x512xf32>
    %60 = arith.truncf %58 : vector<8x128xf32> to vector<8x128xbf16>
    %cst_20 = arith.constant dense<0.000000e+00> : vector<8x512xf32>
    %61 = tpu.matmul %60, %16, %cst_20 {dimension_numbers = #tpu.dot_dimension_numbers<[1], [0], [0], [1], [0, 0, 1, 1], [], []>} : vector<8x128xbf16>, vector<128x512xbf16>, vector<8x512xf32> -> vector<8x512xf32>
    %62 = arith.addf %59, %61 : vector<8x512xf32>
    %63 = vector.extract_strided_slice %62 {offsets = [0, 0], sizes = [8, 384], strides = [1, 1]} : vector<8x512xf32> to vector<8x384xf32>
    %64 = arith.negf %63 : vector<8x384xf32>
    %65 = math.exp %64 : vector<8x384xf32>
    %cst_21 = arith.constant 1.000000e+00 : f32
    %66 = vector.broadcast %cst_21 : f32 to vector<8x384xf32>
    %67 = arith.addf %66, %65 : vector<8x384xf32>
    %68 = arith.divf %66, %67 : vector<8x384xf32>
    %69 = vector.extract_strided_slice %68 {offsets = [0, 0], sizes = [8, 128], strides = [1, 1]} : vector<8x384xf32> to vector<8x128xf32>
    %70 = vector.extract_strided_slice %68 {offsets = [0, 128], sizes = [8, 128], strides = [1, 1]} : vector<8x384xf32> to vector<8x128xf32>
    %71 = vector.extract_strided_slice %68 {offsets = [0, 256], sizes = [8, 128], strides = [1, 1]} : vector<8x384xf32> to vector<8x128xf32>
    %72 = vector.extract_strided_slice %62 {offsets = [0, 384], sizes = [8, 128], strides = [1, 1]} : vector<8x512xf32> to vector<8x128xf32>
    %73 = math.tanh %72 : vector<8x128xf32>
    %74 = arith.mulf %70, %56 : vector<8x128xf32>
    %75 = arith.mulf %69, %73 : vector<8x128xf32>
    %76 = arith.addf %74, %75 : vector<8x128xf32>
    %77 = math.tanh %76 : vector<8x128xf32>
    %78 = arith.mulf %71, %77 : vector<8x128xf32>
    %79 = vector.extract_strided_slice %13 {offsets = [24, 0], sizes = [8, 512], strides = [1, 1]} : vector<32x512xf32> to vector<8x512xf32>
    %80 = arith.truncf %78 : vector<8x128xf32> to vector<8x128xbf16>
    %cst_22 = arith.constant dense<0.000000e+00> : vector<8x512xf32>
    %81 = tpu.matmul %80, %16, %cst_22 {dimension_numbers = #tpu.dot_dimension_numbers<[1], [0], [0], [1], [0, 0, 1, 1], [], []>} : vector<8x128xbf16>, vector<128x512xbf16>, vector<8x512xf32> -> vector<8x512xf32>
    %82 = arith.addf %79, %81 : vector<8x512xf32>
    %83 = vector.extract_strided_slice %82 {offsets = [0, 0], sizes = [8, 384], strides = [1, 1]} : vector<8x512xf32> to vector<8x384xf32>
    %84 = arith.negf %83 : vector<8x384xf32>
    %85 = math.exp %84 : vector<8x384xf32>
    %cst_23 = arith.constant 1.000000e+00 : f32
    %86 = vector.broadcast %cst_23 : f32 to vector<8x384xf32>
    %87 = arith.addf %86, %85 : vector<8x384xf32>
    %88 = arith.divf %86, %87 : vector<8x384xf32>
    %89 = vector.extract_strided_slice %88 {offsets = [0, 0], sizes = [8, 128], strides = [1, 1]} : vector<8x384xf32> to vector<8x128xf32>
    %90 = vector.extract_strided_slice %88 {offsets = [0, 128], sizes = [8, 128], strides = [1, 1]} : vector<8x384xf32> to vector<8x128xf32>
    %91 = vector.extract_strided_slice %88 {offsets = [0, 256], sizes = [8, 128], strides = [1, 1]} : vector<8x384xf32> to vector<8x128xf32>
    %92 = vector.extract_strided_slice %82 {offsets = [0, 384], sizes = [8, 128], strides = [1, 1]} : vector<8x512xf32> to vector<8x128xf32>
    %93 = math.tanh %92 : vector<8x128xf32>
    %94 = arith.mulf %90, %76 : vector<8x128xf32>
    %95 = arith.mulf %89, %93 : vector<8x128xf32>
    %96 = arith.addf %94, %95 : vector<8x128xf32>
    %97 = math.tanh %96 : vector<8x128xf32>
    %98 = arith.mulf %91, %97 : vector<8x128xf32>
    %c0_24 = arith.constant 0 : index
    %c0_25 = arith.constant 0 : index
    %99 = vector.load %arg7[%c0_24, %c0_25] : memref<8x128xf32, #tpu.memory_space<vmem>>, vector<8x128xf32>
    tpu.vector_store %arg7[%c0_24, %c0_25], %98 {strides = array<i32>} : memref<8x128xf32, #tpu.memory_space<vmem>>, vector<8x128xf32>,
    %c0_26 = arith.constant 0 : index
    %c0_27 = arith.constant 0 : index
    %100 = vector.load %arg8[%c0_26, %c0_27] : memref<8x128xf32, #tpu.memory_space<vmem>>, vector<8x128xf32>
    tpu.vector_store %arg8[%c0_26, %c0_27], %96 {strides = array<i32>} : memref<8x128xf32, #tpu.memory_space<vmem>>, vector<8x128xf32>,
    %c1_i32 = arith.constant 1 : i32
    %101 = arith.cmpi eq, %arg1, %c1_i32 : i32
    %102 = arith.extui %101 : i1 to i32
    %c0_i32_28 = arith.constant 0 : i32
    %103 = arith.cmpi ne, %102, %c0_i32_28 : i32
    scf.if %103 {
      %c0_29 = arith.constant 0 : index
      %c0_30 = arith.constant 0 : index
      %104 = vector.load %arg6[%c0_29, %c0_30] : memref<8x128xf32, #tpu.memory_space<vmem>>, vector<8x128xf32>
      tpu.vector_store %arg6[%c0_29, %c0_30], %98 {strides = array<i32>} : memref<8x128xf32, #tpu.memory_space<vmem>>, vector<8x128xf32>,
    } else {
    }
    return
  }
  func.func @transform_0(%arg0: i32, %arg1: i32) -> (i32, i32, i32) {
    %c0_i32 = arith.constant 0 : i32
    %c0_i32_0 = arith.constant 0 : i32
    return %arg0, %arg1, %c0_i32 : i32, i32, i32
  }
  func.func @transform_1(%arg0: i32, %arg1: i32) -> (i32, i32, i32) {
    %c0_i32 = arith.constant 0 : i32
    %c0_i32_0 = arith.constant 0 : i32
    %c0_i32_1 = arith.constant 0 : i32
    return %arg0, %c0_i32, %c0_i32_0 : i32, i32, i32
  }
  func.func @transform_2(%arg0: i32, %arg1: i32) -> (i32, i32, i32) {
    %c0_i32 = arith.constant 0 : i32
    %c0_i32_0 = arith.constant 0 : i32
    %c0_i32_1 = arith.constant 0 : i32
    return %arg0, %c0_i32, %c0_i32_0 : i32, i32, i32
  }
  func.func @transform_3(%arg0: i32, %arg1: i32) -> (i32, i32, i32) {
    %c0_i32 = arith.constant 0 : i32
    %c0_i32_0 = arith.constant 0 : i32
    %c0_i32_1 = arith.constant 0 : i32
    return %arg0, %c0_i32, %c0_i32_0 : i32, i32, i32
  }
  func.func @transform_4(%arg0: i32, %arg1: i32) -> (i32, i32) {
    %c0_i32 = arith.constant 0 : i32
    %c0_i32_0 = arith.constant 0 : i32
    return %c0_i32, %arg0 : i32, i32
  }
}

module attributes {stable_mosaic.version = 11 : i64} {
  func.func @_fuse_loss_kernel(%arg0: memref<8x256xf32, #tpu.memory_space<vmem>>, %arg1: memref<8x256xf32, #tpu.memory_space<vmem>>, %arg2: memref<8x16x128xf32, #tpu.memory_space<vmem>>, %arg3: memref<16x256xf32, #tpu.memory_space<vmem>>, %arg4: memref<256x256xf32, #tpu.memory_space<vmem>>, %arg5: memref<256x256xf32, #tpu.memory_space<vmem>>, %arg6: memref<128x256xf32, #tpu.memory_space<vmem>>, %arg7: memref<1x256xf32, #tpu.memory_space<vmem>>, %arg8: memref<1x8xf32, #tpu.memory_space<vmem>>) attributes {dimension_semantics = [], scalar_prefetch = 0 : i64, scratch_operands = 0 : i64, tpu.core_type = #tpu.core_type<tc>} {
    %c0 = arith.constant 0 : index
    %c0_0 = arith.constant 0 : index
    %c0_1 = arith.constant 0 : index
    %0 = vector.load %arg2[%c0, %c0_0, %c0_1] : memref<8x16x128xf32, #tpu.memory_space<vmem>>, vector<8x16x128xf32>
    %cst = arith.constant dense<0xFF800000> : vector<8x128xf32>
    %1 = vector.multi_reduction <maximumf>, %0, %cst [1] : vector<8x16x128xf32> to vector<8x128xf32>
    %2 = math.tanh %1 : vector<8x128xf32>
    %c0_2 = arith.constant 0 : index
    %c0_3 = arith.constant 0 : index
    %3 = vector.load %arg0[%c0_2, %c0_3] : memref<8x256xf32, #tpu.memory_space<vmem>>, vector<8x256xf32>
    %4 = arith.truncf %3 : vector<8x256xf32> to vector<8x256xbf16>
    %c0_4 = arith.constant 0 : index
    %c0_5 = arith.constant 0 : index
    %5 = vector.load %arg4[%c0_4, %c0_5] : memref<256x256xf32, #tpu.memory_space<vmem>>, vector<256x256xf32>
    %6 = arith.truncf %5 : vector<256x256xf32> to vector<256x256xbf16>
    %cst_6 = arith.constant dense<0.000000e+00> : vector<8x256xf32>
    %7 = tpu.matmul %4, %6, %cst_6 {dimension_numbers = #tpu.dot_dimension_numbers<[1], [0], [0], [1], [0, 0, 1, 1], [], []>} : vector<8x256xbf16>, vector<256x256xbf16>, vector<8x256xf32> -> vector<8x256xf32>
    %c0_7 = arith.constant 0 : index
    %c0_8 = arith.constant 0 : index
    %8 = vector.load %arg1[%c0_7, %c0_8] : memref<8x256xf32, #tpu.memory_space<vmem>>, vector<8x256xf32>
    %9 = arith.truncf %8 : vector<8x256xf32> to vector<8x256xbf16>
    %c0_9 = arith.constant 0 : index
    %c0_10 = arith.constant 0 : index
    %10 = vector.load %arg5[%c0_9, %c0_10] : memref<256x256xf32, #tpu.memory_space<vmem>>, vector<256x256xf32>
    %11 = arith.truncf %10 : vector<256x256xf32> to vector<256x256xbf16>
    %cst_11 = arith.constant dense<0.000000e+00> : vector<8x256xf32>
    %12 = tpu.matmul %9, %11, %cst_11 {dimension_numbers = #tpu.dot_dimension_numbers<[1], [0], [0], [1], [0, 0, 1, 1], [], []>} : vector<8x256xbf16>, vector<256x256xbf16>, vector<8x256xf32> -> vector<8x256xf32>
    %13 = arith.addf %7, %12 : vector<8x256xf32>
    %14 = arith.truncf %2 : vector<8x128xf32> to vector<8x128xbf16>
    %c0_12 = arith.constant 0 : index
    %c0_13 = arith.constant 0 : index
    %15 = vector.load %arg6[%c0_12, %c0_13] : memref<128x256xf32, #tpu.memory_space<vmem>>, vector<128x256xf32>
    %16 = arith.truncf %15 : vector<128x256xf32> to vector<128x256xbf16>
    %cst_14 = arith.constant dense<0.000000e+00> : vector<8x256xf32>
    %17 = tpu.matmul %14, %16, %cst_14 {dimension_numbers = #tpu.dot_dimension_numbers<[1], [0], [0], [1], [0, 0, 1, 1], [], []>} : vector<8x128xbf16>, vector<128x256xbf16>, vector<8x256xf32> -> vector<8x256xf32>
    %18 = arith.addf %13, %17 : vector<8x256xf32>
    %c0_15 = arith.constant 0 : index
    %c0_16 = arith.constant 0 : index
    %19 = vector.load %arg7[%c0_15, %c0_16] : memref<1x256xf32, #tpu.memory_space<vmem>>, vector<1x256xf32>
    %20 = vector.broadcast %19 : vector<1x256xf32> to vector<8x256xf32>
    %21 = arith.addf %18, %20 : vector<8x256xf32>
    %22 = math.tanh %21 : vector<8x256xf32>
    %c0_17 = arith.constant 0 : index
    %c0_18 = arith.constant 0 : index
    %23 = vector.load %arg3[%c0_17, %c0_18] : memref<16x256xf32, #tpu.memory_space<vmem>>, vector<16x256xf32>
    %24 = vector.extract_strided_slice %23 {offsets = [0, 0], sizes = [8, 256], strides = [1, 1]} : vector<16x256xf32> to vector<8x256xf32>
    %25 = vector.extract_strided_slice %23 {offsets = [8, 0], sizes = [8, 256], strides = [1, 1]} : vector<16x256xf32> to vector<8x256xf32>
    %26 = arith.mulf %22, %24 : vector<8x256xf32>
    %cst_19 = arith.constant dense<0.000000e+00> : vector<8xf32>
    %27 = vector.multi_reduction <add>, %26, %cst_19 [1] : vector<8x256xf32> to vector<8xf32>
    %28 = arith.mulf %22, %22 : vector<8x256xf32>
    %cst_20 = arith.constant dense<0.000000e+00> : vector<8xf32>
    %29 = vector.multi_reduction <add>, %28, %cst_20 [1] : vector<8x256xf32> to vector<8xf32>
    %30 = math.sqrt %29 : vector<8xf32>
    %cst_21 = arith.constant 9.99999993E-9 : f32
    %31 = vector.broadcast %cst_21 : f32 to vector<8xf32>
    %32 = arith.maximumf %30, %31 : vector<8xf32>
    %33 = arith.mulf %24, %24 : vector<8x256xf32>
    %cst_22 = arith.constant dense<0.000000e+00> : vector<8xf32>
    %34 = vector.multi_reduction <add>, %33, %cst_22 [1] : vector<8x256xf32> to vector<8xf32>
    %35 = math.sqrt %34 : vector<8xf32>
    %cst_23 = arith.constant 9.99999993E-9 : f32
    %36 = vector.broadcast %cst_23 : f32 to vector<8xf32>
    %37 = arith.maximumf %35, %36 : vector<8xf32>
    %38 = arith.mulf %32, %37 : vector<8xf32>
    %39 = arith.divf %27, %38 : vector<8xf32>
    %40 = arith.mulf %22, %25 : vector<8x256xf32>
    %cst_24 = arith.constant dense<0.000000e+00> : vector<8xf32>
    %41 = vector.multi_reduction <add>, %40, %cst_24 [1] : vector<8x256xf32> to vector<8xf32>
    %42 = arith.mulf %22, %22 : vector<8x256xf32>
    %cst_25 = arith.constant dense<0.000000e+00> : vector<8xf32>
    %43 = vector.multi_reduction <add>, %42, %cst_25 [1] : vector<8x256xf32> to vector<8xf32>
    %44 = math.sqrt %43 : vector<8xf32>
    %cst_26 = arith.constant 9.99999993E-9 : f32
    %45 = vector.broadcast %cst_26 : f32 to vector<8xf32>
    %46 = arith.maximumf %44, %45 : vector<8xf32>
    %47 = arith.mulf %25, %25 : vector<8x256xf32>
    %cst_27 = arith.constant dense<0.000000e+00> : vector<8xf32>
    %48 = vector.multi_reduction <add>, %47, %cst_27 [1] : vector<8x256xf32> to vector<8xf32>
    %49 = math.sqrt %48 : vector<8xf32>
    %cst_28 = arith.constant 9.99999993E-9 : f32
    %50 = vector.broadcast %cst_28 : f32 to vector<8xf32>
    %51 = arith.maximumf %49, %50 : vector<8xf32>
    %52 = arith.mulf %46, %51 : vector<8xf32>
    %53 = arith.divf %41, %52 : vector<8xf32>
    %cst_29 = arith.constant 6.000000e-01 : f32
    %54 = vector.broadcast %cst_29 : f32 to vector<8xf32>
    %55 = arith.subf %54, %39 : vector<8xf32>
    %56 = arith.addf %55, %53 : vector<8xf32>
    %cst_30 = arith.constant 9.99999997E-7 : f32
    %57 = vector.broadcast %cst_30 : f32 to vector<8xf32>
    %58 = arith.maximumf %56, %57 : vector<8xf32>
    %59 = vector.shape_cast %58 : vector<8xf32> to vector<1x8xf32>
    %c0_31 = arith.constant 0 : index
    %c0_32 = arith.constant 0 : index
    %60 = vector.load %arg8[%c0_31, %c0_32] : memref<1x8xf32, #tpu.memory_space<vmem>>, vector<1x8xf32>
    tpu.vector_store %arg8[%c0_31, %c0_32], %59 {strides = array<i32>} : memref<1x8xf32, #tpu.memory_space<vmem>>, vector<1x8xf32>,
    return
  }
}

</mosaic_0001>

<llo_original>
// kernel: joint_embeder_forward.4
$region0: #{joint_embeder_forward.4}
  #allocation0 [shape = 'u32[]', space=smem, size = 0x4, offset = 0x4, fixed_abs, tag = 'smem constant byte address 0x4 - core index']
  #allocation1 [shape = 'u32[144,128]{1,0:T(1,128)}', space=vmem, size = 0x12000, scoped, tag = 'internal scratch']
  #allocation2 [shape = 'f32[8,128]{1,0:T(8,128)}', space=vmem, size = 0x1000, scoped, tag = 'scratch operand']
  #allocation3 [shape = 'f32[8,128]{1,0:T(8,128)}', space=vmem, size = 0x1000, scoped, tag = 'scratch operand']
  %s0 = inlined_call_operand.vmem [shape: f32[2,64,128], index: 0, kind: input, shape index: {}]
  %s1 = inlined_call_operand.vmem [shape: f32[2,128,512], index: 1, kind: input, shape index: {}]
  %s2 = inlined_call_operand.vmem [shape: f32[2,128,512], index: 2, kind: input, shape index: {}]
  %s3 = inlined_call_operand.vmem [shape: f32[2,1,512], index: 3, kind: input, shape index: {}]
  %s4 = inlined_call_operand.vmem [shape: f32[8,256], index: 4, kind: output, shape index: {}]
  %s5 = sld [smem:[#allocation0]]
  $region57: #{joint_embeder_forward.4} parent=0
    _
  %s7 = ssub.s32 1, %s5
  %s8 = scalar_select 0, %s7, %s5
  loop: start=0, step=1, limit=6
  $region2: #{joint_embeder_forward.4} parent=0 // loop_pre_header
    _
  $region3: #{joint_embeder_forward.4} parent=0 // loop_header
    %s10 = sphi 0, %s14
    %p11 = scmp.ge.s32.totalorder %s10, 6
    %s17 = sphi 0, %s29
    %s18 = sphi 0, %s25
    %s19 = sphi 0, %s17
    %s20 = sphi 0, %s18
    %s21 = sphi 0, %s19
    %s22 = sphi 0, %s20
    %s34 = sphi 0, %s36
    %s37 = sphi 0, %s34
    %s38 = sphi 0, %s37
    %s54 = sphi 0, %s38
    %s60 = sphi 0, %s62
    %s63 = sphi 0, %s60
    %s64 = sphi 0, %s63
    %s80 = sphi 0, %s64
    %s86 = sphi 0, %s88
    %s89 = sphi 0, %s86
    %s90 = sphi 0, %s89
    %s106 = sphi 0, %s90
    %s112 = sphi 0, %s114
    %s115 = sphi 0, %s112
    %s116 = sphi 0, %s115
    %s132 = sphi 0, %s116
    %s138 = sphi 0, %s140
    %s141 = sphi 0, %s138
    %s142 = sphi 0, %s141
    %s158 = sphi 0, %s142
  $region4: #{joint_embeder_forward.4} parent=0 // loop_header_branch
    %13 = sbr.rel (%p11) target = $region8
  $region5: #{joint_embeder_forward.4} parent=0 // loop_body
    %s15 = ssub.s32 %s10, 1
    %s16 = ssub.s32 %s10, 2
    %s23 = sadd.s32 1, %s18
    %p24 = scmp.ge.s32.totalorder %s23, 2
    %s25 = scalar_select %p24, 0, %s23
    %s26 = sadd.s32 1, %s17
    %s27 = scalar_select %p24, %s26, %s17
    %p28 = scmp.ge.s32.totalorder %s27, 2
    %s29 = scalar_select %p28, 0, %s27
    %s30 = ssub.s32 %s17, %s29
    %s31 = ssub.s32 %s18, %s25
    %s32 = sor.u32 %s30, %s31
    %p33 = scmp.eq.s32.totalorder %s32, 0
    %s35 = sadd.s32 %s34, 1
    %s36 = scalar_select %p33, %s34, %s35
    %p39 = pneg %p33
    %p40 = scmp.eq.s32.totalorder %s10, 3
    %p41 = por %p39, %p40
    %p42 = scmp.ne.s32.totalorder %s34, %s37
    %p43 = scmp.eq.s32.totalorder %s10, 0
    %p44 = por %p42, %p43
    %p45 = scmp.ne.s32.totalorder %s34, %s37
    %p46 = scmp.eq.s32.totalorder %s15, 3
    %p47 = por %p45, %p46
    %p48 = scmp.ne.s32.totalorder %s37, %s38
    %p49 = scmp.eq.s32.totalorder %s15, 0
    %p50 = por %p48, %p49
    %p51 = scmp.ne.s32.totalorder %s37, %s38
    %p52 = scmp.eq.s32.totalorder %s16, 3
    %p53 = por %p51, %p52
    %p55 = scmp.ne.s32.totalorder %s38, %s54
    %p56 = scmp.eq.s32.totalorder %s16, 0
    %p57 = por %p55, %p56
    %s58 = ssub.s32 %s17, %s29
    %p59 = scmp.eq.s32.totalorder %s58, 0
    %s61 = sadd.s32 %s60, 1
    %s62 = scalar_select %p59, %s60, %s61
    %p65 = pneg %p59
    %p66 = scmp.eq.s32.totalorder %s10, 3
    %p67 = por %p65, %p66
    %p68 = scmp.ne.s32.totalorder %s60, %s63
    %p69 = scmp.eq.s32.totalorder %s10, 0
    %p70 = por %p68, %p69
    %p71 = scmp.ne.s32.totalorder %s60, %s63
    %p72 = scmp.eq.s32.totalorder %s15, 3
    %p73 = por %p71, %p72
    %p74 = scmp.ne.s32.totalorder %s63, %s64
    %p75 = scmp.eq.s32.totalorder %s15, 0
    %p76 = por %p74, %p75
    %p77 = scmp.ne.s32.totalorder %s63, %s64
    %p78 = scmp.eq.s32.totalorder %s16, 3
    %p79 = por %p77, %p78
    %p81 = scmp.ne.s32.totalorder %s64, %s80
    %p82 = scmp.eq.s32.totalorder %s16, 0
    %p83 = por %p81, %p82
    %s84 = ssub.s32 %s17, %s29
    %p85 = scmp.eq.s32.totalorder %s84, 0
    %s87 = sadd.s32 %s86, 1
    %s88 = scalar_select %p85, %s86, %s87
    %p91 = pneg %p85
    %p92 = scmp.eq.s32.totalorder %s10, 3
    %p93 = por %p91, %p92
    %p94 = scmp.ne.s32.totalorder %s86, %s89
    %p95 = scmp.eq.s32.totalorder %s10, 0
    %p96 = por %p94, %p95
    %p97 = scmp.ne.s32.totalorder %s86, %s89
    %p98 = scmp.eq.s32.totalorder %s15, 3
    %p99 = por %p97, %p98
    %p100 = scmp.ne.s32.totalorder %s89, %s90
    %p101 = scmp.eq.s32.totalorder %s15, 0
    %p102 = por %p100, %p101
    %p103 = scmp.ne.s32.totalorder %s89, %s90
    %p104 = scmp.eq.s32.totalorder %s16, 3
    %p105 = por %p103, %p104
    %p107 = scmp.ne.s32.totalorder %s90, %s106
    %p108 = scmp.eq.s32.totalorder %s16, 0
    %p109 = por %p107, %p108
    %s110 = ssub.s32 %s17, %s29
    %p111 = scmp.eq.s32.totalorder %s110, 0
    %s113 = sadd.s32 %s112, 1
    %s114 = scalar_select %p111, %s112, %s113
    %p117 = pneg %p111
    %p118 = scmp.eq.s32.totalorder %s10, 3
    %p119 = por %p117, %p118
    %p120 = scmp.ne.s32.totalorder %s112, %s115
    %p121 = scmp.eq.s32.totalorder %s10, 0
    %p122 = por %p120, %p121
    %p123 = scmp.ne.s32.totalorder %s112, %s115
    %p124 = scmp.eq.s32.totalorder %s15, 3
    %p125 = por %p123, %p124
    %p126 = scmp.ne.s32.totalorder %s115, %s116
    %p127 = scmp.eq.s32.totalorder %s15, 0
    %p128 = por %p126, %p127
    %p129 = scmp.ne.s32.totalorder %s115, %s116
    %p130 = scmp.eq.s32.totalorder %s16, 3
    %p131 = por %p129, %p130
    %p133 = scmp.ne.s32.totalorder %s116, %s132
    %p134 = scmp.eq.s32.totalorder %s16, 0
    %p135 = por %p133, %p134
    %s136 = ssub.s32 %s17, %s29
    %p137 = scmp.eq.s32.totalorder %s136, 0
    %s139 = sadd.s32 %s138, 1
    %s140 = scalar_select %p137, %s138, %s139
    %p143 = pneg %p137
    %p144 = scmp.eq.s32.totalorder %s10, 3
    %p145 = por %p143, %p144
    %p146 = scmp.ne.s32.totalorder %s138, %s141
    %p147 = scmp.eq.s32.totalorder %s10, 0
    %p148 = por %p146, %p147
    %p149 = scmp.ne.s32.totalorder %s138, %s141
    %p150 = scmp.eq.s32.totalorder %s15, 3
    %p151 = por %p149, %p150
    %p152 = scmp.ne.s32.totalorder %s141, %s142
    %p153 = scmp.eq.s32.totalorder %s15, 0
    %p154 = por %p152, %p153
    %p155 = scmp.ne.s32.totalorder %s141, %s142
    %p156 = scmp.eq.s32.totalorder %s16, 3
    %p157 = por %p155, %p156
    %p159 = scmp.ne.s32.totalorder %s142, %s158
    %p160 = scmp.eq.s32.totalorder %s16, 0
    %p161 = por %p159, %p160
    %p162 = scmp.le.s32.totalorder 1, %s10
    %p163 = scmp.lt.s32.totalorder %s10, 5
    %p164 = pnand %p162, %p163
    %p165 = pneg %p164
    // Predicated region
    $region9: #{joint_embeder_forward.4} parent=5 // pred_check
      _
    $region10: #{joint_embeder_forward.4} parent=5 // pred_check_branch
      %167 = sbr.rel (%p164) target = $region12
    $region11: #{joint_embeder_forward.4} parent=5 // pred_region
      %s168 = ssub.s32 %s10, 1
    $region12: #{joint_embeder_forward.4} parent=5 // pred_fallthru
      _
    %p169 = scmp.lt.s32.totalorder %s10, 4
    // Predicated region
    $region13: #{joint_embeder_forward.4} parent=5 // pred_check
      %p170 = pneg %p169
    $region14: #{joint_embeder_forward.4} parent=5 // pred_check_branch
      %172 = sbr.rel (%p170) target = $region16
    $region15: #{joint_embeder_forward.4} parent=5 // pred_region
      // Predicated region
      $region17: #{joint_embeder_forward.4} parent=15 // pred_check
        %p173 = pneg %p44
      $region18: #{joint_embeder_forward.4} parent=15 // pred_check_branch
        %175 = sbr.rel (%p173) target = $region20
      $region19: #{joint_embeder_forward.4} parent=15 // pred_region
        %s176 = smul.u32 4, %s18
        %p177 = scmp.lt.s32.totalorder %s17, 1
        %s178 = scalar_select %p177, %s17, 1
        %p179 = scmp.lt.s32.totalorder %s176, 7
        %s180 = scalar_select %p179, %s176, 7
        %s181 = smul.addr %s178, 8
        %s182 = sadd.s32 %s180, %s181
        %s183 = smul.addr %s182, 8
        %s184 = scalar_lea.vmem %s0, %s183
        %s185 = smul.u32 4, %s18
      $region20: #{joint_embeder_forward.4} parent=15 // pred_fallthru
        _
      // Predicated region
      $region21: #{joint_embeder_forward.4} parent=15 // pred_check
        %p186 = pneg %p70
      $region22: #{joint_embeder_forward.4} parent=15 // pred_check_branch
        %188 = sbr.rel (%p186) target = $region24
      $region23: #{joint_embeder_forward.4} parent=15 // pred_region
        %p189 = scmp.lt.s32.totalorder %s17, 1
        %s190 = scalar_select %p189, %s17, 1
        %s191 = smul.addr %s190, 64
        %s192 = smul.addr %s191, 8
        %s193 = scalar_lea.vmem %s1, %s192
      $region24: #{joint_embeder_forward.4} parent=15 // pred_fallthru
        _
      // Predicated region
      $region25: #{joint_embeder_forward.4} parent=15 // pred_check
        %p194 = pneg %p96
      $region26: #{joint_embeder_forward.4} parent=15 // pred_check_branch
        %196 = sbr.rel (%p194) target = $region28
      $region27: #{joint_embeder_forward.4} parent=15 // pred_region
        %p197 = scmp.lt.s32.totalorder %s17, 1
        %s198 = scalar_select %p197, %s17, 1
        %s199 = smul.addr %s198, 64
        %s200 = smul.addr %s199, 8
        %s201 = scalar_lea.vmem %s2, %s200
      $region28: #{joint_embeder_forward.4} parent=15 // pred_fallthru
        _
      // Predicated region
      $region29: #{joint_embeder_forward.4} parent=15 // pred_check
        %p202 = pneg %p122
      $region30: #{joint_embeder_forward.4} parent=15 // pred_check_branch
        %204 = sbr.rel (%p202) target = $region32
      $region31: #{joint_embeder_forward.4} parent=15 // pred_region
        %p205 = scmp.lt.s32.totalorder %s17, 1
        %s206 = scalar_select %p205, %s17, 1
        %s207 = smul.addr %s206, 4
        %s208 = scalar_lea.vmem %s3, %s207
      $region32: #{joint_embeder_forward.4} parent=15 // pred_fallthru
        _
    $region16: #{joint_embeder_forward.4} parent=5 // pred_fallthru
      _
    %p209 = scmp.le.s32.totalorder 1, %s10
    %p210 = scmp.lt.s32.totalorder %s10, 5
    %p211 = pnand %p209, %p210
    %p212 = pneg %p211
    // Predicated region
    $region33: #{joint_embeder_forward.4} parent=5 // pred_check
      _
    $region34: #{joint_embeder_forward.4} parent=5 // pred_check_branch
      %214 = sbr.rel (%p211) target = $region36
    $region35: #{joint_embeder_forward.4} parent=5 // pred_region
      %s215 = ssub.s32 %s10, 1
      %s216 = smul.u32 4, %s20
      %p217 = scmp.lt.s32.totalorder %s19, 1
      %s218 = scalar_select %p217, %s19, 1
      %p219 = scmp.lt.s32.totalorder %s216, 7
      %s220 = scalar_select %p219, %s216, 7
      %s221 = smul.addr %s218, 8
      %s222 = sadd.s32 %s220, %s221
      %s223 = smul.addr %s222, 8
      %s224 = scalar_lea.vmem %s0, %s223
      %p225 = pneg %p50
      %p226 = pneg %p47
      %p227 = scmp.lt.s32.totalorder %s19, 1
      %s228 = scalar_select %p227, %s19, 1
      %s229 = smul.addr %s228, 64
      %s230 = smul.addr %s229, 8
      %s231 = scalar_lea.vmem %s1, %s230
      %p232 = pneg %p76
      %p233 = pneg %p73
      %p234 = scmp.lt.s32.totalorder %s19, 1
      %s235 = scalar_select %p234, %s19, 1
      %s236 = smul.addr %s235, 64
      %s237 = smul.addr %s236, 8
      %s238 = scalar_lea.vmem %s2, %s237
      %p239 = pneg %p102
      %p240 = pneg %p99
      %p241 = scmp.lt.s32.totalorder %s19, 1
      %s242 = scalar_select %p241, %s19, 1
      %s243 = smul.addr %s242, 4
      %s244 = scalar_lea.vmem %s3, %s243
      %p245 = pneg %p128
      %p246 = pneg %p125
      %p247 = pneg %p154
      %p248 = pneg %p151
      %p249 = scmp.lt.s32.totalorder %s19, 1
      %s250 = scalar_select %p249, %s19, 1
      %s251 = smul.addr %s250, 8
      %s252 = scalar_lea.vmem %s4, %s251
      %s253 = smul.u32 4, %s20
      %p254 = scmp.lt.s32.totalorder %s19, 1
      %s255 = scalar_select %p254, %s19, 1
      %p256 = scmp.lt.s32.totalorder %s253, 7
      %s257 = scalar_select %p256, %s253, 7
      %s258 = smul.addr %s255, 8
      %s259 = sadd.s32 %s257, %s258
      %s260 = smul.addr %s259, 8
      %s261 = scalar_lea.vmem %s0, %s260
      %s262 = smul.u32 4, %s20
      %p263 = scmp.lt.s32.totalorder %s19, 1
      %s264 = scalar_select %p263, %s19, 1
      %s265 = smul.addr %s264, 64
      %s266 = smul.addr %s265, 8
      %s267 = scalar_lea.vmem %s1, %s266
      %p268 = scmp.lt.s32.totalorder %s19, 1
      %s269 = scalar_select %p268, %s19, 1
      %s270 = smul.addr %s269, 64
      %s271 = smul.addr %s270, 8
      %s272 = scalar_lea.vmem %s2, %s271
      %p273 = scmp.lt.s32.totalorder %s19, 1
      %s274 = scalar_select %p273, %s19, 1
      %s275 = smul.addr %s274, 4
      %s276 = scalar_lea.vmem %s3, %s275
      %p277 = scmp.lt.s32.totalorder %s19, 1
      %s278 = scalar_select %p277, %s19, 1
      %s279 = smul.addr %s278, 8
      %s280 = scalar_lea.vmem %s4, %s279
      %p282 = scmp.eq.s32.totalorder %s20, 0
      // Predicated region
      $region37: #{joint_embeder_forward.4} parent=35 // pred_check
        %p283 = pneg %p282
      $region38: #{joint_embeder_forward.4} parent=35 // pred_check_branch
        %285 = sbr.rel (%p283) target = $region40
      $region39: #{joint_embeder_forward.4} parent=35 // pred_region
        %286 = vst [vmem:[#allocation2] sm:$0xff] 0.0
        %287 = vst [vmem:[#allocation3] sm:$0xff] 0.0
      $region40: #{joint_embeder_forward.4} parent=35 // pred_fallthru
        _
      %v288 = vld [vmem:[%s261] sm:$0xff]
      %v289 = vld [vmem:[%s261 + $0x8] sm:$0xff]
      %v290 = vld [vmem:[%s261 + $0x10] sm:$0xff]
      %v291 = vld [vmem:[%s261 + $0x18] sm:$0xff]
      %v292 = vpack.c.bf16 %v289, %v288
      %v293 = vpack.c.bf16 %v291, %v290
      %v294 = vld [vmem:[%s267] sm:$0xff]
      %v295 = vld [vmem:[%s267 + $0x8] sm:$0xff]
      %v296 = vld [vmem:[%s267 + $0x10] sm:$0xff]
      %v297 = vld [vmem:[%s267 + $0x18] sm:$0xff]
      %v298 = vld [vmem:[%s267 + $0x20] sm:$0xff]
      %v299 = vld [vmem:[%s267 + $0x28] sm:$0xff]
      %v300 = vld [vmem:[%s267 + $0x30] sm:$0xff]
      %v301 = vld [vmem:[%s267 + $0x38] sm:$0xff]
      %v302 = vld [vmem:[%s267 + $0x40] sm:$0xff]
      %v303 = vld [vmem:[%s267 + $0x48] sm:$0xff]
      %v304 = vld [vmem:[%s267 + $0x50] sm:$0xff]
      %v305 = vld [vmem:[%s267 + $0x58] sm:$0xff]
      %v306 = vld [vmem:[%s267 + $0x60] sm:$0xff]
      %v307 = vld [vmem:[%s267 + $0x68] sm:$0xff]
      %v308 = vld [vmem:[%s267 + $0x70] sm:$0xff]
      %v309 = vld [vmem:[%s267 + $0x78] sm:$0xff]
      %v310 = vld [vmem:[%s267 + $0x80] sm:$0xff]
      %v311 = vld [vmem:[%s267 + $0x88] sm:$0xff]
      %v312 = vld [vmem:[%s267 + $0x90] sm:$0xff]
      %v313 = vld [vmem:[%s267 + $0x98] sm:$0xff]
      %v314 = vld [vmem:[%s267 + $0xa0] sm:$0xff]
      %v315 = vld [vmem:[%s267 + $0xa8] sm:$0xff]
      %v316 = vld [vmem:[%s267 + $0xb0] sm:$0xff]
      %v317 = vld [vmem:[%s267 + $0xb8] sm:$0xff]
      %v318 = vld [vmem:[%s267 + $0xc0] sm:$0xff]
      %v319 = vld [vmem:[%s267 + $0xc8] sm:$0xff]
      %v320 = vld [vmem:[%s267 + $0xd0] sm:$0xff]
      %v321 = vld [vmem:[%s267 + $0xd8] sm:$0xff]
      %v322 = vld [vmem:[%s267 + $0xe0] sm:$0xff]
      %v323 = vld [vmem:[%s267 + $0xe8] sm:$0xff]
      %v324 = vld [vmem:[%s267 + $0xf0] sm:$0xff]
      %v325 = vld [vmem:[%s267 + $0xf8] sm:$0xff]
      %v326 = vld [vmem:[%s267 + $0x100] sm:$0xff]
      %v327 = vld [vmem:[%s267 + $0x108] sm:$0xff]
      %v328 = vld [vmem:[%s267 + $0x110] sm:$0xff]
      %v329 = vld [vmem:[%s267 + $0x118] sm:$0xff]
      %v330 = vld [vmem:[%s267 + $0x120] sm:$0xff]
      %v331 = vld [vmem:[%s267 + $0x128] sm:$0xff]
      %v332 = vld [vmem:[%s267 + $0x130] sm:$0xff]
      %v333 = vld [vmem:[%s267 + $0x138] sm:$0xff]
      %v334 = vld [vmem:[%s267 + $0x140] sm:$0xff]
      %v335 = vld [vmem:[%s267 + $0x148] sm:$0xff]
      %v336 = vld [vmem:[%s267 + $0x150] sm:$0xff]
      %v337 = vld [vmem:[%s267 + $0x158] sm:$0xff]
      %v338 = vld [vmem:[%s267 + $0x160] sm:$0xff]
      %v339 = vld [vmem:[%s267 + $0x168] sm:$0xff]
      %v340 = vld [vmem:[%s267 + $0x170] sm:$0xff]
      %v341 = vld [vmem:[%s267 + $0x178] sm:$0xff]
      %v342 = vld [vmem:[%s267 + $0x180] sm:$0xff]
      %v343 = vld [vmem:[%s267 + $0x188] sm:$0xff]
      %v344 = vld [vmem:[%s267 + $0x190] sm:$0xff]
      %v345 = vld [vmem:[%s267 + $0x198] sm:$0xff]
      %v346 = vld [vmem:[%s267 + $0x1a0] sm:$0xff]
      %v347 = vld [vmem:[%s267 + $0x1a8] sm:$0xff]
      %v348 = vld [vmem:[%s267 + $0x1b0] sm:$0xff]
      %v349 = vld [vmem:[%s267 + $0x1b8] sm:$0xff]
      %v350 = vld [vmem:[%s267 + $0x1c0] sm:$0xff]
      %v351 = vld [vmem:[%s267 + $0x1c8] sm:$0xff]
      %v352 = vld [vmem:[%s267 + $0x1d0] sm:$0xff]
      %v353 = vld [vmem:[%s267 + $0x1d8] sm:$0xff]
      %v354 = vld [vmem:[%s267 + $0x1e0] sm:$0xff]
      %v355 = vld [vmem:[%s267 + $0x1e8] sm:$0xff]
      %v356 = vld [vmem:[%s267 + $0x1f0] sm:$0xff]
      %v357 = vld [vmem:[%s267 + $0x1f8] sm:$0xff]
      %v358 = vpack.c.bf16 %v298, %v294
      %v359 = vpack.c.bf16 %v299, %v295
      %v360 = vpack.c.bf16 %v300, %v296
      %v361 = vpack.c.bf16 %v301, %v297
      %v362 = vpack.c.bf16 %v306, %v302
      %v363 = vpack.c.bf16 %v307, %v303
      %v364 = vpack.c.bf16 %v308, %v304
      %v365 = vpack.c.bf16 %v309, %v305
      %v366 = vpack.c.bf16 %v314, %v310
      %v367 = vpack.c.bf16 %v315, %v311
      %v368 = vpack.c.bf16 %v316, %v312
      %v369 = vpack.c.bf16 %v317, %v313
      %v370 = vpack.c.bf16 %v322, %v318
      %v371 = vpack.c.bf16 %v323, %v319
      %v372 = vpack.c.bf16 %v324, %v320
      %v373 = vpack.c.bf16 %v325, %v321
      %v374 = vpack.c.bf16 %v330, %v326
      %v375 = vpack.c.bf16 %v331, %v327
      %v376 = vpack.c.bf16 %v332, %v328
      %v377 = vpack.c.bf16 %v333, %v329
      %v378 = vpack.c.bf16 %v338, %v334
      %v379 = vpack.c.bf16 %v339, %v335
      %v380 = vpack.c.bf16 %v340, %v336
      %v381 = vpack.c.bf16 %v341, %v337
      %v382 = vpack.c.bf16 %v346, %v342
      %v383 = vpack.c.bf16 %v347, %v343
      %v384 = vpack.c.bf16 %v348, %v344
      %v385 = vpack.c.bf16 %v349, %v345
      %v386 = vpack.c.bf16 %v354, %v350
      %v387 = vpack.c.bf16 %v355, %v351
      %v388 = vpack.c.bf16 %v356, %v352
      %v389 = vpack.c.bf16 %v357, %v353
      %v390 = vld [vmem:[%s276] sm:$0xf]
      %v392 = vlaneseq
      %v393 = vshrl.u32 %v392, 7
      %v394 = vsub.s32 0, %v393
      %v395 = vrot.slane %v390, %v394
      %v396 = vlaneseq
      %v397 = vshrl.u32 %v396, 7
      %v398 = vsub.s32 1, %v397
      %v399 = vrot.slane %v390, %v398
      %v400 = vlaneseq
      %v401 = vshrl.u32 %v400, 7
      %v402 = vsub.s32 2, %v401
      %v403 = vrot.slane %v390, %v402
      %v404 = vlaneseq
      %v405 = vshrl.u32 %v404, 7
      %v406 = vsub.s32 3, %v405
      %v407 = vrot.slane %v390, %v406
      %412 = vmatprep.subr.bf16.mxu0 %v359
      %413 = vmatpush1.bf16.msra.mxu0 %v358
      %414 = vmatprep.subr.bf16.mxu0 %v363
      %415 = vmatpush1.bf16.msra.mxu0 %v362
      %416 = vmatprep.subr.bf16.mxu0 %v367
      %417 = vmatpush1.bf16.msra.mxu0 %v366
      %418 = vmatprep.subr.bf16.mxu0 %v371
      %419 = vmatpush1.bf16.msra.mxu0 %v370
      %420 = vmatprep.subr.bf16.mxu0 %v375
      %421 = vmatpush1.bf16.msra.mxu0 %v374
      %422 = vmatprep.subr.bf16.mxu0 %v379
      %423 = vmatpush1.bf16.msra.mxu0 %v378
      %424 = vmatprep.subr.bf16.mxu0 %v383
      %425 = vmatpush1.bf16.msra.mxu0 %v382
      %426 = vmatprep.subr.bf16.mxu0 %v387
      %427 = vmatpush1.bf16.msra.mxu0 %v386
      %428 = vmatprep.subr.bf16.mxu0 0
      %429 = vmatpush1.bf16.msra.mxu0 0
      %430 = vmatprep.subr.bf16.mxu0 0
      %431 = vmatpush1.bf16.msra.mxu0 0
      %432 = vmatprep.subr.bf16.mxu0 0
      %433 = vmatpush1.bf16.msra.mxu0 0
      %434 = vmatprep.subr.bf16.mxu0 0
      %435 = vmatpush1.bf16.msra.mxu0 0
      %436 = vmatprep.subr.bf16.mxu0 0
      %437 = vmatpush1.bf16.msra.mxu0 0
      %438 = vmatprep.subr.bf16.mxu0 0
      %439 = vmatpush1.bf16.msra.mxu0 0
      %440 = vmatprep.subr.bf16.mxu0 0
      %441 = vmatpush1.bf16.msra.mxu0 0
      %442 = vmatprep.subr.bf16.mxu0 0
      %443 = vmatpush1.bf16.msra.mxu0 0
      %444 = vmatprep.mubr.bf16.mxu0 0
      %445 = vmatmul.mubr.bf16.gmra.mrb[0].mxu0 %v292
      %v446 = vpop.f32.mrb[0].mxu0
      %v447 = vadd.f32 %v395, %v446
      %v448 = vpop.f32.mrb[0].mxu0
      %v449 = vadd.f32 %v399, %v448
      %v450 = vpop.f32.mrb[0].mxu0
      %v451 = vadd.f32 %v395, %v450
      %v452 = vpop.f32.mrb[0].mxu0
      %v453 = vadd.f32 %v399, %v452
      %454 = vmatprep.mubr.bf16.mxu0 0
      %455 = vmatmul.mubr.bf16.gmra.mrb[0].mxu0 %v293
      %v456 = vpop.f32.mrb[0].mxu0
      %v457 = vadd.f32 %v395, %v456
      %v458 = vpop.f32.mrb[0].mxu0
      %v459 = vadd.f32 %v399, %v458
      %v460 = vpop.f32.mrb[0].mxu0
      %v461 = vadd.f32 %v395, %v460
      %v462 = vpop.f32.mrb[0].mxu0
      %v463 = vadd.f32 %v399, %v462
      %464 = vdwg.mxu0
      %465 = vmatprep.subr.bf16.mxu0 %v361
      %466 = vmatpush1.bf16.msra.mxu0 %v360
      %467 = vmatprep.subr.bf16.mxu0 %v365
      %468 = vmatpush1.bf16.msra.mxu0 %v364
      %469 = vmatprep.subr.bf16.mxu0 %v369
      %470 = vmatpush1.bf16.msra.mxu0 %v368
      %471 = vmatprep.subr.bf16.mxu0 %v373
      %472 = vmatpush1.bf16.msra.mxu0 %v372
      %473 = vmatprep.subr.bf16.mxu0 %v377
      %474 = vmatpush1.bf16.msra.mxu0 %v376
      %475 = vmatprep.subr.bf16.mxu0 %v381
      %476 = vmatpush1.bf16.msra.mxu0 %v380
      %477 = vmatprep.subr.bf16.mxu0 %v385
      %478 = vmatpush1.bf16.msra.mxu0 %v384
      %479 = vmatprep.subr.bf16.mxu0 %v389
      %480 = vmatpush1.bf16.msra.mxu0 %v388
      %481 = vmatprep.subr.bf16.mxu0 0
      %482 = vmatpush1.bf16.msra.mxu0 0
      %483 = vmatprep.subr.bf16.mxu0 0
      %484 = vmatpush1.bf16.msra.mxu0 0
      %485 = vmatprep.subr.bf16.mxu0 0
      %486 = vmatpush1.bf16.msra.mxu0 0
      %487 = vmatprep.subr.bf16.mxu0 0
      %488 = vmatpush1.bf16.msra.mxu0 0
      %489 = vmatprep.subr.bf16.mxu0 0
      %490 = vmatpush1.bf16.msra.mxu0 0
      %491 = vmatprep.subr.bf16.mxu0 0
      %492 = vmatpush1.bf16.msra.mxu0 0
      %493 = vmatprep.subr.bf16.mxu0 0
      %494 = vmatpush1.bf16.msra.mxu0 0
      %495 = vmatprep.subr.bf16.mxu0 0
      %496 = vmatpush1.bf16.msra.mxu0 0
      %497 = vmatprep.mubr.bf16.mxu0 0
      %498 = vmatmul.mubr.bf16.gmra.mrb[0].mxu0 %v292
      %v499 = vpop.f32.mrb[0].mxu0
      %v500 = vadd.f32 %v403, %v499
      %v501 = vpop.f32.mrb[0].mxu0
      %v502 = vadd.f32 %v407, %v501
      %v503 = vpop.f32.mrb[0].mxu0
      %v504 = vadd.f32 %v403, %v503
      %v505 = vpop.f32.mrb[0].mxu0
      %v506 = vadd.f32 %v407, %v505
      %507 = vmatprep.mubr.bf16.mxu0 0
      %508 = vmatmul.mubr.bf16.gmra.mrb[0].mxu0 %v293
      %v509 = vpop.f32.mrb[0].mxu0
      %v510 = vadd.f32 %v403, %v509
      %v511 = vpop.f32.mrb[0].mxu0
      %v512 = vadd.f32 %v407, %v511
      %v513 = vpop.f32.mrb[0].mxu0
      %v514 = vadd.f32 %v403, %v513
      %v515 = vpop.f32.mrb[0].mxu0
      %v516 = vadd.f32 %v407, %v515
      %517 = vdwg.mxu0
      %v518 = vld [vmem:[%s272] sm:$0xff]
      %v519 = vld [vmem:[%s272 + $0x8] sm:$0xff]
      %v520 = vld [vmem:[%s272 + $0x10] sm:$0xff]
      %v521 = vld [vmem:[%s272 + $0x18] sm:$0xff]
      %v522 = vld [vmem:[%s272 + $0x20] sm:$0xff]
      %v523 = vld [vmem:[%s272 + $0x28] sm:$0xff]
      %v524 = vld [vmem:[%s272 + $0x30] sm:$0xff]
      %v525 = vld [vmem:[%s272 + $0x38] sm:$0xff]
      %v526 = vld [vmem:[%s272 + $0x40] sm:$0xff]
      %v527 = vld [vmem:[%s272 + $0x48] sm:$0xff]
      %v528 = vld [vmem:[%s272 + $0x50] sm:$0xff]
      %v529 = vld [vmem:[%s272 + $0x58] sm:$0xff]
      %v530 = vld [vmem:[%s272 + $0x60] sm:$0xff]
      %v531 = vld [vmem:[%s272 + $0x68] sm:$0xff]
      %v532 = vld [vmem:[%s272 + $0x70] sm:$0xff]
      %v533 = vld [vmem:[%s272 + $0x78] sm:$0xff]
      %v534 = vld [vmem:[%s272 + $0x80] sm:$0xff]
      %v535 = vld [vmem:[%s272 + $0x88] sm:$0xff]
      %v536 = vld [vmem:[%s272 + $0x90] sm:$0xff]
      %v537 = vld [vmem:[%s272 + $0x98] sm:$0xff]
      %v538 = vld [vmem:[%s272 + $0xa0] sm:$0xff]
      %v539 = vld [vmem:[%s272 + $0xa8] sm:$0xff]
      %v540 = vld [vmem:[%s272 + $0xb0] sm:$0xff]
      %v541 = vld [vmem:[%s272 + $0xb8] sm:$0xff]
      %v542 = vld [vmem:[%s272 + $0xc0] sm:$0xff]
      %v543 = vld [vmem:[%s272 + $0xc8] sm:$0xff]
      %v544 = vld [vmem:[%s272 + $0xd0] sm:$0xff]
      %v545 = vld [vmem:[%s272 + $0xd8] sm:$0xff]
      %v546 = vld [vmem:[%s272 + $0xe0] sm:$0xff]
      %v547 = vld [vmem:[%s272 + $0xe8] sm:$0xff]
      %v548 = vld [vmem:[%s272 + $0xf0] sm:$0xff]
      %v549 = vld [vmem:[%s272 + $0xf8] sm:$0xff]
      %v550 = vld [vmem:[%s272 + $0x100] sm:$0xff]
      %v551 = vld [vmem:[%s272 + $0x108] sm:$0xff]
      %v552 = vld [vmem:[%s272 + $0x110] sm:$0xff]
      %v553 = vld [vmem:[%s272 + $0x118] sm:$0xff]
      %v554 = vld [vmem:[%s272 + $0x120] sm:$0xff]
      %v555 = vld [vmem:[%s272 + $0x128] sm:$0xff]
      %v556 = vld [vmem:[%s272 + $0x130] sm:$0xff]
      %v557 = vld [vmem:[%s272 + $0x138] sm:$0xff]
      %v558 = vld [vmem:[%s272 + $0x140] sm:$0xff]
      %v559 = vld [vmem:[%s272 + $0x148] sm:$0xff]
      %v560 = vld [vmem:[%s272 + $0x150] sm:$0xff]
      %v561 = vld [vmem:[%s272 + $0x158] sm:$0xff]
      %v562 = vld [vmem:[%s272 + $0x160] sm:$0xff]
      %v563 = vld [vmem:[%s272 + $0x168] sm:$0xff]
      %v564 = vld [vmem:[%s272 + $0x170] sm:$0xff]
      %v565 = vld [vmem:[%s272 + $0x178] sm:$0xff]
      %v566 = vld [vmem:[%s272 + $0x180] sm:$0xff]
      %v567 = vld [vmem:[%s272 + $0x188] sm:$0xff]
      %v568 = vld [vmem:[%s272 + $0x190] sm:$0xff]
      %v569 = vld [vmem:[%s272 + $0x198] sm:$0xff]
      %v570 = vld [vmem:[%s272 + $0x1a0] sm:$0xff]
      %v571 = vld [vmem:[%s272 + $0x1a8] sm:$0xff]
      %v572 = vld [vmem:[%s272 + $0x1b0] sm:$0xff]
      %v573 = vld [vmem:[%s272 + $0x1b8] sm:$0xff]
      %v574 = vld [vmem:[%s272 + $0x1c0] sm:$0xff]
      %v575 = vld [vmem:[%s272 + $0x1c8] sm:$0xff]
      %v576 = vld [vmem:[%s272 + $0x1d0] sm:$0xff]
      %v577 = vld [vmem:[%s272 + $0x1d8] sm:$0xff]
      %v578 = vld [vmem:[%s272 + $0x1e0] sm:$0xff]
      %v579 = vld [vmem:[%s272 + $0x1e8] sm:$0xff]
      %v580 = vld [vmem:[%s272 + $0x1f0] sm:$0xff]
      %v581 = vld [vmem:[%s272 + $0x1f8] sm:$0xff]
      %v582 = vpack.c.bf16 %v522, %v518
      %v583 = vpack.c.bf16 %v523, %v519
      %v584 = vpack.c.bf16 %v524, %v520
      %v585 = vpack.c.bf16 %v525, %v521
      %v586 = vpack.c.bf16 %v530, %v526
      %v587 = vpack.c.bf16 %v531, %v527
      %v588 = vpack.c.bf16 %v532, %v528
      %v589 = vpack.c.bf16 %v533, %v529
      %v590 = vpack.c.bf16 %v538, %v534
      %v591 = vpack.c.bf16 %v539, %v535
      %v592 = vpack.c.bf16 %v540, %v536
      %v593 = vpack.c.bf16 %v541, %v537
      %v594 = vpack.c.bf16 %v546, %v542
      %v595 = vpack.c.bf16 %v547, %v543
      %v596 = vpack.c.bf16 %v548, %v544
      %v597 = vpack.c.bf16 %v549, %v545
      %v598 = vpack.c.bf16 %v554, %v550
      %v599 = vpack.c.bf16 %v555, %v551
      %v600 = vpack.c.bf16 %v556, %v552
      %v601 = vpack.c.bf16 %v557, %v553
      %v602 = vpack.c.bf16 %v562, %v558
      %v603 = vpack.c.bf16 %v563, %v559
      %v604 = vpack.c.bf16 %v564, %v560
      %v605 = vpack.c.bf16 %v565, %v561
      %v606 = vpack.c.bf16 %v570, %v566
      %v607 = vpack.c.bf16 %v571, %v567
      %v608 = vpack.c.bf16 %v572, %v568
      %v609 = vpack.c.bf16 %v573, %v569
      %v610 = vpack.c.bf16 %v578, %v574
      %v611 = vpack.c.bf16 %v579, %v575
      %v612 = vpack.c.bf16 %v580, %v576
      %v613 = vpack.c.bf16 %v581, %v577
      %v614 = vld [vmem:[#allocation2] sm:$0xff]
      %v615 = vld [vmem:[#allocation3] sm:$0xff]
      %v616 = vpack.c.bf16 %v614, %v614
      %617 = vmatprep.subr.bf16.mxu0 %v583
      %618 = vmatpush1.bf16.msra.mxu0 %v582
      %619 = vmatprep.subr.bf16.mxu0 %v587
      %620 = vmatpush1.bf16.msra.mxu0 %v586
      %621 = vmatprep.subr.bf16.mxu0 %v591
      %622 = vmatpush1.bf16.msra.mxu0 %v590
      %623 = vmatprep.subr.bf16.mxu0 %v595
      %624 = vmatpush1.bf16.msra.mxu0 %v594
      %625 = vmatprep.subr.bf16.mxu0 %v599
      %626 = vmatpush1.bf16.msra.mxu0 %v598
      %627 = vmatprep.subr.bf16.mxu0 %v603
      %628 = vmatpush1.bf16.msra.mxu0 %v602
      %629 = vmatprep.subr.bf16.mxu0 %v607
      %630 = vmatpush1.bf16.msra.mxu0 %v606
      %631 = vmatprep.subr.bf16.mxu0 %v611
      %632 = vmatpush1.bf16.msra.mxu0 %v610
      %633 = vmatprep.subr.bf16.mxu0 0
      %634 = vmatpush1.bf16.msra.mxu0 0
      %635 = vmatprep.subr.bf16.mxu0 0
      %636 = vmatpush1.bf16.msra.mxu0 0
      %637 = vmatprep.subr.bf16.mxu0 0
      %638 = vmatpush1.bf16.msra.mxu0 0
      %639 = vmatprep.subr.bf16.mxu0 0
      %640 = vmatpush1.bf16.msra.mxu0 0
      %641 = vmatprep.subr.bf16.mxu0 0
      %642 = vmatpush1.bf16.msra.mxu0 0
      %643 = vmatprep.subr.bf16.mxu0 0
      %644 = vmatpush1.bf16.msra.mxu0 0
      %645 = vmatprep.subr.bf16.mxu0 0
      %646 = vmatpush1.bf16.msra.mxu0 0
      %647 = vmatprep.subr.bf16.mxu0 0
      %648 = vmatpush1.bf16.msra.mxu0 0
      %649 = vmatprep.mubr.bf16.mxu0 0
      %650 = vmatmul.mubr.bf16.gmra.mrb[0].mxu0 %v616
      %v651 = vpop.f32.mrb[0].mxu0
      %v652 = vadd.f32 0.0, %v651
      %v653 = vpop.f32.mrb[0].mxu0
      %v654 = vadd.f32 0.0, %v653
      %v655 = vpop.f32.mrb[0].mxu0
      %v656 = vpop.f32.mrb[0].mxu0
      %657 = vdwg.mxu0
      %658 = vmatprep.subr.bf16.mxu0 %v585
      %659 = vmatpush1.bf16.msra.mxu0 %v584
      %660 = vmatprep.subr.bf16.mxu0 %v589
      %661 = vmatpush1.bf16.msra.mxu0 %v588
      %662 = vmatprep.subr.bf16.mxu0 %v593
      %663 = vmatpush1.bf16.msra.mxu0 %v592
      %664 = vmatprep.subr.bf16.mxu0 %v597
      %665 = vmatpush1.bf16.msra.mxu0 %v596
      %666 = vmatprep.subr.bf16.mxu0 %v601
      %667 = vmatpush1.bf16.msra.mxu0 %v600
      %668 = vmatprep.subr.bf16.mxu0 %v605
      %669 = vmatpush1.bf16.msra.mxu0 %v604
      %670 = vmatprep.subr.bf16.mxu0 %v609
      %671 = vmatpush1.bf16.msra.mxu0 %v608
      %672 = vmatprep.subr.bf16.mxu0 %v613
      %673 = vmatpush1.bf16.msra.mxu0 %v612
      %674 = vmatprep.subr.bf16.mxu0 0
      %675 = vmatpush1.bf16.msra.mxu0 0
      %676 = vmatprep.subr.bf16.mxu0 0
      %677 = vmatpush1.bf16.msra.mxu0 0
      %678 = vmatprep.subr.bf16.mxu0 0
      %679 = vmatpush1.bf16.msra.mxu0 0
      %680 = vmatprep.subr.bf16.mxu0 0
      %681 = vmatpush1.bf16.msra.mxu0 0
      %682 = vmatprep.subr.bf16.mxu0 0
      %683 = vmatpush1.bf16.msra.mxu0 0
      %684 = vmatprep.subr.bf16.mxu0 0
      %685 = vmatpush1.bf16.msra.mxu0 0
      %686 = vmatprep.subr.bf16.mxu0 0
      %687 = vmatpush1.bf16.msra.mxu0 0
      %688 = vmatprep.subr.bf16.mxu0 0
      %689 = vmatpush1.bf16.msra.mxu0 0
      %690 = vmatprep.mubr.bf16.mxu0 0
      %691 = vmatmul.mubr.bf16.gmra.mrb[0].mxu0 %v616
      %v692 = vpop.f32.mrb[0].mxu0
      %v693 = vadd.f32 0.0, %v692
      %v694 = vpop.f32.mrb[0].mxu0
      %v695 = vadd.f32 0.0, %v694
      %v696 = vpop.f32.mrb[0].mxu0
      %v697 = vpop.f32.mrb[0].mxu0
      %698 = vdwg.mxu0
      %v699 = vadd.f32 %v447, %v652
      %v700 = vadd.f32 %v449, %v654
      %v701 = vadd.f32 %v500, %v693
      %v702 = vadd.f32 %v502, %v695
      %v703 = vxor.u32 %v699, 2147483648
      %v704 = vxor.u32 %v700, 2147483648
      %v705 = vxor.u32 %v701, 2147483648
      %v706 = vmul.f32 %v703, 1.442695
      %v707 = vpow.pop %v706
      %v708 = vmul.f32 %v704, 1.442695
      %v709 = vpow.pop %v708
      %v710 = vmul.f32 %v705, 1.442695
      %v711 = vpow.pop %v710
      %v712 = vadd.f32 %v707, 1.0
      %v713 = vadd.f32 %v709, 1.0
      %v714 = vadd.f32 %v711, 1.0
      %v715 = vrcp.pop %v712
      %v716 = vmul.f32 1.0, %v715
      %v717 = vrcp.pop %v713
      %v718 = vmul.f32 1.0, %v717
      %v719 = vrcp.pop %v714
      %v720 = vmul.f32 1.0, %v719
      %v721 = vtanh.pop %v702
      %v722 = vmul.f32 %v718, %v615
      %v723 = vmul.f32 %v716, %v721
      %v724 = vadd.f32 %v722, %v723
      %v725 = vtanh.pop %v724
      %v726 = vmul.f32 %v720, %v725
      %v727 = vpack.c.bf16 %v726, %v726
      %728 = vmatprep.subr.bf16.mxu0 %v583
      %729 = vmatpush1.bf16.msra.mxu0 %v582
      %730 = vmatprep.subr.bf16.mxu0 %v587
      %731 = vmatpush1.bf16.msra.mxu0 %v586
      %732 = vmatprep.subr.bf16.mxu0 %v591
      %733 = vmatpush1.bf16.msra.mxu0 %v590
      %734 = vmatprep.subr.bf16.mxu0 %v595
      %735 = vmatpush1.bf16.msra.mxu0 %v594
      %736 = vmatprep.subr.bf16.mxu0 %v599
      %737 = vmatpush1.bf16.msra.mxu0 %v598
      %738 = vmatprep.subr.bf16.mxu0 %v603
      %739 = vmatpush1.bf16.msra.mxu0 %v602
      %740 = vmatprep.subr.bf16.mxu0 %v607
      %741 = vmatpush1.bf16.msra.mxu0 %v606
      %742 = vmatprep.subr.bf16.mxu0 %v611
      %743 = vmatpush1.bf16.msra.mxu0 %v610
      %744 = vmatprep.subr.bf16.mxu0 0
      %745 = vmatpush1.bf16.msra.mxu0 0
      %746 = vmatprep.subr.bf16.mxu0 0
      %747 = vmatpush1.bf16.msra.mxu0 0
      %748 = vmatprep.subr.bf16.mxu0 0
      %749 = vmatpush1.bf16.msra.mxu0 0
      %750 = vmatprep.subr.bf16.mxu0 0
      %751 = vmatpush1.bf16.msra.mxu0 0
      %752 = vmatprep.subr.bf16.mxu0 0
      %753 = vmatpush1.bf16.msra.mxu0 0
      %754 = vmatprep.subr.bf16.mxu0 0
      %755 = vmatpush1.bf16.msra.mxu0 0
      %756 = vmatprep.subr.bf16.mxu0 0
      %757 = vmatpush1.bf16.msra.mxu0 0
      %758 = vmatprep.subr.bf16.mxu0 0
      %759 = vmatpush1.bf16.msra.mxu0 0
      %760 = vmatprep.mubr.bf16.mxu0 0
      %761 = vmatmul.mubr.bf16.gmra.mrb[0].mxu0 %v727
      %v762 = vpop.f32.mrb[0].mxu0
      %v763 = vadd.f32 0.0, %v762
      %v764 = vpop.f32.mrb[0].mxu0
      %v765 = vadd.f32 0.0, %v764
      %v766 = vpop.f32.mrb[0].mxu0
      %v767 = vpop.f32.mrb[0].mxu0
      %768 = vdwg.mxu0
      %769 = vmatprep.subr.bf16.mxu0 %v585
      %770 = vmatpush1.bf16.msra.mxu0 %v584
      %771 = vmatprep.subr.bf16.mxu0 %v589
      %772 = vmatpush1.bf16.msra.mxu0 %v588
      %773 = vmatprep.subr.bf16.mxu0 %v593
      %774 = vmatpush1.bf16.msra.mxu0 %v592
      %775 = vmatprep.subr.bf16.mxu0 %v597
      %776 = vmatpush1.bf16.msra.mxu0 %v596
      %777 = vmatprep.subr.bf16.mxu0 %v601
      %778 = vmatpush1.bf16.msra.mxu0 %v600
      %779 = vmatprep.subr.bf16.mxu0 %v605
      %780 = vmatpush1.bf16.msra.mxu0 %v604
      %781 = vmatprep.subr.bf16.mxu0 %v609
      %782 = vmatpush1.bf16.msra.mxu0 %v608
      %783 = vmatprep.subr.bf16.mxu0 %v613
      %784 = vmatpush1.bf16.msra.mxu0 %v612
      %785 = vmatprep.subr.bf16.mxu0 0
      %786 = vmatpush1.bf16.msra.mxu0 0
      %787 = vmatprep.subr.bf16.mxu0 0
      %788 = vmatpush1.bf16.msra.mxu0 0
      %789 = vmatprep.subr.bf16.mxu0 0
      %790 = vmatpush1.bf16.msra.mxu0 0
      %791 = vmatprep.subr.bf16.mxu0 0
      %792 = vmatpush1.bf16.msra.mxu0 0
      %793 = vmatprep.subr.bf16.mxu0 0
      %794 = vmatpush1.bf16.msra.mxu0 0
      %795 = vmatprep.subr.bf16.mxu0 0
      %796 = vmatpush1.bf16.msra.mxu0 0
      %797 = vmatprep.subr.bf16.mxu0 0
      %798 = vmatpush1.bf16.msra.mxu0 0
      %799 = vmatprep.subr.bf16.mxu0 0
      %800 = vmatpush1.bf16.msra.mxu0 0
      %801 = vmatprep.mubr.bf16.mxu0 0
      %802 = vmatmul.mubr.bf16.gmra.mrb[0].mxu0 %v727
      %v803 = vpop.f32.mrb[0].mxu0
      %v804 = vadd.f32 0.0, %v803
      %v805 = vpop.f32.mrb[0].mxu0
      %v806 = vadd.f32 0.0, %v805
      %v807 = vpop.f32.mrb[0].mxu0
      %v808 = vpop.f32.mrb[0].mxu0
      %809 = vdwg.mxu0
      %v810 = vadd.f32 %v451, %v763
      %v811 = vadd.f32 %v453, %v765
      %v812 = vadd.f32 %v504, %v804
      %v813 = vadd.f32 %v506, %v806
      %v814 = vxor.u32 %v810, 2147483648
      %v815 = vxor.u32 %v811, 2147483648
      %v816 = vxor.u32 %v812, 2147483648
      %v817 = vmul.f32 %v814, 1.442695
      %v818 = vpow.pop %v817
      %v819 = vmul.f32 %v815, 1.442695
      %v820 = vpow.pop %v819
      %v821 = vmul.f32 %v816, 1.442695
      %v822 = vpow.pop %v821
      %v823 = vadd.f32 %v818, 1.0
      %v824 = vadd.f32 %v820, 1.0
      %v825 = vadd.f32 %v822, 1.0
      %v826 = vrcp.pop %v823
      %v827 = vmul.f32 1.0, %v826
      %v828 = vrcp.pop %v824
      %v829 = vmul.f32 1.0, %v828
      %v830 = vrcp.pop %v825
      %v831 = vmul.f32 1.0, %v830
      %v832 = vtanh.pop %v813
      %v833 = vmul.f32 %v829, %v724
      %v834 = vmul.f32 %v827, %v832
      %v835 = vadd.f32 %v833, %v834
      %v836 = vtanh.pop %v835
      %v837 = vmul.f32 %v831, %v836
      %v838 = vpack.c.bf16 %v837, %v837
      %839 = vmatprep.subr.bf16.mxu0 %v583
      %840 = vmatpush1.bf16.msra.mxu0 %v582
      %841 = vmatprep.subr.bf16.mxu0 %v587
      %842 = vmatpush1.bf16.msra.mxu0 %v586
      %843 = vmatprep.subr.bf16.mxu0 %v591
      %844 = vmatpush1.bf16.msra.mxu0 %v590
      %845 = vmatprep.subr.bf16.mxu0 %v595
      %846 = vmatpush1.bf16.msra.mxu0 %v594
      %847 = vmatprep.subr.bf16.mxu0 %v599
      %848 = vmatpush1.bf16.msra.mxu0 %v598
      %849 = vmatprep.subr.bf16.mxu0 %v603
      %850 = vmatpush1.bf16.msra.mxu0 %v602
      %851 = vmatprep.subr.bf16.mxu0 %v607
      %852 = vmatpush1.bf16.msra.mxu0 %v606
      %853 = vmatprep.subr.bf16.mxu0 %v611
      %854 = vmatpush1.bf16.msra.mxu0 %v610
      %855 = vmatprep.subr.bf16.mxu0 0
      %856 = vmatpush1.bf16.msra.mxu0 0
      %857 = vmatprep.subr.bf16.mxu0 0
      %858 = vmatpush1.bf16.msra.mxu0 0
      %859 = vmatprep.subr.bf16.mxu0 0
      %860 = vmatpush1.bf16.msra.mxu0 0
      %861 = vmatprep.subr.bf16.mxu0 0
      %862 = vmatpush1.bf16.msra.mxu0 0
      %863 = vmatprep.subr.bf16.mxu0 0
      %864 = vmatpush1.bf16.msra.mxu0 0
      %865 = vmatprep.subr.bf16.mxu0 0
      %866 = vmatpush1.bf16.msra.mxu0 0
      %867 = vmatprep.subr.bf16.mxu0 0
      %868 = vmatpush1.bf16.msra.mxu0 0
      %869 = vmatprep.subr.bf16.mxu0 0
      %870 = vmatpush1.bf16.msra.mxu0 0
      %871 = vmatprep.mubr.bf16.mxu0 0
      %872 = vmatmul.mubr.bf16.gmra.mrb[0].mxu0 %v838
      %v873 = vpop.f32.mrb[0].mxu0
      %v874 = vadd.f32 0.0, %v873
      %v875 = vpop.f32.mrb[0].mxu0
      %v876 = vadd.f32 0.0, %v875
      %v877 = vpop.f32.mrb[0].mxu0
      %v878 = vpop.f32.mrb[0].mxu0
      %879 = vdwg.mxu0
      %880 = vmatprep.subr.bf16.mxu0 %v585
      %881 = vmatpush1.bf16.msra.mxu0 %v584
      %882 = vmatprep.subr.bf16.mxu0 %v589
      %883 = vmatpush1.bf16.msra.mxu0 %v588
      %884 = vmatprep.subr.bf16.mxu0 %v593
      %885 = vmatpush1.bf16.msra.mxu0 %v592
      %886 = vmatprep.subr.bf16.mxu0 %v597
      %887 = vmatpush1.bf16.msra.mxu0 %v596
      %888 = vmatprep.subr.bf16.mxu0 %v601
      %889 = vmatpush1.bf16.msra.mxu0 %v600
      %890 = vmatprep.subr.bf16.mxu0 %v605
      %891 = vmatpush1.bf16.msra.mxu0 %v604
      %892 = vmatprep.subr.bf16.mxu0 %v609
      %893 = vmatpush1.bf16.msra.mxu0 %v608
      %894 = vmatprep.subr.bf16.mxu0 %v613
      %895 = vmatpush1.bf16.msra.mxu0 %v612
      %896 = vmatprep.subr.bf16.mxu0 0
      %897 = vmatpush1.bf16.msra.mxu0 0
      %898 = vmatprep.subr.bf16.mxu0 0
      %899 = vmatpush1.bf16.msra.mxu0 0
      %900 = vmatprep.subr.bf16.mxu0 0
      %901 = vmatpush1.bf16.msra.mxu0 0
      %902 = vmatprep.subr.bf16.mxu0 0
      %903 = vmatpush1.bf16.msra.mxu0 0
      %904 = vmatprep.subr.bf16.mxu0 0
      %905 = vmatpush1.bf16.msra.mxu0 0
      %906 = vmatprep.subr.bf16.mxu0 0
      %907 = vmatpush1.bf16.msra.mxu0 0
      %908 = vmatprep.subr.bf16.mxu0 0
      %909 = vmatpush1.bf16.msra.mxu0 0
      %910 = vmatprep.subr.bf16.mxu0 0
      %911 = vmatpush1.bf16.msra.mxu0 0
      %912 = vmatprep.mubr.bf16.mxu0 0
      %913 = vmatmul.mubr.bf16.gmra.mrb[0].mxu0 %v838
      %v914 = vpop.f32.mrb[0].mxu0
      %v915 = vadd.f32 0.0, %v914
      %v916 = vpop.f32.mrb[0].mxu0
      %v917 = vadd.f32 0.0, %v916
      %v918 = vpop.f32.mrb[0].mxu0
      %v919 = vpop.f32.mrb[0].mxu0
      %920 = vdwg.mxu0
      %v921 = vadd.f32 %v457, %v874
      %v922 = vadd.f32 %v459, %v876
      %v923 = vadd.f32 %v510, %v915
      %v924 = vadd.f32 %v512, %v917
      %v925 = vxor.u32 %v921, 2147483648
      %v926 = vxor.u32 %v922, 2147483648
      %v927 = vxor.u32 %v923, 2147483648
      %v928 = vmul.f32 %v925, 1.442695
      %v929 = vpow.pop %v928
      %v930 = vmul.f32 %v926, 1.442695
      %v931 = vpow.pop %v930
      %v932 = vmul.f32 %v927, 1.442695
      %v933 = vpow.pop %v932
      %v934 = vadd.f32 %v929, 1.0
      %v935 = vadd.f32 %v931, 1.0
      %v936 = vadd.f32 %v933, 1.0
      %v937 = vrcp.pop %v934
      %v938 = vmul.f32 1.0, %v937
      %v939 = vrcp.pop %v935
      %v940 = vmul.f32 1.0, %v939
      %v941 = vrcp.pop %v936
      %v942 = vmul.f32 1.0, %v941
      %v943 = vtanh.pop %v924
      %v944 = vmul.f32 %v940, %v835
      %v945 = vmul.f32 %v938, %v943
      %v946 = vadd.f32 %v944, %v945
      %v947 = vtanh.pop %v946
      %v948 = vmul.f32 %v942, %v947
      %v949 = vpack.c.bf16 %v948, %v948
      %950 = vmatprep.subr.bf16.mxu0 %v583
      %951 = vmatpush1.bf16.msra.mxu0 %v582
      %952 = vmatprep.subr.bf16.mxu0 %v587
      %953 = vmatpush1.bf16.msra.mxu0 %v586
      %954 = vmatprep.subr.bf16.mxu0 %v591
      %955 = vmatpush1.bf16.msra.mxu0 %v590
      %956 = vmatprep.subr.bf16.mxu0 %v595
      %957 = vmatpush1.bf16.msra.mxu0 %v594
      %958 = vmatprep.subr.bf16.mxu0 %v599
      %959 = vmatpush1.bf16.msra.mxu0 %v598
      %960 = vmatprep.subr.bf16.mxu0 %v603
      %961 = vmatpush1.bf16.msra.mxu0 %v602
      %962 = vmatprep.subr.bf16.mxu0 %v607
      %963 = vmatpush1.bf16.msra.mxu0 %v606
      %964 = vmatprep.subr.bf16.mxu0 %v611
      %965 = vmatpush1.bf16.msra.mxu0 %v610
      %966 = vmatprep.subr.bf16.mxu0 0
      %967 = vmatpush1.bf16.msra.mxu0 0
      %968 = vmatprep.subr.bf16.mxu0 0
      %969 = vmatpush1.bf16.msra.mxu0 0
      %970 = vmatprep.subr.bf16.mxu0 0
      %971 = vmatpush1.bf16.msra.mxu0 0
      %972 = vmatprep.subr.bf16.mxu0 0
      %973 = vmatpush1.bf16.msra.mxu0 0
      %974 = vmatprep.subr.bf16.mxu0 0
      %975 = vmatpush1.bf16.msra.mxu0 0
      %976 = vmatprep.subr.bf16.mxu0 0
      %977 = vmatpush1.bf16.msra.mxu0 0
      %978 = vmatprep.subr.bf16.mxu0 0
      %979 = vmatpush1.bf16.msra.mxu0 0
      %980 = vmatprep.subr.bf16.mxu0 0
      %981 = vmatpush1.bf16.msra.mxu0 0
      %982 = vmatprep.mubr.bf16.mxu0 0
      %983 = vmatmul.mubr.bf16.gmra.mrb[0].mxu0 %v949
      %v984 = vpop.f32.mrb[0].mxu0
      %v985 = vadd.f32 0.0, %v984
      %v986 = vpop.f32.mrb[0].mxu0
      %v987 = vadd.f32 0.0, %v986
      %v988 = vpop.f32.mrb[0].mxu0
      %v989 = vpop.f32.mrb[0].mxu0
      %990 = vdwg.mxu0
      %991 = vmatprep.subr.bf16.mxu0 %v585
      %992 = vmatpush1.bf16.msra.mxu0 %v584
      %993 = vmatprep.subr.bf16.mxu0 %v589
      %994 = vmatpush1.bf16.msra.mxu0 %v588
      %995 = vmatprep.subr.bf16.mxu0 %v593
      %996 = vmatpush1.bf16.msra.mxu0 %v592
      %997 = vmatprep.subr.bf16.mxu0 %v597
      %998 = vmatpush1.bf16.msra.mxu0 %v596
      %999 = vmatprep.subr.bf16.mxu0 %v601
      %1000 = vmatpush1.bf16.msra.mxu0 %v600
      %1001 = vmatprep.subr.bf16.mxu0 %v605
      %1002 = vmatpush1.bf16.msra.mxu0 %v604
      %1003 = vmatprep.subr.bf16.mxu0 %v609
      %1004 = vmatpush1.bf16.msra.mxu0 %v608
      %1005 = vmatprep.subr.bf16.mxu0 %v613
      %1006 = vmatpush1.bf16.msra.mxu0 %v612
      %1007 = vmatprep.subr.bf16.mxu0 0
      %1008 = vmatpush1.bf16.msra.mxu0 0
      %1009 = vmatprep.subr.bf16.mxu0 0
      %1010 = vmatpush1.bf16.msra.mxu0 0
      %1011 = vmatprep.subr.bf16.mxu0 0
      %1012 = vmatpush1.bf16.msra.mxu0 0
      %1013 = vmatprep.subr.bf16.mxu0 0
      %1014 = vmatpush1.bf16.msra.mxu0 0
      %1015 = vmatprep.subr.bf16.mxu0 0
      %1016 = vmatpush1.bf16.msra.mxu0 0
      %1017 = vmatprep.subr.bf16.mxu0 0
      %1018 = vmatpush1.bf16.msra.mxu0 0
      %1019 = vmatprep.subr.bf16.mxu0 0
      %1020 = vmatpush1.bf16.msra.mxu0 0
      %1021 = vmatprep.subr.bf16.mxu0 0
      %1022 = vmatpush1.bf16.msra.mxu0 0
      %1023 = vmatprep.mubr.bf16.mxu0 0
      %1024 = vmatmul.mubr.bf16.gmra.mrb[0].mxu0 %v949
      %v1025 = vpop.f32.mrb[0].mxu0
      %v1026 = vadd.f32 0.0, %v1025
      %v1027 = vpop.f32.mrb[0].mxu0
      %v1028 = vadd.f32 0.0, %v1027
      %v1029 = vpop.f32.mrb[0].mxu0
      %v1030 = vpop.f32.mrb[0].mxu0
      %1031 = vdwg.mxu0
      %v1032 = vadd.f32 %v461, %v985
      %v1033 = vadd.f32 %v463, %v987
      %v1034 = vadd.f32 %v514, %v1026
      %v1035 = vadd.f32 %v516, %v1028
      %v1036 = vxor.u32 %v1032, 2147483648
      %v1037 = vxor.u32 %v1033, 2147483648
      %v1038 = vxor.u32 %v1034, 2147483648
      %v1039 = vmul.f32 %v1036, 1.442695
      %v1040 = vpow.pop %v1039
      %v1041 = vmul.f32 %v1037, 1.442695
      %v1042 = vpow.pop %v1041
      %v1043 = vmul.f32 %v1038, 1.442695
      %v1044 = vpow.pop %v1043
      %v1045 = vadd.f32 %v1040, 1.0
      %v1046 = vadd.f32 %v1042, 1.0
      %v1047 = vadd.f32 %v1044, 1.0
      %v1048 = vrcp.pop %v1045
      %v1049 = vmul.f32 1.0, %v1048
      %v1050 = vrcp.pop %v1046
      %v1051 = vmul.f32 1.0, %v1050
      %v1052 = vrcp.pop %v1047
      %v1053 = vmul.f32 1.0, %v1052
      %v1054 = vtanh.pop %v1035
      %v1055 = vmul.f32 %v1051, %v946
      %v1056 = vmul.f32 %v1049, %v1054
      %v1057 = vadd.f32 %v1055, %v1056
      %v1058 = vtanh.pop %v1057
      %v1059 = vmul.f32 %v1053, %v1058
      %1060 = vst [vmem:[#allocation2] sm:$0xff] %v1059
      %1061 = vst [vmem:[#allocation3] sm:$0xff] %v1057
      %p1062 = scmp.eq.s32.totalorder %s20, 1
      // Predicated region
      $region41: #{joint_embeder_forward.4} parent=35 // pred_check
        %p1063 = pneg %p1062
      $region42: #{joint_embeder_forward.4} parent=35 // pred_check_branch
        %1065 = sbr.rel (%p1063) target = $region44
      $region43: #{joint_embeder_forward.4} parent=35 // pred_region
        %1066 = vst [vmem:[%s280] sm:$0xff] %v1059
      $region44: #{joint_embeder_forward.4} parent=35 // pred_fallthru
        _
      %p1067 = scmp.lt.s32.totalorder %s19, 1
      %s1068 = scalar_select %p1067, %s19, 1
      %s1069 = smul.addr %s1068, 8
      %s1070 = scalar_lea.vmem %s4, %s1069
      // Predicated region
      $region45: #{joint_embeder_forward.4} parent=35 // pred_check
        %p1071 = pneg %p151
      $region46: #{joint_embeder_forward.4} parent=35 // pred_check_branch
        %1073 = sbr.rel (%p1071) target = $region48
      $region47: #{joint_embeder_forward.4} parent=35 // pred_region
        _
      $region48: #{joint_embeder_forward.4} parent=35 // pred_fallthru
        _
    $region36: #{joint_embeder_forward.4} parent=5 // pred_fallthru
      _
    %p1074 = scmp.le.s32.totalorder 2, %s10
    // Predicated region
    $region49: #{joint_embeder_forward.4} parent=5 // pred_check
      %p1075 = pneg %p1074
    $region50: #{joint_embeder_forward.4} parent=5 // pred_check_branch
      %1077 = sbr.rel (%p1075) target = $region52
    $region51: #{joint_embeder_forward.4} parent=5 // pred_region
      %s1078 = ssub.s32 %s10, 2
      // Predicated region
      $region53: #{joint_embeder_forward.4} parent=51 // pred_check
        %p1079 = pneg %p157
      $region54: #{joint_embeder_forward.4} parent=51 // pred_check_branch
        %1081 = sbr.rel (%p1079) target = $region56
      $region55: #{joint_embeder_forward.4} parent=51 // pred_region
        %p1082 = scmp.lt.s32.totalorder %s21, 1
        %s1083 = scalar_select %p1082, %s21, 1
        %s1084 = smul.addr %s1083, 8
        %s1085 = scalar_lea.vmem %s4, %s1084
      $region56: #{joint_embeder_forward.4} parent=51 // pred_fallthru
        _
    $region52: #{joint_embeder_forward.4} parent=5 // pred_fallthru
      _
  $region6: #{joint_embeder_forward.4} parent=0 // loop_footer
    %s14 = sadd.s32 1, %s10
  $region7: #{joint_embeder_forward.4} parent=0 // loop_footer_branch
    %9 = sbr.rel target = $region3
  $region8: #{joint_embeder_forward.4} parent=0 // loop_exit
    _

// kernel: joint_embeder_forward.5
$region0: #{joint_embeder_forward.5}
  #allocation0 [shape = 'u32[]', space=smem, size = 0x4, offset = 0x4, fixed_abs, tag = 'smem constant byte address 0x4 - core index']
  #allocation1 [shape = 'u32[144,128]{1,0:T(1,128)}', space=vmem, size = 0x12000, scoped, tag = 'internal scratch']
  #allocation2 [shape = 'f32[8,128]{1,0:T(8,128)}', space=vmem, size = 0x1000, scoped, tag = 'scratch operand']
  #allocation3 [shape = 'f32[8,128]{1,0:T(8,128)}', space=vmem, size = 0x1000, scoped, tag = 'scratch operand']
  %s0 = inlined_call_operand.vmem [shape: f32[2,64,128], index: 0, kind: input, shape index: {}]
  %s1 = inlined_call_operand.vmem [shape: f32[2,128,512], index: 1, kind: input, shape index: {}]
  %s2 = inlined_call_operand.hbm [shape: f32[2,128,512], index: 2, kind: input, shape index: {}]
  %s3 = inlined_call_operand.vmem [shape: f32[2,1,512], index: 3, kind: input, shape index: {}]
  %s4 = inlined_call_operand.vmem [shape: f32[8,256], index: 4, kind: output, shape index: {}]
  %s5 = sld [smem:[#allocation0]]
  $region61: #{joint_embeder_forward.5} parent=0
    _
  %s7 = ssub.s32 1, %s5
  %s8 = scalar_select 0, %s7, %s5
  $region1: #{joint_embeder_forward.5} parent=0
    #allocation4 [shape = 'u8[524288]{0}', space=vmem, size = 0x80000, scoped, tag = 'input window, operand 2']
    #allocation5 [shape = 's32[2]{0}', space=sflag, size = 0x8, scoped, tag = 'scoped memory for joint_embeder_forward.5']
    %9 = vsyncpa [#allocation5], 0
    %s10 = scalar_lea.sflag [#allocation5], 1
    %11 = vsyncpa %s10, 0
    loop: start=0, step=1, limit=6
    $region2: #{joint_embeder_forward.5} parent=1 // loop_pre_header
      _
    $region3: #{joint_embeder_forward.5} parent=1 // loop_header
      %s13 = sphi 0, %s17
      %p14 = scmp.ge.s32.totalorder %s13, 6
      %s20 = sphi 0, %s32
      %s21 = sphi 0, %s28
      %s22 = sphi 0, %s20
      %s23 = sphi 0, %s21
      %s24 = sphi 0, %s22
      %s25 = sphi 0, %s23
      %s37 = sphi 0, %s39
      %s40 = sphi 0, %s37
      %s41 = sphi 0, %s40
      %s57 = sphi 0, %s41
      %s63 = sphi 0, %s65
      %s66 = sphi 0, %s63
      %s67 = sphi 0, %s66
      %s83 = sphi 0, %s67
      %s89 = sphi 0, %s91
      %s92 = sphi 0, %s89
      %s93 = sphi 0, %s92
      %s109 = sphi 0, %s93
      %s115 = sphi 0, %s117
      %s118 = sphi 0, %s115
      %s119 = sphi 0, %s118
      %s135 = sphi 0, %s119
      %s141 = sphi 0, %s143
      %s144 = sphi 0, %s141
      %s145 = sphi 0, %s144
      %s161 = sphi 0, %s145
    $region4: #{joint_embeder_forward.5} parent=1 // loop_header_branch
      %16 = sbr.rel (%p14) target = $region8
    $region5: #{joint_embeder_forward.5} parent=1 // loop_body
      %s18 = ssub.s32 %s13, 1
      %s19 = ssub.s32 %s13, 2
      %s26 = sadd.s32 1, %s21
      %p27 = scmp.ge.s32.totalorder %s26, 2
      %s28 = scalar_select %p27, 0, %s26
      %s29 = sadd.s32 1, %s20
      %s30 = scalar_select %p27, %s29, %s20
      %p31 = scmp.ge.s32.totalorder %s30, 2
      %s32 = scalar_select %p31, 0, %s30
      %s33 = ssub.s32 %s20, %s32
      %s34 = ssub.s32 %s21, %s28
      %s35 = sor.u32 %s33, %s34
      %p36 = scmp.eq.s32.totalorder %s35, 0
      %s38 = sadd.s32 %s37, 1
      %s39 = scalar_select %p36, %s37, %s38
      %p42 = pneg %p36
      %p43 = scmp.eq.s32.totalorder %s13, 3
      %p44 = por %p42, %p43
      %p45 = scmp.ne.s32.totalorder %s37, %s40
      %p46 = scmp.eq.s32.totalorder %s13, 0
      %p47 = por %p45, %p46
      %p48 = scmp.ne.s32.totalorder %s37, %s40
      %p49 = scmp.eq.s32.totalorder %s18, 3
      %p50 = por %p48, %p49
      %p51 = scmp.ne.s32.totalorder %s40, %s41
      %p52 = scmp.eq.s32.totalorder %s18, 0
      %p53 = por %p51, %p52
      %p54 = scmp.ne.s32.totalorder %s40, %s41
      %p55 = scmp.eq.s32.totalorder %s19, 3
      %p56 = por %p54, %p55
      %p58 = scmp.ne.s32.totalorder %s41, %s57
      %p59 = scmp.eq.s32.totalorder %s19, 0
      %p60 = por %p58, %p59
      %s61 = ssub.s32 %s20, %s32
      %p62 = scmp.eq.s32.totalorder %s61, 0
      %s64 = sadd.s32 %s63, 1
      %s65 = scalar_select %p62, %s63, %s64
      %p68 = pneg %p62
      %p69 = scmp.eq.s32.totalorder %s13, 3
      %p70 = por %p68, %p69
      %p71 = scmp.ne.s32.totalorder %s63, %s66
      %p72 = scmp.eq.s32.totalorder %s13, 0
      %p73 = por %p71, %p72
      %p74 = scmp.ne.s32.totalorder %s63, %s66
      %p75 = scmp.eq.s32.totalorder %s18, 3
      %p76 = por %p74, %p75
      %p77 = scmp.ne.s32.totalorder %s66, %s67
      %p78 = scmp.eq.s32.totalorder %s18, 0
      %p79 = por %p77, %p78
      %p80 = scmp.ne.s32.totalorder %s66, %s67
      %p81 = scmp.eq.s32.totalorder %s19, 3
      %p82 = por %p80, %p81
      %p84 = scmp.ne.s32.totalorder %s67, %s83
      %p85 = scmp.eq.s32.totalorder %s19, 0
      %p86 = por %p84, %p85
      %s87 = ssub.s32 %s20, %s32
      %p88 = scmp.eq.s32.totalorder %s87, 0
      %s90 = sadd.s32 %s89, 1
      %s91 = scalar_select %p88, %s89, %s90
      %p94 = pneg %p88
      %p95 = scmp.eq.s32.totalorder %s13, 3
      %p96 = por %p94, %p95
      %p97 = scmp.ne.s32.totalorder %s89, %s92
      %p98 = scmp.eq.s32.totalorder %s13, 0
      %p99 = por %p97, %p98
      %p100 = scmp.ne.s32.totalorder %s89, %s92
      %p101 = scmp.eq.s32.totalorder %s18, 3
      %p102 = por %p100, %p101
      %p103 = scmp.ne.s32.totalorder %s92, %s93
      %p104 = scmp.eq.s32.totalorder %s18, 0
      %p105 = por %p103, %p104
      %p106 = scmp.ne.s32.totalorder %s92, %s93
      %p107 = scmp.eq.s32.totalorder %s19, 3
      %p108 = por %p106, %p107
      %p110 = scmp.ne.s32.totalorder %s93, %s109
      %p111 = scmp.eq.s32.totalorder %s19, 0
      %p112 = por %p110, %p111
      %s113 = ssub.s32 %s20, %s32
      %p114 = scmp.eq.s32.totalorder %s113, 0
      %s116 = sadd.s32 %s115, 1
      %s117 = scalar_select %p114, %s115, %s116
      %p120 = pneg %p114
      %p121 = scmp.eq.s32.totalorder %s13, 3
      %p122 = por %p120, %p121
      %p123 = scmp.ne.s32.totalorder %s115, %s118
      %p124 = scmp.eq.s32.totalorder %s13, 0
      %p125 = por %p123, %p124
      %p126 = scmp.ne.s32.totalorder %s115, %s118
      %p127 = scmp.eq.s32.totalorder %s18, 3
      %p128 = por %p126, %p127
      %p129 = scmp.ne.s32.totalorder %s118, %s119
      %p130 = scmp.eq.s32.totalorder %s18, 0
      %p131 = por %p129, %p130
      %p132 = scmp.ne.s32.totalorder %s118, %s119
      %p133 = scmp.eq.s32.totalorder %s19, 3
      %p134 = por %p132, %p133
      %p136 = scmp.ne.s32.totalorder %s119, %s135
      %p137 = scmp.eq.s32.totalorder %s19, 0
      %p138 = por %p136, %p137
      %s139 = ssub.s32 %s20, %s32
      %p140 = scmp.eq.s32.totalorder %s139, 0
      %s142 = sadd.s32 %s141, 1
      %s143 = scalar_select %p140, %s141, %s142
      %p146 = pneg %p140
      %p147 = scmp.eq.s32.totalorder %s13, 3
      %p148 = por %p146, %p147
      %p149 = scmp.ne.s32.totalorder %s141, %s144
      %p150 = scmp.eq.s32.totalorder %s13, 0
      %p151 = por %p149, %p150
      %p152 = scmp.ne.s32.totalorder %s141, %s144
      %p153 = scmp.eq.s32.totalorder %s18, 3
      %p154 = por %p152, %p153
      %p155 = scmp.ne.s32.totalorder %s144, %s145
      %p156 = scmp.eq.s32.totalorder %s18, 0
      %p157 = por %p155, %p156
      %p158 = scmp.ne.s32.totalorder %s144, %s145
      %p159 = scmp.eq.s32.totalorder %s19, 3
      %p160 = por %p158, %p159
      %p162 = scmp.ne.s32.totalorder %s145, %s161
      %p163 = scmp.eq.s32.totalorder %s19, 0
      %p164 = por %p162, %p163
      %p165 = scmp.le.s32.totalorder 1, %s13
      %p166 = scmp.lt.s32.totalorder %s13, 5
      %p167 = pnand %p165, %p166
      %p168 = pneg %p167
      // Predicated region
      $region9: #{joint_embeder_forward.5} parent=5 // pred_check
        _
      $region10: #{joint_embeder_forward.5} parent=5 // pred_check_branch
        %170 = sbr.rel (%p167) target = $region12
      $region11: #{joint_embeder_forward.5} parent=5 // pred_region
        %s171 = ssub.s32 %s13, 1
      $region12: #{joint_embeder_forward.5} parent=5 // pred_fallthru
        _
      %p172 = scmp.lt.s32.totalorder %s13, 4
      // Predicated region
      $region13: #{joint_embeder_forward.5} parent=5 // pred_check
        %p173 = pneg %p172
      $region14: #{joint_embeder_forward.5} parent=5 // pred_check_branch
        %175 = sbr.rel (%p173) target = $region16
      $region15: #{joint_embeder_forward.5} parent=5 // pred_region
        // Predicated region
        $region17: #{joint_embeder_forward.5} parent=15 // pred_check
          %p176 = pneg %p47
        $region18: #{joint_embeder_forward.5} parent=15 // pred_check_branch
          %178 = sbr.rel (%p176) target = $region20
        $region19: #{joint_embeder_forward.5} parent=15 // pred_region
          %s179 = smul.u32 4, %s21
          %p180 = scmp.lt.s32.totalorder %s20, 1
          %s181 = scalar_select %p180, %s20, 1
          %p182 = scmp.lt.s32.totalorder %s179, 7
          %s183 = scalar_select %p182, %s179, 7
          %s184 = smul.addr %s181, 8
          %s185 = sadd.s32 %s183, %s184
          %s186 = smul.addr %s185, 8
          %s187 = scalar_lea.vmem %s0, %s186
          %s188 = smul.u32 4, %s21
        $region20: #{joint_embeder_forward.5} parent=15 // pred_fallthru
          _
        // Predicated region
        $region21: #{joint_embeder_forward.5} parent=15 // pred_check
          %p189 = pneg %p73
        $region22: #{joint_embeder_forward.5} parent=15 // pred_check_branch
          %191 = sbr.rel (%p189) target = $region24
        $region23: #{joint_embeder_forward.5} parent=15 // pred_region
          %p192 = scmp.lt.s32.totalorder %s20, 1
          %s193 = scalar_select %p192, %s20, 1
          %s194 = smul.addr %s193, 64
          %s195 = smul.addr %s194, 8
          %s196 = scalar_lea.vmem %s1, %s195
        $region24: #{joint_embeder_forward.5} parent=15 // pred_fallthru
          _
        // Predicated region
        $region25: #{joint_embeder_forward.5} parent=15 // pred_check
          %p197 = pneg %p99
        $region26: #{joint_embeder_forward.5} parent=15 // pred_check_branch
          %199 = sbr.rel (%p197) target = $region28
        $region27: #{joint_embeder_forward.5} parent=15 // pred_region
          %s200 = sand.u32 %s89, 1
          %s201 = scalar_lea.sflag [#allocation5], %s200
          %s202 = sand.u32 %s89, 1
          %s203 = smul.addr %s202, 512
          %s204 = scalar_lea.vmem [#allocation4], %s203
          %s206 = ssub.s32 8192, 8192
          %207 = vsyncadd %s201, %s206
          %s208 = smul.addr %s20, 64
          %s209 = smul.addr %s208, 128
          %s210 = scalar_lea.hbm %s2, %s209
          %s211 = sshll.u32 %s204, 4
          %s212 = int_to_ptr.vmem [resolvable:$true] %s211
          %217 = dma.hbm_to_vmem [thread:$0]  %s210, 8192, %s212, %s201, 512, 512, 32
        $region28: #{joint_embeder_forward.5} parent=15 // pred_fallthru
          _
        // Predicated region
        $region29: #{joint_embeder_forward.5} parent=15 // pred_check
          %p218 = pneg %p125
        $region30: #{joint_embeder_forward.5} parent=15 // pred_check_branch
          %220 = sbr.rel (%p218) target = $region32
        $region31: #{joint_embeder_forward.5} parent=15 // pred_region
          %p221 = scmp.lt.s32.totalorder %s20, 1
          %s222 = scalar_select %p221, %s20, 1
          %s223 = smul.addr %s222, 4
          %s224 = scalar_lea.vmem %s3, %s223
        $region32: #{joint_embeder_forward.5} parent=15 // pred_fallthru
          _
      $region16: #{joint_embeder_forward.5} parent=5 // pred_fallthru
        _
      %p225 = scmp.le.s32.totalorder 1, %s13
      %p226 = scmp.lt.s32.totalorder %s13, 5
      %p227 = pnand %p225, %p226
      %p228 = pneg %p227
      // Predicated region
      $region33: #{joint_embeder_forward.5} parent=5 // pred_check
        _
      $region34: #{joint_embeder_forward.5} parent=5 // pred_check_branch
        %230 = sbr.rel (%p227) target = $region36
      $region35: #{joint_embeder_forward.5} parent=5 // pred_region
        %s231 = ssub.s32 %s13, 1
        %s232 = sand.u32 %s92, 1
        %s233 = scalar_lea.sflag [#allocation5], %s232
        %s234 = sand.u32 %s92, 1
        %s235 = smul.addr %s234, 512
        %s236 = scalar_lea.vmem [#allocation4], %s235
        // Predicated region
        $region37: #{joint_embeder_forward.5} parent=35 // pred_check
          %p237 = pneg %p105
        $region38: #{joint_embeder_forward.5} parent=35 // pred_check_branch
          %239 = sbr.rel (%p237) target = $region40
        $region39: #{joint_embeder_forward.5} parent=35 // pred_region
          %240 = dma.done %s233, 8192
        $region40: #{joint_embeder_forward.5} parent=35 // pred_fallthru
          _
        %s241 = smul.u32 4, %s23
        %p242 = scmp.lt.s32.totalorder %s22, 1
        %s243 = scalar_select %p242, %s22, 1
        %p244 = scmp.lt.s32.totalorder %s241, 7
        %s245 = scalar_select %p244, %s241, 7
        %s246 = smul.addr %s243, 8
        %s247 = sadd.s32 %s245, %s246
        %s248 = smul.addr %s247, 8
        %s249 = scalar_lea.vmem %s0, %s248
        %p250 = pneg %p53
        %p251 = pneg %p50
        %p252 = scmp.lt.s32.totalorder %s22, 1
        %s253 = scalar_select %p252, %s22, 1
        %s254 = smul.addr %s253, 64
        %s255 = smul.addr %s254, 8
        %s256 = scalar_lea.vmem %s1, %s255
        %p257 = pneg %p79
        %p258 = pneg %p76
        %s259 = sand.u32 %s92, 1
        %s260 = scalar_lea.sflag [#allocation5], %s259
        %s261 = sand.u32 %s92, 1
        %s262 = smul.addr %s261, 512
        %s263 = scalar_lea.vmem [#allocation4], %s262
        %p264 = pneg %p105
        %p265 = pneg %p102
        %p266 = scmp.lt.s32.totalorder %s22, 1
        %s267 = scalar_select %p266, %s22, 1
        %s268 = smul.addr %s267, 4
        %s269 = scalar_lea.vmem %s3, %s268
        %p270 = pneg %p131
        %p271 = pneg %p128
        %p272 = pneg %p157
        %p273 = pneg %p154
        %p274 = scmp.lt.s32.totalorder %s22, 1
        %s275 = scalar_select %p274, %s22, 1
        %s276 = smul.addr %s275, 8
        %s277 = scalar_lea.vmem %s4, %s276
        %s278 = smul.u32 4, %s23
        %p279 = scmp.lt.s32.totalorder %s22, 1
        %s280 = scalar_select %p279, %s22, 1
        %p281 = scmp.lt.s32.totalorder %s278, 7
        %s282 = scalar_select %p281, %s278, 7
        %s283 = smul.addr %s280, 8
        %s284 = sadd.s32 %s282, %s283
        %s285 = smul.addr %s284, 8
        %s286 = scalar_lea.vmem %s0, %s285
        %s287 = smul.u32 4, %s23
        %p288 = scmp.lt.s32.totalorder %s22, 1
        %s289 = scalar_select %p288, %s22, 1
        %s290 = smul.addr %s289, 64
        %s291 = smul.addr %s290, 8
        %s292 = scalar_lea.vmem %s1, %s291
        %p293 = scmp.lt.s32.totalorder %s22, 1
        %s294 = scalar_select %p293, %s22, 1
        %s295 = smul.addr %s294, 4
        %s296 = scalar_lea.vmem %s3, %s295
        %p297 = scmp.lt.s32.totalorder %s22, 1
        %s298 = scalar_select %p297, %s22, 1
        %s299 = smul.addr %s298, 8
        %s300 = scalar_lea.vmem %s4, %s299
        %p302 = scmp.eq.s32.totalorder %s23, 0
        // Predicated region
        $region41: #{joint_embeder_forward.5} parent=35 // pred_check
          %p303 = pneg %p302
        $region42: #{joint_embeder_forward.5} parent=35 // pred_check_branch
          %305 = sbr.rel (%p303) target = $region44
        $region43: #{joint_embeder_forward.5} parent=35 // pred_region
          %306 = vst [vmem:[#allocation2] sm:$0xff] 0.0
          %307 = vst [vmem:[#allocation3] sm:$0xff] 0.0
        $region44: #{joint_embeder_forward.5} parent=35 // pred_fallthru
          _
        %v308 = vld [vmem:[%s286] sm:$0xff]
        %v309 = vld [vmem:[%s286 + $0x8] sm:$0xff]
        %v310 = vld [vmem:[%s286 + $0x10] sm:$0xff]
        %v311 = vld [vmem:[%s286 + $0x18] sm:$0xff]
        %v312 = vpack.c.bf16 %v309, %v308
        %v313 = vpack.c.bf16 %v311, %v310
        %v314 = vld [vmem:[%s292] sm:$0xff]
        %v315 = vld [vmem:[%s292 + $0x8] sm:$0xff]
        %v316 = vld [vmem:[%s292 + $0x10] sm:$0xff]
        %v317 = vld [vmem:[%s292 + $0x18] sm:$0xff]
        %v318 = vld [vmem:[%s292 + $0x20] sm:$0xff]
        %v319 = vld [vmem:[%s292 + $0x28] sm:$0xff]
        %v320 = vld [vmem:[%s292 + $0x30] sm:$0xff]
        %v321 = vld [vmem:[%s292 + $0x38] sm:$0xff]
        %v322 = vld [vmem:[%s292 + $0x40] sm:$0xff]
        %v323 = vld [vmem:[%s292 + $0x48] sm:$0xff]
        %v324 = vld [vmem:[%s292 + $0x50] sm:$0xff]
        %v325 = vld [vmem:[%s292 + $0x58] sm:$0xff]
        %v326 = vld [vmem:[%s292 + $0x60] sm:$0xff]
        %v327 = vld [vmem:[%s292 + $0x68] sm:$0xff]
        %v328 = vld [vmem:[%s292 + $0x70] sm:$0xff]
        %v329 = vld [vmem:[%s292 + $0x78] sm:$0xff]
        %v330 = vld [vmem:[%s292 + $0x80] sm:$0xff]
        %v331 = vld [vmem:[%s292 + $0x88] sm:$0xff]
        %v332 = vld [vmem:[%s292 + $0x90] sm:$0xff]
        %v333 = vld [vmem:[%s292 + $0x98] sm:$0xff]
        %v334 = vld [vmem:[%s292 + $0xa0] sm:$0xff]
        %v335 = vld [vmem:[%s292 + $0xa8] sm:$0xff]
        %v336 = vld [vmem:[%s292 + $0xb0] sm:$0xff]
        %v337 = vld [vmem:[%s292 + $0xb8] sm:$0xff]
        %v338 = vld [vmem:[%s292 + $0xc0] sm:$0xff]
        %v339 = vld [vmem:[%s292 + $0xc8] sm:$0xff]
        %v340 = vld [vmem:[%s292 + $0xd0] sm:$0xff]
        %v341 = vld [vmem:[%s292 + $0xd8] sm:$0xff]
        %v342 = vld [vmem:[%s292 + $0xe0] sm:$0xff]
        %v343 = vld [vmem:[%s292 + $0xe8] sm:$0xff]
        %v344 = vld [vmem:[%s292 + $0xf0] sm:$0xff]
        %v345 = vld [vmem:[%s292 + $0xf8] sm:$0xff]
        %v346 = vld [vmem:[%s292 + $0x100] sm:$0xff]
        %v347 = vld [vmem:[%s292 + $0x108] sm:$0xff]
        %v348 = vld [vmem:[%s292 + $0x110] sm:$0xff]
        %v349 = vld [vmem:[%s292 + $0x118] sm:$0xff]
        %v350 = vld [vmem:[%s292 + $0x120] sm:$0xff]
        %v351 = vld [vmem:[%s292 + $0x128] sm:$0xff]
        %v352 = vld [vmem:[%s292 + $0x130] sm:$0xff]
        %v353 = vld [vmem:[%s292 + $0x138] sm:$0xff]
        %v354 = vld [vmem:[%s292 + $0x140] sm:$0xff]
        %v355 = vld [vmem:[%s292 + $0x148] sm:$0xff]
        %v356 = vld [vmem:[%s292 + $0x150] sm:$0xff]
        %v357 = vld [vmem:[%s292 + $0x158] sm:$0xff]
        %v358 = vld [vmem:[%s292 + $0x160] sm:$0xff]
        %v359 = vld [vmem:[%s292 + $0x168] sm:$0xff]
        %v360 = vld [vmem:[%s292 + $0x170] sm:$0xff]
        %v361 = vld [vmem:[%s292 + $0x178] sm:$0xff]
        %v362 = vld [vmem:[%s292 + $0x180] sm:$0xff]
        %v363 = vld [vmem:[%s292 + $0x188] sm:$0xff]
        %v364 = vld [vmem:[%s292 + $0x190] sm:$0xff]
        %v365 = vld [vmem:[%s292 + $0x198] sm:$0xff]
        %v366 = vld [vmem:[%s292 + $0x1a0] sm:$0xff]
        %v367 = vld [vmem:[%s292 + $0x1a8] sm:$0xff]
        %v368 = vld [vmem:[%s292 + $0x1b0] sm:$0xff]
        %v369 = vld [vmem:[%s292 + $0x1b8] sm:$0xff]
        %v370 = vld [vmem:[%s292 + $0x1c0] sm:$0xff]
        %v371 = vld [vmem:[%s292 + $0x1c8] sm:$0xff]
        %v372 = vld [vmem:[%s292 + $0x1d0] sm:$0xff]
        %v373 = vld [vmem:[%s292 + $0x1d8] sm:$0xff]
        %v374 = vld [vmem:[%s292 + $0x1e0] sm:$0xff]
        %v375 = vld [vmem:[%s292 + $0x1e8] sm:$0xff]
        %v376 = vld [vmem:[%s292 + $0x1f0] sm:$0xff]
        %v377 = vld [vmem:[%s292 + $0x1f8] sm:$0xff]
        %v378 = vpack.c.bf16 %v318, %v314
        %v379 = vpack.c.bf16 %v319, %v315
        %v380 = vpack.c.bf16 %v320, %v316
        %v381 = vpack.c.bf16 %v321, %v317
        %v382 = vpack.c.bf16 %v326, %v322
        %v383 = vpack.c.bf16 %v327, %v323
        %v384 = vpack.c.bf16 %v328, %v324
        %v385 = vpack.c.bf16 %v329, %v325
        %v386 = vpack.c.bf16 %v334, %v330
        %v387 = vpack.c.bf16 %v335, %v331
        %v388 = vpack.c.bf16 %v336, %v332
        %v389 = vpack.c.bf16 %v337, %v333
        %v390 = vpack.c.bf16 %v342, %v338
        %v391 = vpack.c.bf16 %v343, %v339
        %v392 = vpack.c.bf16 %v344, %v340
        %v393 = vpack.c.bf16 %v345, %v341
        %v394 = vpack.c.bf16 %v350, %v346
        %v395 = vpack.c.bf16 %v351, %v347
        %v396 = vpack.c.bf16 %v352, %v348
        %v397 = vpack.c.bf16 %v353, %v349
        %v398 = vpack.c.bf16 %v358, %v354
        %v399 = vpack.c.bf16 %v359, %v355
        %v400 = vpack.c.bf16 %v360, %v356
        %v401 = vpack.c.bf16 %v361, %v357
        %v402 = vpack.c.bf16 %v366, %v362
        %v403 = vpack.c.bf16 %v367, %v363
        %v404 = vpack.c.bf16 %v368, %v364
        %v405 = vpack.c.bf16 %v369, %v365
        %v406 = vpack.c.bf16 %v374, %v370
        %v407 = vpack.c.bf16 %v375, %v371
        %v408 = vpack.c.bf16 %v376, %v372
        %v409 = vpack.c.bf16 %v377, %v373
        %v410 = vld [vmem:[%s296] sm:$0xf]
        %v412 = vlaneseq
        %v413 = vshrl.u32 %v412, 7
        %v414 = vsub.s32 0, %v413
        %v415 = vrot.slane %v410, %v414
        %v416 = vlaneseq
        %v417 = vshrl.u32 %v416, 7
        %v418 = vsub.s32 1, %v417
        %v419 = vrot.slane %v410, %v418
        %v420 = vlaneseq
        %v421 = vshrl.u32 %v420, 7
        %v422 = vsub.s32 2, %v421
        %v423 = vrot.slane %v410, %v422
        %v424 = vlaneseq
        %v425 = vshrl.u32 %v424, 7
        %v426 = vsub.s32 3, %v425
        %v427 = vrot.slane %v410, %v426
        %432 = vmatprep.subr.bf16.mxu0 %v379
        %433 = vmatpush1.bf16.msra.mxu0 %v378
        %434 = vmatprep.subr.bf16.mxu0 %v383
        %435 = vmatpush1.bf16.msra.mxu0 %v382
        %436 = vmatprep.subr.bf16.mxu0 %v387
        %437 = vmatpush1.bf16.msra.mxu0 %v386
        %438 = vmatprep.subr.bf16.mxu0 %v391
        %439 = vmatpush1.bf16.msra.mxu0 %v390
        %440 = vmatprep.subr.bf16.mxu0 %v395
        %441 = vmatpush1.bf16.msra.mxu0 %v394
        %442 = vmatprep.subr.bf16.mxu0 %v399
        %443 = vmatpush1.bf16.msra.mxu0 %v398
        %444 = vmatprep.subr.bf16.mxu0 %v403
        %445 = vmatpush1.bf16.msra.mxu0 %v402
        %446 = vmatprep.subr.bf16.mxu0 %v407
        %447 = vmatpush1.bf16.msra.mxu0 %v406
        %448 = vmatprep.subr.bf16.mxu0 0
        %449 = vmatpush1.bf16.msra.mxu0 0
        %450 = vmatprep.subr.bf16.mxu0 0
        %451 = vmatpush1.bf16.msra.mxu0 0
        %452 = vmatprep.subr.bf16.mxu0 0
        %453 = vmatpush1.bf16.msra.mxu0 0
        %454 = vmatprep.subr.bf16.mxu0 0
        %455 = vmatpush1.bf16.msra.mxu0 0
        %456 = vmatprep.subr.bf16.mxu0 0
        %457 = vmatpush1.bf16.msra.mxu0 0
        %458 = vmatprep.subr.bf16.mxu0 0
        %459 = vmatpush1.bf16.msra.mxu0 0
        %460 = vmatprep.subr.bf16.mxu0 0
        %461 = vmatpush1.bf16.msra.mxu0 0
        %462 = vmatprep.subr.bf16.mxu0 0
        %463 = vmatpush1.bf16.msra.mxu0 0
        %464 = vmatprep.mubr.bf16.mxu0 0
        %465 = vmatmul.mubr.bf16.gmra.mrb[0].mxu0 %v312
        %v466 = vpop.f32.mrb[0].mxu0
        %v467 = vadd.f32 %v415, %v466
        %v468 = vpop.f32.mrb[0].mxu0
        %v469 = vadd.f32 %v419, %v468
        %v470 = vpop.f32.mrb[0].mxu0
        %v471 = vadd.f32 %v415, %v470
        %v472 = vpop.f32.mrb[0].mxu0
        %v473 = vadd.f32 %v419, %v472
        %474 = vmatprep.mubr.bf16.mxu0 0
        %475 = vmatmul.mubr.bf16.gmra.mrb[0].mxu0 %v313
        %v476 = vpop.f32.mrb[0].mxu0
        %v477 = vadd.f32 %v415, %v476
        %v478 = vpop.f32.mrb[0].mxu0
        %v479 = vadd.f32 %v419, %v478
        %v480 = vpop.f32.mrb[0].mxu0
        %v481 = vadd.f32 %v415, %v480
        %v482 = vpop.f32.mrb[0].mxu0
        %v483 = vadd.f32 %v419, %v482
        %484 = vdwg.mxu0
        %485 = vmatprep.subr.bf16.mxu0 %v381
        %486 = vmatpush1.bf16.msra.mxu0 %v380
        %487 = vmatprep.subr.bf16.mxu0 %v385
        %488 = vmatpush1.bf16.msra.mxu0 %v384
        %489 = vmatprep.subr.bf16.mxu0 %v389
        %490 = vmatpush1.bf16.msra.mxu0 %v388
        %491 = vmatprep.subr.bf16.mxu0 %v393
        %492 = vmatpush1.bf16.msra.mxu0 %v392
        %493 = vmatprep.subr.bf16.mxu0 %v397
        %494 = vmatpush1.bf16.msra.mxu0 %v396
        %495 = vmatprep.subr.bf16.mxu0 %v401
        %496 = vmatpush1.bf16.msra.mxu0 %v400
        %497 = vmatprep.subr.bf16.mxu0 %v405
        %498 = vmatpush1.bf16.msra.mxu0 %v404
        %499 = vmatprep.subr.bf16.mxu0 %v409
        %500 = vmatpush1.bf16.msra.mxu0 %v408
        %501 = vmatprep.subr.bf16.mxu0 0
        %502 = vmatpush1.bf16.msra.mxu0 0
        %503 = vmatprep.subr.bf16.mxu0 0
        %504 = vmatpush1.bf16.msra.mxu0 0
        %505 = vmatprep.subr.bf16.mxu0 0
        %506 = vmatpush1.bf16.msra.mxu0 0
        %507 = vmatprep.subr.bf16.mxu0 0
        %508 = vmatpush1.bf16.msra.mxu0 0
        %509 = vmatprep.subr.bf16.mxu0 0
        %510 = vmatpush1.bf16.msra.mxu0 0
        %511 = vmatprep.subr.bf16.mxu0 0
        %512 = vmatpush1.bf16.msra.mxu0 0
        %513 = vmatprep.subr.bf16.mxu0 0
        %514 = vmatpush1.bf16.msra.mxu0 0
        %515 = vmatprep.subr.bf16.mxu0 0
        %516 = vmatpush1.bf16.msra.mxu0 0
        %517 = vmatprep.mubr.bf16.mxu0 0
        %518 = vmatmul.mubr.bf16.gmra.mrb[0].mxu0 %v312
        %v519 = vpop.f32.mrb[0].mxu0
        %v520 = vadd.f32 %v423, %v519
        %v521 = vpop.f32.mrb[0].mxu0
        %v522 = vadd.f32 %v427, %v521
        %v523 = vpop.f32.mrb[0].mxu0
        %v524 = vadd.f32 %v423, %v523
        %v525 = vpop.f32.mrb[0].mxu0
        %v526 = vadd.f32 %v427, %v525
        %527 = vmatprep.mubr.bf16.mxu0 0
        %528 = vmatmul.mubr.bf16.gmra.mrb[0].mxu0 %v313
        %v529 = vpop.f32.mrb[0].mxu0
        %v530 = vadd.f32 %v423, %v529
        %v531 = vpop.f32.mrb[0].mxu0
        %v532 = vadd.f32 %v427, %v531
        %v533 = vpop.f32.mrb[0].mxu0
        %v534 = vadd.f32 %v423, %v533
        %v535 = vpop.f32.mrb[0].mxu0
        %v536 = vadd.f32 %v427, %v535
        %537 = vdwg.mxu0
        %v538 = vld [vmem:[%s236] sm:$0xff]
        %v539 = vld [vmem:[%s236 + $0x8] sm:$0xff]
        %v540 = vld [vmem:[%s236 + $0x10] sm:$0xff]
        %v541 = vld [vmem:[%s236 + $0x18] sm:$0xff]
        %v542 = vld [vmem:[%s236 + $0x20] sm:$0xff]
        %v543 = vld [vmem:[%s236 + $0x28] sm:$0xff]
        %v544 = vld [vmem:[%s236 + $0x30] sm:$0xff]
        %v545 = vld [vmem:[%s236 + $0x38] sm:$0xff]
        %v546 = vld [vmem:[%s236 + $0x40] sm:$0xff]
        %v547 = vld [vmem:[%s236 + $0x48] sm:$0xff]
        %v548 = vld [vmem:[%s236 + $0x50] sm:$0xff]
        %v549 = vld [vmem:[%s236 + $0x58] sm:$0xff]
        %v550 = vld [vmem:[%s236 + $0x60] sm:$0xff]
        %v551 = vld [vmem:[%s236 + $0x68] sm:$0xff]
        %v552 = vld [vmem:[%s236 + $0x70] sm:$0xff]
        %v553 = vld [vmem:[%s236 + $0x78] sm:$0xff]
        %v554 = vld [vmem:[%s236 + $0x80] sm:$0xff]
        %v555 = vld [vmem:[%s236 + $0x88] sm:$0xff]
        %v556 = vld [vmem:[%s236 + $0x90] sm:$0xff]
        %v557 = vld [vmem:[%s236 + $0x98] sm:$0xff]
        %v558 = vld [vmem:[%s236 + $0xa0] sm:$0xff]
        %v559 = vld [vmem:[%s236 + $0xa8] sm:$0xff]
        %v560 = vld [vmem:[%s236 + $0xb0] sm:$0xff]
        %v561 = vld [vmem:[%s236 + $0xb8] sm:$0xff]
        %v562 = vld [vmem:[%s236 + $0xc0] sm:$0xff]
        %v563 = vld [vmem:[%s236 + $0xc8] sm:$0xff]
        %v564 = vld [vmem:[%s236 + $0xd0] sm:$0xff]
        %v565 = vld [vmem:[%s236 + $0xd8] sm:$0xff]
        %v566 = vld [vmem:[%s236 + $0xe0] sm:$0xff]
        %v567 = vld [vmem:[%s236 + $0xe8] sm:$0xff]
        %v568 = vld [vmem:[%s236 + $0xf0] sm:$0xff]
        %v569 = vld [vmem:[%s236 + $0xf8] sm:$0xff]
        %v570 = vld [vmem:[%s236 + $0x100] sm:$0xff]
        %v571 = vld [vmem:[%s236 + $0x108] sm:$0xff]
        %v572 = vld [vmem:[%s236 + $0x110] sm:$0xff]
        %v573 = vld [vmem:[%s236 + $0x118] sm:$0xff]
        %v574 = vld [vmem:[%s236 + $0x120] sm:$0xff]
        %v575 = vld [vmem:[%s236 + $0x128] sm:$0xff]
        %v576 = vld [vmem:[%s236 + $0x130] sm:$0xff]
        %v577 = vld [vmem:[%s236 + $0x138] sm:$0xff]
        %v578 = vld [vmem:[%s236 + $0x140] sm:$0xff]
        %v579 = vld [vmem:[%s236 + $0x148] sm:$0xff]
        %v580 = vld [vmem:[%s236 + $0x150] sm:$0xff]
        %v581 = vld [vmem:[%s236 + $0x158] sm:$0xff]
        %v582 = vld [vmem:[%s236 + $0x160] sm:$0xff]
        %v583 = vld [vmem:[%s236 + $0x168] sm:$0xff]
        %v584 = vld [vmem:[%s236 + $0x170] sm:$0xff]
        %v585 = vld [vmem:[%s236 + $0x178] sm:$0xff]
        %v586 = vld [vmem:[%s236 + $0x180] sm:$0xff]
        %v587 = vld [vmem:[%s236 + $0x188] sm:$0xff]
        %v588 = vld [vmem:[%s236 + $0x190] sm:$0xff]
        %v589 = vld [vmem:[%s236 + $0x198] sm:$0xff]
        %v590 = vld [vmem:[%s236 + $0x1a0] sm:$0xff]
        %v591 = vld [vmem:[%s236 + $0x1a8] sm:$0xff]
        %v592 = vld [vmem:[%s236 + $0x1b0] sm:$0xff]
        %v593 = vld [vmem:[%s236 + $0x1b8] sm:$0xff]
        %v594 = vld [vmem:[%s236 + $0x1c0] sm:$0xff]
        %v595 = vld [vmem:[%s236 + $0x1c8] sm:$0xff]
        %v596 = vld [vmem:[%s236 + $0x1d0] sm:$0xff]
        %v597 = vld [vmem:[%s236 + $0x1d8] sm:$0xff]
        %v598 = vld [vmem:[%s236 + $0x1e0] sm:$0xff]
        %v599 = vld [vmem:[%s236 + $0x1e8] sm:$0xff]
        %v600 = vld [vmem:[%s236 + $0x1f0] sm:$0xff]
        %v601 = vld [vmem:[%s236 + $0x1f8] sm:$0xff]
        %v602 = vpack.c.bf16 %v542, %v538
        %v603 = vpack.c.bf16 %v543, %v539
        %v604 = vpack.c.bf16 %v544, %v540
        %v605 = vpack.c.bf16 %v545, %v541
        %v606 = vpack.c.bf16 %v550, %v546
        %v607 = vpack.c.bf16 %v551, %v547
        %v608 = vpack.c.bf16 %v552, %v548
        %v609 = vpack.c.bf16 %v553, %v549
        %v610 = vpack.c.bf16 %v558, %v554
        %v611 = vpack.c.bf16 %v559, %v555
        %v612 = vpack.c.bf16 %v560, %v556
        %v613 = vpack.c.bf16 %v561, %v557
        %v614 = vpack.c.bf16 %v566, %v562
        %v615 = vpack.c.bf16 %v567, %v563
        %v616 = vpack.c.bf16 %v568, %v564
        %v617 = vpack.c.bf16 %v569, %v565
        %v618 = vpack.c.bf16 %v574, %v570
        %v619 = vpack.c.bf16 %v575, %v571
        %v620 = vpack.c.bf16 %v576, %v572
        %v621 = vpack.c.bf16 %v577, %v573
        %v622 = vpack.c.bf16 %v582, %v578
        %v623 = vpack.c.bf16 %v583, %v579
        %v624 = vpack.c.bf16 %v584, %v580
        %v625 = vpack.c.bf16 %v585, %v581
        %v626 = vpack.c.bf16 %v590, %v586
        %v627 = vpack.c.bf16 %v591, %v587
        %v628 = vpack.c.bf16 %v592, %v588
        %v629 = vpack.c.bf16 %v593, %v589
        %v630 = vpack.c.bf16 %v598, %v594
        %v631 = vpack.c.bf16 %v599, %v595
        %v632 = vpack.c.bf16 %v600, %v596
        %v633 = vpack.c.bf16 %v601, %v597
        %v634 = vld [vmem:[#allocation2] sm:$0xff]
        %v635 = vld [vmem:[#allocation3] sm:$0xff]
        %v636 = vpack.c.bf16 %v634, %v634
        %637 = vmatprep.subr.bf16.mxu0 %v603
        %638 = vmatpush1.bf16.msra.mxu0 %v602
        %639 = vmatprep.subr.bf16.mxu0 %v607
        %640 = vmatpush1.bf16.msra.mxu0 %v606
        %641 = vmatprep.subr.bf16.mxu0 %v611
        %642 = vmatpush1.bf16.msra.mxu0 %v610
        %643 = vmatprep.subr.bf16.mxu0 %v615
        %644 = vmatpush1.bf16.msra.mxu0 %v614
        %645 = vmatprep.subr.bf16.mxu0 %v619
        %646 = vmatpush1.bf16.msra.mxu0 %v618
        %647 = vmatprep.subr.bf16.mxu0 %v623
        %648 = vmatpush1.bf16.msra.mxu0 %v622
        %649 = vmatprep.subr.bf16.mxu0 %v627
        %650 = vmatpush1.bf16.msra.mxu0 %v626
        %651 = vmatprep.subr.bf16.mxu0 %v631
        %652 = vmatpush1.bf16.msra.mxu0 %v630
        %653 = vmatprep.subr.bf16.mxu0 0
        %654 = vmatpush1.bf16.msra.mxu0 0
        %655 = vmatprep.subr.bf16.mxu0 0
        %656 = vmatpush1.bf16.msra.mxu0 0
        %657 = vmatprep.subr.bf16.mxu0 0
        %658 = vmatpush1.bf16.msra.mxu0 0
        %659 = vmatprep.subr.bf16.mxu0 0
        %660 = vmatpush1.bf16.msra.mxu0 0
        %661 = vmatprep.subr.bf16.mxu0 0
        %662 = vmatpush1.bf16.msra.mxu0 0
        %663 = vmatprep.subr.bf16.mxu0 0
        %664 = vmatpush1.bf16.msra.mxu0 0
        %665 = vmatprep.subr.bf16.mxu0 0
        %666 = vmatpush1.bf16.msra.mxu0 0
        %667 = vmatprep.subr.bf16.mxu0 0
        %668 = vmatpush1.bf16.msra.mxu0 0
        %669 = vmatprep.mubr.bf16.mxu0 0
        %670 = vmatmul.mubr.bf16.gmra.mrb[0].mxu0 %v636
        %v671 = vpop.f32.mrb[0].mxu0
        %v672 = vadd.f32 0.0, %v671
        %v673 = vpop.f32.mrb[0].mxu0
        %v674 = vadd.f32 0.0, %v673
        %v675 = vpop.f32.mrb[0].mxu0
        %v676 = vpop.f32.mrb[0].mxu0
        %677 = vdwg.mxu0
        %678 = vmatprep.subr.bf16.mxu0 %v605
        %679 = vmatpush1.bf16.msra.mxu0 %v604
        %680 = vmatprep.subr.bf16.mxu0 %v609
        %681 = vmatpush1.bf16.msra.mxu0 %v608
        %682 = vmatprep.subr.bf16.mxu0 %v613
        %683 = vmatpush1.bf16.msra.mxu0 %v612
        %684 = vmatprep.subr.bf16.mxu0 %v617
        %685 = vmatpush1.bf16.msra.mxu0 %v616
        %686 = vmatprep.subr.bf16.mxu0 %v621
        %687 = vmatpush1.bf16.msra.mxu0 %v620
        %688 = vmatprep.subr.bf16.mxu0 %v625
        %689 = vmatpush1.bf16.msra.mxu0 %v624
        %690 = vmatprep.subr.bf16.mxu0 %v629
        %691 = vmatpush1.bf16.msra.mxu0 %v628
        %692 = vmatprep.subr.bf16.mxu0 %v633
        %693 = vmatpush1.bf16.msra.mxu0 %v632
        %694 = vmatprep.subr.bf16.mxu0 0
        %695 = vmatpush1.bf16.msra.mxu0 0
        %696 = vmatprep.subr.bf16.mxu0 0
        %697 = vmatpush1.bf16.msra.mxu0 0
        %698 = vmatprep.subr.bf16.mxu0 0
        %699 = vmatpush1.bf16.msra.mxu0 0
        %700 = vmatprep.subr.bf16.mxu0 0
        %701 = vmatpush1.bf16.msra.mxu0 0
        %702 = vmatprep.subr.bf16.mxu0 0
        %703 = vmatpush1.bf16.msra.mxu0 0
        %704 = vmatprep.subr.bf16.mxu0 0
        %705 = vmatpush1.bf16.msra.mxu0 0
        %706 = vmatprep.subr.bf16.mxu0 0
        %707 = vmatpush1.bf16.msra.mxu0 0
        %708 = vmatprep.subr.bf16.mxu0 0
        %709 = vmatpush1.bf16.msra.mxu0 0
        %710 = vmatprep.mubr.bf16.mxu0 0
        %711 = vmatmul.mubr.bf16.gmra.mrb[0].mxu0 %v636
        %v712 = vpop.f32.mrb[0].mxu0
        %v713 = vadd.f32 0.0, %v712
        %v714 = vpop.f32.mrb[0].mxu0
        %v715 = vadd.f32 0.0, %v714
        %v716 = vpop.f32.mrb[0].mxu0
        %v717 = vpop.f32.mrb[0].mxu0
        %718 = vdwg.mxu0
        %v719 = vadd.f32 %v467, %v672
        %v720 = vadd.f32 %v469, %v674
        %v721 = vadd.f32 %v520, %v713
        %v722 = vadd.f32 %v522, %v715
        %v723 = vxor.u32 %v719, 2147483648
        %v724 = vxor.u32 %v720, 2147483648
        %v725 = vxor.u32 %v721, 2147483648
        %v726 = vmul.f32 %v723, 1.442695
        %v727 = vpow.pop %v726
        %v728 = vmul.f32 %v724, 1.442695
        %v729 = vpow.pop %v728
        %v730 = vmul.f32 %v725, 1.442695
        %v731 = vpow.pop %v730
        %v732 = vadd.f32 %v727, 1.0
        %v733 = vadd.f32 %v729, 1.0
        %v734 = vadd.f32 %v731, 1.0
        %v735 = vrcp.pop %v732
        %v736 = vmul.f32 1.0, %v735
        %v737 = vrcp.pop %v733
        %v738 = vmul.f32 1.0, %v737
        %v739 = vrcp.pop %v734
        %v740 = vmul.f32 1.0, %v739
        %v741 = vtanh.pop %v722
        %v742 = vmul.f32 %v738, %v635
        %v743 = vmul.f32 %v736, %v741
        %v744 = vadd.f32 %v742, %v743
        %v745 = vtanh.pop %v744
        %v746 = vmul.f32 %v740, %v745
        %v747 = vpack.c.bf16 %v746, %v746
        %748 = vmatprep.subr.bf16.mxu0 %v603
        %749 = vmatpush1.bf16.msra.mxu0 %v602
        %750 = vmatprep.subr.bf16.mxu0 %v607
        %751 = vmatpush1.bf16.msra.mxu0 %v606
        %752 = vmatprep.subr.bf16.mxu0 %v611
        %753 = vmatpush1.bf16.msra.mxu0 %v610
        %754 = vmatprep.subr.bf16.mxu0 %v615
        %755 = vmatpush1.bf16.msra.mxu0 %v614
        %756 = vmatprep.subr.bf16.mxu0 %v619
        %757 = vmatpush1.bf16.msra.mxu0 %v618
        %758 = vmatprep.subr.bf16.mxu0 %v623
        %759 = vmatpush1.bf16.msra.mxu0 %v622
        %760 = vmatprep.subr.bf16.mxu0 %v627
        %761 = vmatpush1.bf16.msra.mxu0 %v626
        %762 = vmatprep.subr.bf16.mxu0 %v631
        %763 = vmatpush1.bf16.msra.mxu0 %v630
        %764 = vmatprep.subr.bf16.mxu0 0
        %765 = vmatpush1.bf16.msra.mxu0 0
        %766 = vmatprep.subr.bf16.mxu0 0
        %767 = vmatpush1.bf16.msra.mxu0 0
        %768 = vmatprep.subr.bf16.mxu0 0
        %769 = vmatpush1.bf16.msra.mxu0 0
        %770 = vmatprep.subr.bf16.mxu0 0
        %771 = vmatpush1.bf16.msra.mxu0 0
        %772 = vmatprep.subr.bf16.mxu0 0
        %773 = vmatpush1.bf16.msra.mxu0 0
        %774 = vmatprep.subr.bf16.mxu0 0
        %775 = vmatpush1.bf16.msra.mxu0 0
        %776 = vmatprep.subr.bf16.mxu0 0
        %777 = vmatpush1.bf16.msra.mxu0 0
        %778 = vmatprep.subr.bf16.mxu0 0
        %779 = vmatpush1.bf16.msra.mxu0 0
        %780 = vmatprep.mubr.bf16.mxu0 0
        %781 = vmatmul.mubr.bf16.gmra.mrb[0].mxu0 %v747
        %v782 = vpop.f32.mrb[0].mxu0
        %v783 = vadd.f32 0.0, %v782
        %v784 = vpop.f32.mrb[0].mxu0
        %v785 = vadd.f32 0.0, %v784
        %v786 = vpop.f32.mrb[0].mxu0
        %v787 = vpop.f32.mrb[0].mxu0
        %788 = vdwg.mxu0
        %789 = vmatprep.subr.bf16.mxu0 %v605
        %790 = vmatpush1.bf16.msra.mxu0 %v604
        %791 = vmatprep.subr.bf16.mxu0 %v609
        %792 = vmatpush1.bf16.msra.mxu0 %v608
        %793 = vmatprep.subr.bf16.mxu0 %v613
        %794 = vmatpush1.bf16.msra.mxu0 %v612
        %795 = vmatprep.subr.bf16.mxu0 %v617
        %796 = vmatpush1.bf16.msra.mxu0 %v616
        %797 = vmatprep.subr.bf16.mxu0 %v621
        %798 = vmatpush1.bf16.msra.mxu0 %v620
        %799 = vmatprep.subr.bf16.mxu0 %v625
        %800 = vmatpush1.bf16.msra.mxu0 %v624
        %801 = vmatprep.subr.bf16.mxu0 %v629
        %802 = vmatpush1.bf16.msra.mxu0 %v628
        %803 = vmatprep.subr.bf16.mxu0 %v633
        %804 = vmatpush1.bf16.msra.mxu0 %v632
        %805 = vmatprep.subr.bf16.mxu0 0
        %806 = vmatpush1.bf16.msra.mxu0 0
        %807 = vmatprep.subr.bf16.mxu0 0
        %808 = vmatpush1.bf16.msra.mxu0 0
        %809 = vmatprep.subr.bf16.mxu0 0
        %810 = vmatpush1.bf16.msra.mxu0 0
        %811 = vmatprep.subr.bf16.mxu0 0
        %812 = vmatpush1.bf16.msra.mxu0 0
        %813 = vmatprep.subr.bf16.mxu0 0
        %814 = vmatpush1.bf16.msra.mxu0 0
        %815 = vmatprep.subr.bf16.mxu0 0
        %816 = vmatpush1.bf16.msra.mxu0 0
        %817 = vmatprep.subr.bf16.mxu0 0
        %818 = vmatpush1.bf16.msra.mxu0 0
        %819 = vmatprep.subr.bf16.mxu0 0
        %820 = vmatpush1.bf16.msra.mxu0 0
        %821 = vmatprep.mubr.bf16.mxu0 0
        %822 = vmatmul.mubr.bf16.gmra.mrb[0].mxu0 %v747
        %v823 = vpop.f32.mrb[0].mxu0
        %v824 = vadd.f32 0.0, %v823
        %v825 = vpop.f32.mrb[0].mxu0
        %v826 = vadd.f32 0.0, %v825
        %v827 = vpop.f32.mrb[0].mxu0
        %v828 = vpop.f32.mrb[0].mxu0
        %829 = vdwg.mxu0
        %v830 = vadd.f32 %v471, %v783
        %v831 = vadd.f32 %v473, %v785
        %v832 = vadd.f32 %v524, %v824
        %v833 = vadd.f32 %v526, %v826
        %v834 = vxor.u32 %v830, 2147483648
        %v835 = vxor.u32 %v831, 2147483648
        %v836 = vxor.u32 %v832, 2147483648
        %v837 = vmul.f32 %v834, 1.442695
        %v838 = vpow.pop %v837
        %v839 = vmul.f32 %v835, 1.442695
        %v840 = vpow.pop %v839
        %v841 = vmul.f32 %v836, 1.442695
        %v842 = vpow.pop %v841
        %v843 = vadd.f32 %v838, 1.0
        %v844 = vadd.f32 %v840, 1.0
        %v845 = vadd.f32 %v842, 1.0
        %v846 = vrcp.pop %v843
        %v847 = vmul.f32 1.0, %v846
        %v848 = vrcp.pop %v844
        %v849 = vmul.f32 1.0, %v848
        %v850 = vrcp.pop %v845
        %v851 = vmul.f32 1.0, %v850
        %v852 = vtanh.pop %v833
        %v853 = vmul.f32 %v849, %v744
        %v854 = vmul.f32 %v847, %v852
        %v855 = vadd.f32 %v853, %v854
        %v856 = vtanh.pop %v855
        %v857 = vmul.f32 %v851, %v856
        %v858 = vpack.c.bf16 %v857, %v857
        %859 = vmatprep.subr.bf16.mxu0 %v603
        %860 = vmatpush1.bf16.msra.mxu0 %v602
        %861 = vmatprep.subr.bf16.mxu0 %v607
        %862 = vmatpush1.bf16.msra.mxu0 %v606
        %863 = vmatprep.subr.bf16.mxu0 %v611
        %864 = vmatpush1.bf16.msra.mxu0 %v610
        %865 = vmatprep.subr.bf16.mxu0 %v615
        %866 = vmatpush1.bf16.msra.mxu0 %v614
        %867 = vmatprep.subr.bf16.mxu0 %v619
        %868 = vmatpush1.bf16.msra.mxu0 %v618
        %869 = vmatprep.subr.bf16.mxu0 %v623
        %870 = vmatpush1.bf16.msra.mxu0 %v622
        %871 = vmatprep.subr.bf16.mxu0 %v627
        %872 = vmatpush1.bf16.msra.mxu0 %v626
        %873 = vmatprep.subr.bf16.mxu0 %v631
        %874 = vmatpush1.bf16.msra.mxu0 %v630
        %875 = vmatprep.subr.bf16.mxu0 0
        %876 = vmatpush1.bf16.msra.mxu0 0
        %877 = vmatprep.subr.bf16.mxu0 0
        %878 = vmatpush1.bf16.msra.mxu0 0
        %879 = vmatprep.subr.bf16.mxu0 0
        %880 = vmatpush1.bf16.msra.mxu0 0
        %881 = vmatprep.subr.bf16.mxu0 0
        %882 = vmatpush1.bf16.msra.mxu0 0
        %883 = vmatprep.subr.bf16.mxu0 0
        %884 = vmatpush1.bf16.msra.mxu0 0
        %885 = vmatprep.subr.bf16.mxu0 0
        %886 = vmatpush1.bf16.msra.mxu0 0
        %887 = vmatprep.subr.bf16.mxu0 0
        %888 = vmatpush1.bf16.msra.mxu0 0
        %889 = vmatprep.subr.bf16.mxu0 0
        %890 = vmatpush1.bf16.msra.mxu0 0
        %891 = vmatprep.mubr.bf16.mxu0 0
        %892 = vmatmul.mubr.bf16.gmra.mrb[0].mxu0 %v858
        %v893 = vpop.f32.mrb[0].mxu0
        %v894 = vadd.f32 0.0, %v893
        %v895 = vpop.f32.mrb[0].mxu0
        %v896 = vadd.f32 0.0, %v895
        %v897 = vpop.f32.mrb[0].mxu0
        %v898 = vpop.f32.mrb[0].mxu0
        %899 = vdwg.mxu0
        %900 = vmatprep.subr.bf16.mxu0 %v605
        %901 = vmatpush1.bf16.msra.mxu0 %v604
        %902 = vmatprep.subr.bf16.mxu0 %v609
        %903 = vmatpush1.bf16.msra.mxu0 %v608
        %904 = vmatprep.subr.bf16.mxu0 %v613
        %905 = vmatpush1.bf16.msra.mxu0 %v612
        %906 = vmatprep.subr.bf16.mxu0 %v617
        %907 = vmatpush1.bf16.msra.mxu0 %v616
        %908 = vmatprep.subr.bf16.mxu0 %v621
        %909 = vmatpush1.bf16.msra.mxu0 %v620
        %910 = vmatprep.subr.bf16.mxu0 %v625
        %911 = vmatpush1.bf16.msra.mxu0 %v624
        %912 = vmatprep.subr.bf16.mxu0 %v629
        %913 = vmatpush1.bf16.msra.mxu0 %v628
        %914 = vmatprep.subr.bf16.mxu0 %v633
        %915 = vmatpush1.bf16.msra.mxu0 %v632
        %916 = vmatprep.subr.bf16.mxu0 0
        %917 = vmatpush1.bf16.msra.mxu0 0
        %918 = vmatprep.subr.bf16.mxu0 0
        %919 = vmatpush1.bf16.msra.mxu0 0
        %920 = vmatprep.subr.bf16.mxu0 0
        %921 = vmatpush1.bf16.msra.mxu0 0
        %922 = vmatprep.subr.bf16.mxu0 0
        %923 = vmatpush1.bf16.msra.mxu0 0
        %924 = vmatprep.subr.bf16.mxu0 0
        %925 = vmatpush1.bf16.msra.mxu0 0
        %926 = vmatprep.subr.bf16.mxu0 0
        %927 = vmatpush1.bf16.msra.mxu0 0
        %928 = vmatprep.subr.bf16.mxu0 0
        %929 = vmatpush1.bf16.msra.mxu0 0
        %930 = vmatprep.subr.bf16.mxu0 0
        %931 = vmatpush1.bf16.msra.mxu0 0
        %932 = vmatprep.mubr.bf16.mxu0 0
        %933 = vmatmul.mubr.bf16.gmra.mrb[0].mxu0 %v858
        %v934 = vpop.f32.mrb[0].mxu0
        %v935 = vadd.f32 0.0, %v934
        %v936 = vpop.f32.mrb[0].mxu0
        %v937 = vadd.f32 0.0, %v936
        %v938 = vpop.f32.mrb[0].mxu0
        %v939 = vpop.f32.mrb[0].mxu0
        %940 = vdwg.mxu0
        %v941 = vadd.f32 %v477, %v894
        %v942 = vadd.f32 %v479, %v896
        %v943 = vadd.f32 %v530, %v935
        %v944 = vadd.f32 %v532, %v937
        %v945 = vxor.u32 %v941, 2147483648
        %v946 = vxor.u32 %v942, 2147483648
        %v947 = vxor.u32 %v943, 2147483648
        %v948 = vmul.f32 %v945, 1.442695
        %v949 = vpow.pop %v948
        %v950 = vmul.f32 %v946, 1.442695
        %v951 = vpow.pop %v950
        %v952 = vmul.f32 %v947, 1.442695
        %v953 = vpow.pop %v952
        %v954 = vadd.f32 %v949, 1.0
        %v955 = vadd.f32 %v951, 1.0
        %v956 = vadd.f32 %v953, 1.0
        %v957 = vrcp.pop %v954
        %v958 = vmul.f32 1.0, %v957
        %v959 = vrcp.pop %v955
        %v960 = vmul.f32 1.0, %v959
        %v961 = vrcp.pop %v956
        %v962 = vmul.f32 1.0, %v961
        %v963 = vtanh.pop %v944
        %v964 = vmul.f32 %v960, %v855
        %v965 = vmul.f32 %v958, %v963
        %v966 = vadd.f32 %v964, %v965
        %v967 = vtanh.pop %v966
        %v968 = vmul.f32 %v962, %v967
        %v969 = vpack.c.bf16 %v968, %v968
        %970 = vmatprep.subr.bf16.mxu0 %v603
        %971 = vmatpush1.bf16.msra.mxu0 %v602
        %972 = vmatprep.subr.bf16.mxu0 %v607
        %973 = vmatpush1.bf16.msra.mxu0 %v606
        %974 = vmatprep.subr.bf16.mxu0 %v611
        %975 = vmatpush1.bf16.msra.mxu0 %v610
        %976 = vmatprep.subr.bf16.mxu0 %v615
        %977 = vmatpush1.bf16.msra.mxu0 %v614
        %978 = vmatprep.subr.bf16.mxu0 %v619
        %979 = vmatpush1.bf16.msra.mxu0 %v618
        %980 = vmatprep.subr.bf16.mxu0 %v623
        %981 = vmatpush1.bf16.msra.mxu0 %v622
        %982 = vmatprep.subr.bf16.mxu0 %v627
        %983 = vmatpush1.bf16.msra.mxu0 %v626
        %984 = vmatprep.subr.bf16.mxu0 %v631
        %985 = vmatpush1.bf16.msra.mxu0 %v630
        %986 = vmatprep.subr.bf16.mxu0 0
        %987 = vmatpush1.bf16.msra.mxu0 0
        %988 = vmatprep.subr.bf16.mxu0 0
        %989 = vmatpush1.bf16.msra.mxu0 0
        %990 = vmatprep.subr.bf16.mxu0 0
        %991 = vmatpush1.bf16.msra.mxu0 0
        %992 = vmatprep.subr.bf16.mxu0 0
        %993 = vmatpush1.bf16.msra.mxu0 0
        %994 = vmatprep.subr.bf16.mxu0 0
        %995 = vmatpush1.bf16.msra.mxu0 0
        %996 = vmatprep.subr.bf16.mxu0 0
        %997 = vmatpush1.bf16.msra.mxu0 0
        %998 = vmatprep.subr.bf16.mxu0 0
        %999 = vmatpush1.bf16.msra.mxu0 0
        %1000 = vmatprep.subr.bf16.mxu0 0
        %1001 = vmatpush1.bf16.msra.mxu0 0
        %1002 = vmatprep.mubr.bf16.mxu0 0
        %1003 = vmatmul.mubr.bf16.gmra.mrb[0].mxu0 %v969
        %v1004 = vpop.f32.mrb[0].mxu0
        %v1005 = vadd.f32 0.0, %v1004
        %v1006 = vpop.f32.mrb[0].mxu0
        %v1007 = vadd.f32 0.0, %v1006
        %v1008 = vpop.f32.mrb[0].mxu0
        %v1009 = vpop.f32.mrb[0].mxu0
        %1010 = vdwg.mxu0
        %1011 = vmatprep.subr.bf16.mxu0 %v605
        %1012 = vmatpush1.bf16.msra.mxu0 %v604
        %1013 = vmatprep.subr.bf16.mxu0 %v609
        %1014 = vmatpush1.bf16.msra.mxu0 %v608
        %1015 = vmatprep.subr.bf16.mxu0 %v613
        %1016 = vmatpush1.bf16.msra.mxu0 %v612
        %1017 = vmatprep.subr.bf16.mxu0 %v617
        %1018 = vmatpush1.bf16.msra.mxu0 %v616
        %1019 = vmatprep.subr.bf16.mxu0 %v621
        %1020 = vmatpush1.bf16.msra.mxu0 %v620
        %1021 = vmatprep.subr.bf16.mxu0 %v625
        %1022 = vmatpush1.bf16.msra.mxu0 %v624
        %1023 = vmatprep.subr.bf16.mxu0 %v629
        %1024 = vmatpush1.bf16.msra.mxu0 %v628
        %1025 = vmatprep.subr.bf16.mxu0 %v633
        %1026 = vmatpush1.bf16.msra.mxu0 %v632
        %1027 = vmatprep.subr.bf16.mxu0 0
        %1028 = vmatpush1.bf16.msra.mxu0 0
        %1029 = vmatprep.subr.bf16.mxu0 0
        %1030 = vmatpush1.bf16.msra.mxu0 0
        %1031 = vmatprep.subr.bf16.mxu0 0
        %1032 = vmatpush1.bf16.msra.mxu0 0
        %1033 = vmatprep.subr.bf16.mxu0 0
        %1034 = vmatpush1.bf16.msra.mxu0 0
        %1035 = vmatprep.subr.bf16.mxu0 0
        %1036 = vmatpush1.bf16.msra.mxu0 0
        %1037 = vmatprep.subr.bf16.mxu0 0
        %1038 = vmatpush1.bf16.msra.mxu0 0
        %1039 = vmatprep.subr.bf16.mxu0 0
        %1040 = vmatpush1.bf16.msra.mxu0 0
        %1041 = vmatprep.subr.bf16.mxu0 0
        %1042 = vmatpush1.bf16.msra.mxu0 0
        %1043 = vmatprep.mubr.bf16.mxu0 0
        %1044 = vmatmul.mubr.bf16.gmra.mrb[0].mxu0 %v969
        %v1045 = vpop.f32.mrb[0].mxu0
        %v1046 = vadd.f32 0.0, %v1045
        %v1047 = vpop.f32.mrb[0].mxu0
        %v1048 = vadd.f32 0.0, %v1047
        %v1049 = vpop.f32.mrb[0].mxu0
        %v1050 = vpop.f32.mrb[0].mxu0
        %1051 = vdwg.mxu0
        %v1052 = vadd.f32 %v481, %v1005
        %v1053 = vadd.f32 %v483, %v1007
        %v1054 = vadd.f32 %v534, %v1046
        %v1055 = vadd.f32 %v536, %v1048
        %v1056 = vxor.u32 %v1052, 2147483648
        %v1057 = vxor.u32 %v1053, 2147483648
        %v1058 = vxor.u32 %v1054, 2147483648
        %v1059 = vmul.f32 %v1056, 1.442695
        %v1060 = vpow.pop %v1059
        %v1061 = vmul.f32 %v1057, 1.442695
        %v1062 = vpow.pop %v1061
        %v1063 = vmul.f32 %v1058, 1.442695
        %v1064 = vpow.pop %v1063
        %v1065 = vadd.f32 %v1060, 1.0
        %v1066 = vadd.f32 %v1062, 1.0
        %v1067 = vadd.f32 %v1064, 1.0
        %v1068 = vrcp.pop %v1065
        %v1069 = vmul.f32 1.0, %v1068
        %v1070 = vrcp.pop %v1066
        %v1071 = vmul.f32 1.0, %v1070
        %v1072 = vrcp.pop %v1067
        %v1073 = vmul.f32 1.0, %v1072
        %v1074 = vtanh.pop %v1055
        %v1075 = vmul.f32 %v1071, %v966
        %v1076 = vmul.f32 %v1069, %v1074
        %v1077 = vadd.f32 %v1075, %v1076
        %v1078 = vtanh.pop %v1077
        %v1079 = vmul.f32 %v1073, %v1078
        %1080 = vst [vmem:[#allocation2] sm:$0xff] %v1079
        %1081 = vst [vmem:[#allocation3] sm:$0xff] %v1077
        %p1082 = scmp.eq.s32.totalorder %s23, 1
        // Predicated region
        $region45: #{joint_embeder_forward.5} parent=35 // pred_check
          %p1083 = pneg %p1082
        $region46: #{joint_embeder_forward.5} parent=35 // pred_check_branch
          %1085 = sbr.rel (%p1083) target = $region48
        $region47: #{joint_embeder_forward.5} parent=35 // pred_region
          %1086 = vst [vmem:[%s300] sm:$0xff] %v1079
        $region48: #{joint_embeder_forward.5} parent=35 // pred_fallthru
          _
        %p1087 = scmp.lt.s32.totalorder %s22, 1
        %s1088 = scalar_select %p1087, %s22, 1
        %s1089 = smul.addr %s1088, 8
        %s1090 = scalar_lea.vmem %s4, %s1089
        // Predicated region
        $region49: #{joint_embeder_forward.5} parent=35 // pred_check
          %p1091 = pneg %p154
        $region50: #{joint_embeder_forward.5} parent=35 // pred_check_branch
          %1093 = sbr.rel (%p1091) target = $region52
        $region51: #{joint_embeder_forward.5} parent=35 // pred_region
          _
        $region52: #{joint_embeder_forward.5} parent=35 // pred_fallthru
          _
      $region36: #{joint_embeder_forward.5} parent=5 // pred_fallthru
        _
      %p1094 = scmp.le.s32.totalorder 2, %s13
      // Predicated region
      $region53: #{joint_embeder_forward.5} parent=5 // pred_check
        %p1095 = pneg %p1094
      $region54: #{joint_embeder_forward.5} parent=5 // pred_check_branch
        %1097 = sbr.rel (%p1095) target = $region56
      $region55: #{joint_embeder_forward.5} parent=5 // pred_region
        %s1098 = ssub.s32 %s13, 2
        // Predicated region
        $region57: #{joint_embeder_forward.5} parent=55 // pred_check
          %p1099 = pneg %p160
        $region58: #{joint_embeder_forward.5} parent=55 // pred_check_branch
          %1101 = sbr.rel (%p1099) target = $region60
        $region59: #{joint_embeder_forward.5} parent=55 // pred_region
          %p1102 = scmp.lt.s32.totalorder %s24, 1
          %s1103 = scalar_select %p1102, %s24, 1
          %s1104 = smul.addr %s1103, 8
          %s1105 = scalar_lea.vmem %s4, %s1104
        $region60: #{joint_embeder_forward.5} parent=55 // pred_fallthru
          _
      $region56: #{joint_embeder_forward.5} parent=5 // pred_fallthru
        _
    $region6: #{joint_embeder_forward.5} parent=1 // loop_footer
      %s17 = sadd.s32 1, %s13
    $region7: #{joint_embeder_forward.5} parent=1 // loop_footer_branch
      %12 = sbr.rel target = $region3
    $region8: #{joint_embeder_forward.5} parent=1 // loop_exit
      _
    %1106 = vsyncpa [#allocation5], 1
    %s1107 = scalar_lea.sflag [#allocation5], 1
    %1108 = vsyncpa %s1107, 1

// kernel: joint_embeder_forward.6
$region0: #{joint_embeder_forward.6}
  #allocation0 [shape = 'u32[]', space=smem, size = 0x4, offset = 0x4, fixed_abs, tag = 'smem constant byte address 0x4 - core index']
  #allocation1 [shape = 'u32[144,128]{1,0:T(1,128)}', space=vmem, size = 0x12000, scoped, tag = 'internal scratch']
  #allocation2 [shape = 'f32[16,128]{1,0:T(8,128)}', space=vmem, size = 0x2000, scoped, tag = 'scratch operand']
  #allocation3 [shape = 'f32[16,128]{1,0:T(8,128)}', space=vmem, size = 0x2000, scoped, tag = 'scratch operand']
  %s0 = inlined_call_operand.vmem [shape: f32[2,128,128], index: 0, kind: input, shape index: {}]
  %s1 = inlined_call_operand.vmem [shape: f32[2,128,512], index: 1, kind: input, shape index: {}]
  %s2 = inlined_call_operand.vmem [shape: f32[2,128,512], index: 2, kind: input, shape index: {}]
  %s3 = inlined_call_operand.vmem [shape: f32[2,1,512], index: 3, kind: input, shape index: {}]
  %s4 = inlined_call_operand.vmem [shape: f32[16,256], index: 4, kind: output, shape index: {}]
  %s5 = sld [smem:[#allocation0]]
  $region91: #{joint_embeder_forward.6} parent=0
    _
  %s7 = ssub.s32 1, %s5
  %s8 = scalar_select 0, %s7, %s5
  $region1: #{joint_embeder_forward.6} parent=0
    #allocation4 [shape = 'u8[16384]{0}', space=vmem, size = 0x4000, scoped, tag = 'output window, operand 0']
    loop: start=0, step=1, limit=6
    $region2: #{joint_embeder_forward.6} parent=1 // loop_pre_header
      _
    $region3: #{joint_embeder_forward.6} parent=1 // loop_header
      %s10 = sphi 0, %s14
      %p11 = scmp.ge.s32.totalorder %s10, 6
      %s17 = sphi 0, %s29
      %s18 = sphi 0, %s25
      %s19 = sphi 0, %s17
      %s20 = sphi 0, %s18
      %s21 = sphi 0, %s19
      %s22 = sphi 0, %s20
      %s34 = sphi 0, %s36
      %s37 = sphi 0, %s34
      %s38 = sphi 0, %s37
      %s54 = sphi 0, %s38
      %s60 = sphi 0, %s62
      %s63 = sphi 0, %s60
      %s64 = sphi 0, %s63
      %s80 = sphi 0, %s64
      %s86 = sphi 0, %s88
      %s89 = sphi 0, %s86
      %s90 = sphi 0, %s89
      %s106 = sphi 0, %s90
      %s112 = sphi 0, %s114
      %s115 = sphi 0, %s112
      %s116 = sphi 0, %s115
      %s132 = sphi 0, %s116
      %s138 = sphi 0, %s140
      %s141 = sphi 0, %s138
      %s142 = sphi 0, %s141
      %s158 = sphi 0, %s142
    $region4: #{joint_embeder_forward.6} parent=1 // loop_header_branch
      %13 = sbr.rel (%p11) target = $region8
    $region5: #{joint_embeder_forward.6} parent=1 // loop_body
      %s15 = ssub.s32 %s10, 1
      %s16 = ssub.s32 %s10, 2
      %s23 = sadd.s32 1, %s18
      %p24 = scmp.ge.s32.totalorder %s23, 2
      %s25 = scalar_select %p24, 0, %s23
      %s26 = sadd.s32 1, %s17
      %s27 = scalar_select %p24, %s26, %s17
      %p28 = scmp.ge.s32.totalorder %s27, 2
      %s29 = scalar_select %p28, 0, %s27
      %s30 = ssub.s32 %s17, %s29
      %s31 = ssub.s32 %s18, %s25
      %s32 = sor.u32 %s30, %s31
      %p33 = scmp.eq.s32.totalorder %s32, 0
      %s35 = sadd.s32 %s34, 1
      %s36 = scalar_select %p33, %s34, %s35
      %p39 = pneg %p33
      %p40 = scmp.eq.s32.totalorder %s10, 3
      %p41 = por %p39, %p40
      %p42 = scmp.ne.s32.totalorder %s34, %s37
      %p43 = scmp.eq.s32.totalorder %s10, 0
      %p44 = por %p42, %p43
      %p45 = scmp.ne.s32.totalorder %s34, %s37
      %p46 = scmp.eq.s32.totalorder %s15, 3
      %p47 = por %p45, %p46
      %p48 = scmp.ne.s32.totalorder %s37, %s38
      %p49 = scmp.eq.s32.totalorder %s15, 0
      %p50 = por %p48, %p49
      %p51 = scmp.ne.s32.totalorder %s37, %s38
      %p52 = scmp.eq.s32.totalorder %s16, 3
      %p53 = por %p51, %p52
      %p55 = scmp.ne.s32.totalorder %s38, %s54
      %p56 = scmp.eq.s32.totalorder %s16, 0
      %p57 = por %p55, %p56
      %s58 = ssub.s32 %s17, %s29
      %p59 = scmp.eq.s32.totalorder %s58, 0
      %s61 = sadd.s32 %s60, 1
      %s62 = scalar_select %p59, %s60, %s61
      %p65 = pneg %p59
      %p66 = scmp.eq.s32.totalorder %s10, 3
      %p67 = por %p65, %p66
      %p68 = scmp.ne.s32.totalorder %s60, %s63
      %p69 = scmp.eq.s32.totalorder %s10, 0
      %p70 = por %p68, %p69
      %p71 = scmp.ne.s32.totalorder %s60, %s63
      %p72 = scmp.eq.s32.totalorder %s15, 3
      %p73 = por %p71, %p72
      %p74 = scmp.ne.s32.totalorder %s63, %s64
      %p75 = scmp.eq.s32.totalorder %s15, 0
      %p76 = por %p74, %p75
      %p77 = scmp.ne.s32.totalorder %s63, %s64
      %p78 = scmp.eq.s32.totalorder %s16, 3
      %p79 = por %p77, %p78
      %p81 = scmp.ne.s32.totalorder %s64, %s80
      %p82 = scmp.eq.s32.totalorder %s16, 0
      %p83 = por %p81, %p82
      %s84 = ssub.s32 %s17, %s29
      %p85 = scmp.eq.s32.totalorder %s84, 0
      %s87 = sadd.s32 %s86, 1
      %s88 = scalar_select %p85, %s86, %s87
      %p91 = pneg %p85
      %p92 = scmp.eq.s32.totalorder %s10, 3
      %p93 = por %p91, %p92
      %p94 = scmp.ne.s32.totalorder %s86, %s89
      %p95 = scmp.eq.s32.totalorder %s10, 0
      %p96 = por %p94, %p95
      %p97 = scmp.ne.s32.totalorder %s86, %s89
      %p98 = scmp.eq.s32.totalorder %s15, 3
      %p99 = por %p97, %p98
      %p100 = scmp.ne.s32.totalorder %s89, %s90
      %p101 = scmp.eq.s32.totalorder %s15, 0
      %p102 = por %p100, %p101
      %p103 = scmp.ne.s32.totalorder %s89, %s90
      %p104 = scmp.eq.s32.totalorder %s16, 3
      %p105 = por %p103, %p104
      %p107 = scmp.ne.s32.totalorder %s90, %s106
      %p108 = scmp.eq.s32.totalorder %s16, 0
      %p109 = por %p107, %p108
      %s110 = ssub.s32 %s17, %s29
      %p111 = scmp.eq.s32.totalorder %s110, 0
      %s113 = sadd.s32 %s112, 1
      %s114 = scalar_select %p111, %s112, %s113
      %p117 = pneg %p111
      %p118 = scmp.eq.s32.totalorder %s10, 3
      %p119 = por %p117, %p118
      %p120 = scmp.ne.s32.totalorder %s112, %s115
      %p121 = scmp.eq.s32.totalorder %s10, 0
      %p122 = por %p120, %p121
      %p123 = scmp.ne.s32.totalorder %s112, %s115
      %p124 = scmp.eq.s32.totalorder %s15, 3
      %p125 = por %p123, %p124
      %p126 = scmp.ne.s32.totalorder %s115, %s116
      %p127 = scmp.eq.s32.totalorder %s15, 0
      %p128 = por %p126, %p127
      %p129 = scmp.ne.s32.totalorder %s115, %s116
      %p130 = scmp.eq.s32.totalorder %s16, 3
      %p131 = por %p129, %p130
      %p133 = scmp.ne.s32.totalorder %s116, %s132
      %p134 = scmp.eq.s32.totalorder %s16, 0
      %p135 = por %p133, %p134
      %s136 = ssub.s32 %s17, %s29
      %p137 = scmp.eq.s32.totalorder %s136, 0
      %s139 = sadd.s32 %s138, 1
      %s140 = scalar_select %p137, %s138, %s139
      %p143 = pneg %p137
      %p144 = scmp.eq.s32.totalorder %s10, 3
      %p145 = por %p143, %p144
      %p146 = scmp.ne.s32.totalorder %s138, %s141
      %p147 = scmp.eq.s32.totalorder %s10, 0
      %p148 = por %p146, %p147
      %p149 = scmp.ne.s32.totalorder %s138, %s141
      %p150 = scmp.eq.s32.totalorder %s15, 3
      %p151 = por %p149, %p150
      %p152 = scmp.ne.s32.totalorder %s141, %s142
      %p153 = scmp.eq.s32.totalorder %s15, 0
      %p154 = por %p152, %p153
      %p155 = scmp.ne.s32.totalorder %s141, %s142
      %p156 = scmp.eq.s32.totalorder %s16, 3
      %p157 = por %p155, %p156
      %p159 = scmp.ne.s32.totalorder %s142, %s158
      %p160 = scmp.eq.s32.totalorder %s16, 0
      %p161 = por %p159, %p160
      %p162 = scmp.le.s32.totalorder 1, %s10
      %p163 = scmp.lt.s32.totalorder %s10, 5
      %p164 = pnand %p162, %p163
      %p165 = pneg %p164
      // Predicated region
      $region9: #{joint_embeder_forward.6} parent=5 // pred_check
        _
      $region10: #{joint_embeder_forward.6} parent=5 // pred_check_branch
        %167 = sbr.rel (%p164) target = $region12
      $region11: #{joint_embeder_forward.6} parent=5 // pred_region
        %s168 = ssub.s32 %s10, 1
      $region12: #{joint_embeder_forward.6} parent=5 // pred_fallthru
        _
      %p169 = scmp.lt.s32.totalorder %s10, 4
      // Predicated region
      $region13: #{joint_embeder_forward.6} parent=5 // pred_check
        %p170 = pneg %p169
      $region14: #{joint_embeder_forward.6} parent=5 // pred_check_branch
        %172 = sbr.rel (%p170) target = $region16
      $region15: #{joint_embeder_forward.6} parent=5 // pred_region
        // Predicated region
        $region17: #{joint_embeder_forward.6} parent=15 // pred_check
          %p173 = pneg %p44
        $region18: #{joint_embeder_forward.6} parent=15 // pred_check_branch
          %175 = sbr.rel (%p173) target = $region20
        $region19: #{joint_embeder_forward.6} parent=15 // pred_region
          %s176 = smul.u32 8, %s18
          %p177 = scmp.lt.s32.totalorder %s17, 1
          %s178 = scalar_select %p177, %s17, 1
          %p179 = scmp.lt.s32.totalorder %s176, 15
          %s180 = scalar_select %p179, %s176, 15
          %s181 = smul.addr %s178, 16
          %s182 = sadd.s32 %s180, %s181
          %s183 = smul.addr %s182, 8
          %s184 = scalar_lea.vmem %s0, %s183
          %s185 = smul.u32 8, %s18
        $region20: #{joint_embeder_forward.6} parent=15 // pred_fallthru
          _
        // Predicated region
        $region21: #{joint_embeder_forward.6} parent=15 // pred_check
          %p186 = pneg %p70
        $region22: #{joint_embeder_forward.6} parent=15 // pred_check_branch
          %188 = sbr.rel (%p186) target = $region24
        $region23: #{joint_embeder_forward.6} parent=15 // pred_region
          %p189 = scmp.lt.s32.totalorder %s17, 1
          %s190 = scalar_select %p189, %s17, 1
          %s191 = smul.addr %s190, 64
          %s192 = smul.addr %s191, 8
          %s193 = scalar_lea.vmem %s1, %s192
        $region24: #{joint_embeder_forward.6} parent=15 // pred_fallthru
          _
        // Predicated region
        $region25: #{joint_embeder_forward.6} parent=15 // pred_check
          %p194 = pneg %p96
        $region26: #{joint_embeder_forward.6} parent=15 // pred_check_branch
          %196 = sbr.rel (%p194) target = $region28
        $region27: #{joint_embeder_forward.6} parent=15 // pred_region
          %p197 = scmp.lt.s32.totalorder %s17, 1
          %s198 = scalar_select %p197, %s17, 1
          %s199 = smul.addr %s198, 64
          %s200 = smul.addr %s199, 8
          %s201 = scalar_lea.vmem %s2, %s200
        $region28: #{joint_embeder_forward.6} parent=15 // pred_fallthru
          _
        // Predicated region
        $region29: #{joint_embeder_forward.6} parent=15 // pred_check
          %p202 = pneg %p122
        $region30: #{joint_embeder_forward.6} parent=15 // pred_check_branch
          %204 = sbr.rel (%p202) target = $region32
        $region31: #{joint_embeder_forward.6} parent=15 // pred_region
          %p205 = scmp.lt.s32.totalorder %s17, 1
          %s206 = scalar_select %p205, %s17, 1
          %s207 = smul.addr %s206, 4
          %s208 = scalar_lea.vmem %s3, %s207
        $region32: #{joint_embeder_forward.6} parent=15 // pred_fallthru
          _
      $region16: #{joint_embeder_forward.6} parent=5 // pred_fallthru
        _
      %p209 = scmp.le.s32.totalorder 1, %s10
      %p210 = scmp.lt.s32.totalorder %s10, 5
      %p211 = pnand %p209, %p210
      %p212 = pneg %p211
      // Predicated region
      $region33: #{joint_embeder_forward.6} parent=5 // pred_check
        _
      $region34: #{joint_embeder_forward.6} parent=5 // pred_check_branch
        %214 = sbr.rel (%p211) target = $region36
      $region35: #{joint_embeder_forward.6} parent=5 // pred_region
        %s215 = ssub.s32 %s10, 1
        %s216 = smul.u32 8, %s20
        %p217 = scmp.lt.s32.totalorder %s19, 1
        %s218 = scalar_select %p217, %s19, 1
        %p219 = scmp.lt.s32.totalorder %s216, 15
        %s220 = scalar_select %p219, %s216, 15
        %s221 = smul.addr %s218, 16
        %s222 = sadd.s32 %s220, %s221
        %s223 = smul.addr %s222, 8
        %s224 = scalar_lea.vmem %s0, %s223
        %p225 = pneg %p50
        %p226 = pneg %p47
        %p227 = scmp.lt.s32.totalorder %s19, 1
        %s228 = scalar_select %p227, %s19, 1
        %s229 = smul.addr %s228, 64
        %s230 = smul.addr %s229, 8
        %s231 = scalar_lea.vmem %s1, %s230
        %p232 = pneg %p76
        %p233 = pneg %p73
        %p234 = scmp.lt.s32.totalorder %s19, 1
        %s235 = scalar_select %p234, %s19, 1
        %s236 = smul.addr %s235, 64
        %s237 = smul.addr %s236, 8
        %s238 = scalar_lea.vmem %s2, %s237
        %p239 = pneg %p102
        %p240 = pneg %p99
        %p241 = scmp.lt.s32.totalorder %s19, 1
        %s242 = scalar_select %p241, %s19, 1
        %s243 = smul.addr %s242, 4
        %s244 = scalar_lea.vmem %s3, %s243
        %p245 = pneg %p128
        %p246 = pneg %p125
        %p247 = pneg %p154
        %p248 = pneg %p151
        %s249 = sand.u32 %s141, 1
        %s250 = sand.u32 %s141, 1
        %s251 = smul.addr %s250, 16
        %s252 = scalar_lea.vmem [#allocation4], %s251
        %s253 = smul.u32 8, %s20
        %p254 = scmp.lt.s32.totalorder %s19, 1
        %s255 = scalar_select %p254, %s19, 1
        %p256 = scmp.lt.s32.totalorder %s253, 15
        %s257 = scalar_select %p256, %s253, 15
        %s258 = smul.addr %s255, 16
        %s259 = sadd.s32 %s257, %s258
        %s260 = smul.addr %s259, 8
        %s261 = scalar_lea.vmem %s0, %s260
        %s262 = smul.u32 8, %s20
        %p263 = scmp.lt.s32.totalorder %s19, 1
        %s264 = scalar_select %p263, %s19, 1
        %s265 = smul.addr %s264, 64
        %s266 = smul.addr %s265, 8
        %s267 = scalar_lea.vmem %s1, %s266
        %p268 = scmp.lt.s32.totalorder %s19, 1
        %s269 = scalar_select %p268, %s19, 1
        %s270 = smul.addr %s269, 64
        %s271 = smul.addr %s270, 8
        %s272 = scalar_lea.vmem %s2, %s271
        %p273 = scmp.lt.s32.totalorder %s19, 1
        %s274 = scalar_select %p273, %s19, 1
        %s275 = smul.addr %s274, 4
        %s276 = scalar_lea.vmem %s3, %s275
        %p278 = scmp.eq.s32.totalorder %s20, 0
        // Predicated region
        $region37: #{joint_embeder_forward.6} parent=35 // pred_check
          %p279 = pneg %p278
        $region38: #{joint_embeder_forward.6} parent=35 // pred_check_branch
          %281 = sbr.rel (%p279) target = $region40
        $region39: #{joint_embeder_forward.6} parent=35 // pred_region
          %282 = vst [vmem:[#allocation2] sm:$0xff] 0.0
          %283 = vst [vmem:[#allocation2 + $0x8] sm:$0xff] 0.0
          %284 = vst [vmem:[#allocation3] sm:$0xff] 0.0
          %285 = vst [vmem:[#allocation3 + $0x8] sm:$0xff] 0.0
        $region40: #{joint_embeder_forward.6} parent=35 // pred_fallthru
          _
        %v286 = vld [vmem:[%s261] sm:$0xff]
        %v287 = vld [vmem:[%s261 + $0x8] sm:$0xff]
        %v288 = vld [vmem:[%s261 + $0x10] sm:$0xff]
        %v289 = vld [vmem:[%s261 + $0x18] sm:$0xff]
        %v290 = vld [vmem:[%s261 + $0x20] sm:$0xff]
        %v291 = vld [vmem:[%s261 + $0x28] sm:$0xff]
        %v292 = vld [vmem:[%s261 + $0x30] sm:$0xff]
        %v293 = vld [vmem:[%s261 + $0x38] sm:$0xff]
        %v294 = vpack.c.bf16 %v287, %v286
        %v295 = vpack.c.bf16 %v289, %v288
        %v296 = vpack.c.bf16 %v291, %v290
        %v297 = vpack.c.bf16 %v293, %v292
        %v298 = vld [vmem:[%s267] sm:$0xff]
        %v299 = vld [vmem:[%s267 + $0x8] sm:$0xff]
        %v300 = vld [vmem:[%s267 + $0x10] sm:$0xff]
        %v301 = vld [vmem:[%s267 + $0x18] sm:$0xff]
        %v302 = vld [vmem:[%s267 + $0x20] sm:$0xff]
        %v303 = vld [vmem:[%s267 + $0x28] sm:$0xff]
        %v304 = vld [vmem:[%s267 + $0x30] sm:$0xff]
        %v305 = vld [vmem:[%s267 + $0x38] sm:$0xff]
        %v306 = vld [vmem:[%s267 + $0x40] sm:$0xff]
        %v307 = vld [vmem:[%s267 + $0x48] sm:$0xff]
        %v308 = vld [vmem:[%s267 + $0x50] sm:$0xff]
        %v309 = vld [vmem:[%s267 + $0x58] sm:$0xff]
        %v310 = vld [vmem:[%s267 + $0x60] sm:$0xff]
        %v311 = vld [vmem:[%s267 + $0x68] sm:$0xff]
        %v312 = vld [vmem:[%s267 + $0x70] sm:$0xff]
        %v313 = vld [vmem:[%s267 + $0x78] sm:$0xff]
        %v314 = vld [vmem:[%s267 + $0x80] sm:$0xff]
        %v315 = vld [vmem:[%s267 + $0x88] sm:$0xff]
        %v316 = vld [vmem:[%s267 + $0x90] sm:$0xff]
        %v317 = vld [vmem:[%s267 + $0x98] sm:$0xff]
        %v318 = vld [vmem:[%s267 + $0xa0] sm:$0xff]
        %v319 = vld [vmem:[%s267 + $0xa8] sm:$0xff]
        %v320 = vld [vmem:[%s267 + $0xb0] sm:$0xff]
        %v321 = vld [vmem:[%s267 + $0xb8] sm:$0xff]
        %v322 = vld [vmem:[%s267 + $0xc0] sm:$0xff]
        %v323 = vld [vmem:[%s267 + $0xc8] sm:$0xff]
        %v324 = vld [vmem:[%s267 + $0xd0] sm:$0xff]
        %v325 = vld [vmem:[%s267 + $0xd8] sm:$0xff]
        %v326 = vld [vmem:[%s267 + $0xe0] sm:$0xff]
        %v327 = vld [vmem:[%s267 + $0xe8] sm:$0xff]
        %v328 = vld [vmem:[%s267 + $0xf0] sm:$0xff]
        %v329 = vld [vmem:[%s267 + $0xf8] sm:$0xff]
        %v330 = vld [vmem:[%s267 + $0x100] sm:$0xff]
        %v331 = vld [vmem:[%s267 + $0x108] sm:$0xff]
        %v332 = vld [vmem:[%s267 + $0x110] sm:$0xff]
        %v333 = vld [vmem:[%s267 + $0x118] sm:$0xff]
        %v334 = vld [vmem:[%s267 + $0x120] sm:$0xff]
        %v335 = vld [vmem:[%s267 + $0x128] sm:$0xff]
        %v336 = vld [vmem:[%s267 + $0x130] sm:$0xff]
        %v337 = vld [vmem:[%s267 + $0x138] sm:$0xff]
        %v338 = vld [vmem:[%s267 + $0x140] sm:$0xff]
        %v339 = vld [vmem:[%s267 + $0x148] sm:$0xff]
        %v340 = vld [vmem:[%s267 + $0x150] sm:$0xff]
        %v341 = vld [vmem:[%s267 + $0x158] sm:$0xff]
        %v342 = vld [vmem:[%s267 + $0x160] sm:$0xff]
        %v343 = vld [vmem:[%s267 + $0x168] sm:$0xff]
        %v344 = vld [vmem:[%s267 + $0x170] sm:$0xff]
        %v345 = vld [vmem:[%s267 + $0x178] sm:$0xff]
        %v346 = vld [vmem:[%s267 + $0x180] sm:$0xff]
        %v347 = vld [vmem:[%s267 + $0x188] sm:$0xff]
        %v348 = vld [vmem:[%s267 + $0x190] sm:$0xff]
        %v349 = vld [vmem:[%s267 + $0x198] sm:$0xff]
        %v350 = vld [vmem:[%s267 + $0x1a0] sm:$0xff]
        %v351 = vld [vmem:[%s267 + $0x1a8] sm:$0xff]
        %v352 = vld [vmem:[%s267 + $0x1b0] sm:$0xff]
        %v353 = vld [vmem:[%s267 + $0x1b8] sm:$0xff]
        %v354 = vld [vmem:[%s267 + $0x1c0] sm:$0xff]
        %v355 = vld [vmem:[%s267 + $0x1c8] sm:$0xff]
        %v356 = vld [vmem:[%s267 + $0x1d0] sm:$0xff]
        %v357 = vld [vmem:[%s267 + $0x1d8] sm:$0xff]
        %v358 = vld [vmem:[%s267 + $0x1e0] sm:$0xff]
        %v359 = vld [vmem:[%s267 + $0x1e8] sm:$0xff]
        %v360 = vld [vmem:[%s267 + $0x1f0] sm:$0xff]
        %v361 = vld [vmem:[%s267 + $0x1f8] sm:$0xff]
        %v362 = vpack.c.bf16 %v302, %v298
        %v363 = vpack.c.bf16 %v303, %v299
        %v364 = vpack.c.bf16 %v304, %v300
        %v365 = vpack.c.bf16 %v305, %v301
        %v366 = vpack.c.bf16 %v310, %v306
        %v367 = vpack.c.bf16 %v311, %v307
        %v368 = vpack.c.bf16 %v312, %v308
        %v369 = vpack.c.bf16 %v313, %v309
        %v370 = vpack.c.bf16 %v318, %v314
        %v371 = vpack.c.bf16 %v319, %v315
        %v372 = vpack.c.bf16 %v320, %v316
        %v373 = vpack.c.bf16 %v321, %v317
        %v374 = vpack.c.bf16 %v326, %v322
        %v375 = vpack.c.bf16 %v327, %v323
        %v376 = vpack.c.bf16 %v328, %v324
        %v377 = vpack.c.bf16 %v329, %v325
        %v378 = vpack.c.bf16 %v334, %v330
        %v379 = vpack.c.bf16 %v335, %v331
        %v380 = vpack.c.bf16 %v336, %v332
        %v381 = vpack.c.bf16 %v337, %v333
        %v382 = vpack.c.bf16 %v342, %v338
        %v383 = vpack.c.bf16 %v343, %v339
        %v384 = vpack.c.bf16 %v344, %v340
        %v385 = vpack.c.bf16 %v345, %v341
        %v386 = vpack.c.bf16 %v350, %v346
        %v387 = vpack.c.bf16 %v351, %v347
        %v388 = vpack.c.bf16 %v352, %v348
        %v389 = vpack.c.bf16 %v353, %v349
        %v390 = vpack.c.bf16 %v358, %v354
        %v391 = vpack.c.bf16 %v359, %v355
        %v392 = vpack.c.bf16 %v360, %v356
        %v393 = vpack.c.bf16 %v361, %v357
        %v394 = vld [vmem:[%s276] sm:$0xf]
        %v396 = vlaneseq
        %v397 = vshrl.u32 %v396, 7
        %v398 = vsub.s32 0, %v397
        %v399 = vrot.slane %v394, %v398
        %v400 = vlaneseq
        %v401 = vshrl.u32 %v400, 7
        %v402 = vsub.s32 1, %v401
        %v403 = vrot.slane %v394, %v402
        %v404 = vlaneseq
        %v405 = vshrl.u32 %v404, 7
        %v406 = vsub.s32 2, %v405
        %v407 = vrot.slane %v394, %v406
        %v408 = vlaneseq
        %v409 = vshrl.u32 %v408, 7
        %v410 = vsub.s32 3, %v409
        %v411 = vrot.slane %v394, %v410
        %416 = vmatprep.subr.bf16.mxu0 %v363
        %417 = vmatpush1.bf16.msra.mxu0 %v362
        %418 = vmatprep.subr.bf16.mxu0 %v367
        %419 = vmatpush1.bf16.msra.mxu0 %v366
        %420 = vmatprep.subr.bf16.mxu0 %v371
        %421 = vmatpush1.bf16.msra.mxu0 %v370
        %422 = vmatprep.subr.bf16.mxu0 %v375
        %423 = vmatpush1.bf16.msra.mxu0 %v374
        %424 = vmatprep.subr.bf16.mxu0 %v379
        %425 = vmatpush1.bf16.msra.mxu0 %v378
        %426 = vmatprep.subr.bf16.mxu0 %v383
        %427 = vmatpush1.bf16.msra.mxu0 %v382
        %428 = vmatprep.subr.bf16.mxu0 %v387
        %429 = vmatpush1.bf16.msra.mxu0 %v386
        %430 = vmatprep.subr.bf16.mxu0 %v391
        %431 = vmatpush1.bf16.msra.mxu0 %v390
        %432 = vmatprep.subr.bf16.mxu0 0
        %433 = vmatpush1.bf16.msra.mxu0 0
        %434 = vmatprep.subr.bf16.mxu0 0
        %435 = vmatpush1.bf16.msra.mxu0 0
        %436 = vmatprep.subr.bf16.mxu0 0
        %437 = vmatpush1.bf16.msra.mxu0 0
        %438 = vmatprep.subr.bf16.mxu0 0
        %439 = vmatpush1.bf16.msra.mxu0 0
        %440 = vmatprep.subr.bf16.mxu0 0
        %441 = vmatpush1.bf16.msra.mxu0 0
        %442 = vmatprep.subr.bf16.mxu0 0
        %443 = vmatpush1.bf16.msra.mxu0 0
        %444 = vmatprep.subr.bf16.mxu0 0
        %445 = vmatpush1.bf16.msra.mxu0 0
        %446 = vmatprep.subr.bf16.mxu0 0
        %447 = vmatpush1.bf16.msra.mxu0 0
        %448 = vmatprep.mubr.bf16.mxu0 0
        %449 = vmatmul.mubr.bf16.gmra.mrb[0].mxu0 %v294
        %v450 = vpop.f32.mrb[0].mxu0
        %v451 = vadd.f32 %v399, %v450
        %v452 = vpop.f32.mrb[0].mxu0
        %v453 = vadd.f32 %v403, %v452
        %v454 = vpop.f32.mrb[0].mxu0
        %v455 = vadd.f32 %v399, %v454
        %v456 = vpop.f32.mrb[0].mxu0
        %v457 = vadd.f32 %v403, %v456
        %458 = vmatprep.mubr.bf16.mxu0 0
        %459 = vmatmul.mubr.bf16.gmra.mrb[0].mxu0 %v295
        %v460 = vpop.f32.mrb[0].mxu0
        %v461 = vadd.f32 %v399, %v460
        %v462 = vpop.f32.mrb[0].mxu0
        %v463 = vadd.f32 %v403, %v462
        %v464 = vpop.f32.mrb[0].mxu0
        %v465 = vadd.f32 %v399, %v464
        %v466 = vpop.f32.mrb[0].mxu0
        %v467 = vadd.f32 %v403, %v466
        %468 = vmatprep.mubr.bf16.mxu0 0
        %469 = vmatmul.mubr.bf16.gmra.mrb[0].mxu0 %v296
        %v470 = vpop.f32.mrb[0].mxu0
        %v471 = vadd.f32 %v399, %v470
        %v472 = vpop.f32.mrb[0].mxu0
        %v473 = vadd.f32 %v403, %v472
        %v474 = vpop.f32.mrb[0].mxu0
        %v475 = vadd.f32 %v399, %v474
        %v476 = vpop.f32.mrb[0].mxu0
        %v477 = vadd.f32 %v403, %v476
        %478 = vmatprep.mubr.bf16.mxu0 0
        %479 = vmatmul.mubr.bf16.gmra.mrb[0].mxu0 %v297
        %v480 = vpop.f32.mrb[0].mxu0
        %v481 = vadd.f32 %v399, %v480
        %v482 = vpop.f32.mrb[0].mxu0
        %v483 = vadd.f32 %v403, %v482
        %v484 = vpop.f32.mrb[0].mxu0
        %v485 = vadd.f32 %v399, %v484
        %v486 = vpop.f32.mrb[0].mxu0
        %v487 = vadd.f32 %v403, %v486
        %488 = vdwg.mxu0
        %489 = vmatprep.subr.bf16.mxu0 %v365
        %490 = vmatpush1.bf16.msra.mxu0 %v364
        %491 = vmatprep.subr.bf16.mxu0 %v369
        %492 = vmatpush1.bf16.msra.mxu0 %v368
        %493 = vmatprep.subr.bf16.mxu0 %v373
        %494 = vmatpush1.bf16.msra.mxu0 %v372
        %495 = vmatprep.subr.bf16.mxu0 %v377
        %496 = vmatpush1.bf16.msra.mxu0 %v376
        %497 = vmatprep.subr.bf16.mxu0 %v381
        %498 = vmatpush1.bf16.msra.mxu0 %v380
        %499 = vmatprep.subr.bf16.mxu0 %v385
        %500 = vmatpush1.bf16.msra.mxu0 %v384
        %501 = vmatprep.subr.bf16.mxu0 %v389
        %502 = vmatpush1.bf16.msra.mxu0 %v388
        %503 = vmatprep.subr.bf16.mxu0 %v393
        %504 = vmatpush1.bf16.msra.mxu0 %v392
        %505 = vmatprep.subr.bf16.mxu0 0
        %506 = vmatpush1.bf16.msra.mxu0 0
        %507 = vmatprep.subr.bf16.mxu0 0
        %508 = vmatpush1.bf16.msra.mxu0 0
        %509 = vmatprep.subr.bf16.mxu0 0
        %510 = vmatpush1.bf16.msra.mxu0 0
        %511 = vmatprep.subr.bf16.mxu0 0
        %512 = vmatpush1.bf16.msra.mxu0 0
        %513 = vmatprep.subr.bf16.mxu0 0
        %514 = vmatpush1.bf16.msra.mxu0 0
        %515 = vmatprep.subr.bf16.mxu0 0
        %516 = vmatpush1.bf16.msra.mxu0 0
        %517 = vmatprep.subr.bf16.mxu0 0
        %518 = vmatpush1.bf16.msra.mxu0 0
        %519 = vmatprep.subr.bf16.mxu0 0
        %520 = vmatpush1.bf16.msra.mxu0 0
        %521 = vmatprep.mubr.bf16.mxu0 0
        %522 = vmatmul.mubr.bf16.gmra.mrb[0].mxu0 %v294
        %v523 = vpop.f32.mrb[0].mxu0
        %v524 = vadd.f32 %v407, %v523
        %v525 = vpop.f32.mrb[0].mxu0
        %v526 = vadd.f32 %v411, %v525
        %v527 = vpop.f32.mrb[0].mxu0
        %v528 = vadd.f32 %v407, %v527
        %v529 = vpop.f32.mrb[0].mxu0
        %v530 = vadd.f32 %v411, %v529
        %531 = vmatprep.mubr.bf16.mxu0 0
        %532 = vmatmul.mubr.bf16.gmra.mrb[0].mxu0 %v295
        %v533 = vpop.f32.mrb[0].mxu0
        %v534 = vadd.f32 %v407, %v533
        %v535 = vpop.f32.mrb[0].mxu0
        %v536 = vadd.f32 %v411, %v535
        %v537 = vpop.f32.mrb[0].mxu0
        %v538 = vadd.f32 %v407, %v537
        %v539 = vpop.f32.mrb[0].mxu0
        %v540 = vadd.f32 %v411, %v539
        %541 = vmatprep.mubr.bf16.mxu0 0
        %542 = vmatmul.mubr.bf16.gmra.mrb[0].mxu0 %v296
        %v543 = vpop.f32.mrb[0].mxu0
        %v544 = vadd.f32 %v407, %v543
        %v545 = vpop.f32.mrb[0].mxu0
        %v546 = vadd.f32 %v411, %v545
        %v547 = vpop.f32.mrb[0].mxu0
        %v548 = vadd.f32 %v407, %v547
        %v549 = vpop.f32.mrb[0].mxu0
        %v550 = vadd.f32 %v411, %v549
        %551 = vmatprep.mubr.bf16.mxu0 0
        %552 = vmatmul.mubr.bf16.gmra.mrb[0].mxu0 %v297
        %v553 = vpop.f32.mrb[0].mxu0
        %v554 = vadd.f32 %v407, %v553
        %v555 = vpop.f32.mrb[0].mxu0
        %v556 = vadd.f32 %v411, %v555
        %v557 = vpop.f32.mrb[0].mxu0
        %v558 = vadd.f32 %v407, %v557
        %v559 = vpop.f32.mrb[0].mxu0
        %v560 = vadd.f32 %v411, %v559
        %561 = vdwg.mxu0
        %v562 = vld [vmem:[%s272] sm:$0xff]
        %v563 = vld [vmem:[%s272 + $0x8] sm:$0xff]
        %v564 = vld [vmem:[%s272 + $0x10] sm:$0xff]
        %v565 = vld [vmem:[%s272 + $0x18] sm:$0xff]
        %v566 = vld [vmem:[%s272 + $0x20] sm:$0xff]
        %v567 = vld [vmem:[%s272 + $0x28] sm:$0xff]
        %v568 = vld [vmem:[%s272 + $0x30] sm:$0xff]
        %v569 = vld [vmem:[%s272 + $0x38] sm:$0xff]
        %v570 = vld [vmem:[%s272 + $0x40] sm:$0xff]
        %v571 = vld [vmem:[%s272 + $0x48] sm:$0xff]
        %v572 = vld [vmem:[%s272 + $0x50] sm:$0xff]
        %v573 = vld [vmem:[%s272 + $0x58] sm:$0xff]
        %v574 = vld [vmem:[%s272 + $0x60] sm:$0xff]
        %v575 = vld [vmem:[%s272 + $0x68] sm:$0xff]
        %v576 = vld [vmem:[%s272 + $0x70] sm:$0xff]
        %v577 = vld [vmem:[%s272 + $0x78] sm:$0xff]
        %v578 = vld [vmem:[%s272 + $0x80] sm:$0xff]
        %v579 = vld [vmem:[%s272 + $0x88] sm:$0xff]
        %v580 = vld [vmem:[%s272 + $0x90] sm:$0xff]
        %v581 = vld [vmem:[%s272 + $0x98] sm:$0xff]
        %v582 = vld [vmem:[%s272 + $0xa0] sm:$0xff]
        %v583 = vld [vmem:[%s272 + $0xa8] sm:$0xff]
        %v584 = vld [vmem:[%s272 + $0xb0] sm:$0xff]
        %v585 = vld [vmem:[%s272 + $0xb8] sm:$0xff]
        %v586 = vld [vmem:[%s272 + $0xc0] sm:$0xff]
        %v587 = vld [vmem:[%s272 + $0xc8] sm:$0xff]
        %v588 = vld [vmem:[%s272 + $0xd0] sm:$0xff]
        %v589 = vld [vmem:[%s272 + $0xd8] sm:$0xff]
        %v590 = vld [vmem:[%s272 + $0xe0] sm:$0xff]
        %v591 = vld [vmem:[%s272 + $0xe8] sm:$0xff]
        %v592 = vld [vmem:[%s272 + $0xf0] sm:$0xff]
        %v593 = vld [vmem:[%s272 + $0xf8] sm:$0xff]
        %v594 = vld [vmem:[%s272 + $0x100] sm:$0xff]
        %v595 = vld [vmem:[%s272 + $0x108] sm:$0xff]
        %v596 = vld [vmem:[%s272 + $0x110] sm:$0xff]
        %v597 = vld [vmem:[%s272 + $0x118] sm:$0xff]
        %v598 = vld [vmem:[%s272 + $0x120] sm:$0xff]
        %v599 = vld [vmem:[%s272 + $0x128] sm:$0xff]
        %v600 = vld [vmem:[%s272 + $0x130] sm:$0xff]
        %v601 = vld [vmem:[%s272 + $0x138] sm:$0xff]
        %v602 = vld [vmem:[%s272 + $0x140] sm:$0xff]
        %v603 = vld [vmem:[%s272 + $0x148] sm:$0xff]
        %v604 = vld [vmem:[%s272 + $0x150] sm:$0xff]
        %v605 = vld [vmem:[%s272 + $0x158] sm:$0xff]
        %v606 = vld [vmem:[%s272 + $0x160] sm:$0xff]
        %v607 = vld [vmem:[%s272 + $0x168] sm:$0xff]
        %v608 = vld [vmem:[%s272 + $0x170] sm:$0xff]
        %v609 = vld [vmem:[%s272 + $0x178] sm:$0xff]
        %v610 = vld [vmem:[%s272 + $0x180] sm:$0xff]
        %v611 = vld [vmem:[%s272 + $0x188] sm:$0xff]
        %v612 = vld [vmem:[%s272 + $0x190] sm:$0xff]
        %v613 = vld [vmem:[%s272 + $0x198] sm:$0xff]
        %v614 = vld [vmem:[%s272 + $0x1a0] sm:$0xff]
        %v615 = vld [vmem:[%s272 + $0x1a8] sm:$0xff]
        %v616 = vld [vmem:[%s272 + $0x1b0] sm:$0xff]
        %v617 = vld [vmem:[%s272 + $0x1b8] sm:$0xff]
        %v618 = vld [vmem:[%s272 + $0x1c0] sm:$0xff]
        %v619 = vld [vmem:[%s272 + $0x1c8] sm:$0xff]
        %v620 = vld [vmem:[%s272 + $0x1d0] sm:$0xff]
        %v621 = vld [vmem:[%s272 + $0x1d8] sm:$0xff]
        %v622 = vld [vmem:[%s272 + $0x1e0] sm:$0xff]
        %v623 = vld [vmem:[%s272 + $0x1e8] sm:$0xff]
        %v624 = vld [vmem:[%s272 + $0x1f0] sm:$0xff]
        %v625 = vld [vmem:[%s272 + $0x1f8] sm:$0xff]
        %v626 = vpack.c.bf16 %v566, %v562
        %v627 = vpack.c.bf16 %v567, %v563
        %v628 = vpack.c.bf16 %v568, %v564
        %v629 = vpack.c.bf16 %v569, %v565
        %v630 = vpack.c.bf16 %v574, %v570
        %v631 = vpack.c.bf16 %v575, %v571
        %v632 = vpack.c.bf16 %v576, %v572
        %v633 = vpack.c.bf16 %v577, %v573
        %v634 = vpack.c.bf16 %v582, %v578
        %v635 = vpack.c.bf16 %v583, %v579
        %v636 = vpack.c.bf16 %v584, %v580
        %v637 = vpack.c.bf16 %v585, %v581
        %v638 = vpack.c.bf16 %v590, %v586
        %v639 = vpack.c.bf16 %v591, %v587
        %v640 = vpack.c.bf16 %v592, %v588
        %v641 = vpack.c.bf16 %v593, %v589
        %v642 = vpack.c.bf16 %v598, %v594
        %v643 = vpack.c.bf16 %v599, %v595
        %v644 = vpack.c.bf16 %v600, %v596
        %v645 = vpack.c.bf16 %v601, %v597
        %v646 = vpack.c.bf16 %v606, %v602
        %v647 = vpack.c.bf16 %v607, %v603
        %v648 = vpack.c.bf16 %v608, %v604
        %v649 = vpack.c.bf16 %v609, %v605
        %v650 = vpack.c.bf16 %v614, %v610
        %v651 = vpack.c.bf16 %v615, %v611
        %v652 = vpack.c.bf16 %v616, %v612
        %v653 = vpack.c.bf16 %v617, %v613
        %v654 = vpack.c.bf16 %v622, %v618
        %v655 = vpack.c.bf16 %v623, %v619
        %v656 = vpack.c.bf16 %v624, %v620
        %v657 = vpack.c.bf16 %v625, %v621
        %v658 = vld [vmem:[#allocation2] sm:$0xff]
        %v659 = vld [vmem:[#allocation2 + $0x8] sm:$0xff]
        %v660 = vld [vmem:[#allocation3] sm:$0xff]
        %v661 = vld [vmem:[#allocation3 + $0x8] sm:$0xff]
        %v662 = vpack.c.bf16 %v659, %v658
        %663 = vmatprep.subr.bf16.mxu0 %v627
        %664 = vmatpush1.bf16.msra.mxu0 %v626
        %665 = vmatprep.subr.bf16.mxu0 %v631
        %666 = vmatpush1.bf16.msra.mxu0 %v630
        %667 = vmatprep.subr.bf16.mxu0 %v635
        %668 = vmatpush1.bf16.msra.mxu0 %v634
        %669 = vmatprep.subr.bf16.mxu0 %v639
        %670 = vmatpush1.bf16.msra.mxu0 %v638
        %671 = vmatprep.subr.bf16.mxu0 %v643
        %672 = vmatpush1.bf16.msra.mxu0 %v642
        %673 = vmatprep.subr.bf16.mxu0 %v647
        %674 = vmatpush1.bf16.msra.mxu0 %v646
        %675 = vmatprep.subr.bf16.mxu0 %v651
        %676 = vmatpush1.bf16.msra.mxu0 %v650
        %677 = vmatprep.subr.bf16.mxu0 %v655
        %678 = vmatpush1.bf16.msra.mxu0 %v654
        %679 = vmatprep.subr.bf16.mxu0 0
        %680 = vmatpush1.bf16.msra.mxu0 0
        %681 = vmatprep.subr.bf16.mxu0 0
        %682 = vmatpush1.bf16.msra.mxu0 0
        %683 = vmatprep.subr.bf16.mxu0 0
        %684 = vmatpush1.bf16.msra.mxu0 0
        %685 = vmatprep.subr.bf16.mxu0 0
        %686 = vmatpush1.bf16.msra.mxu0 0
        %687 = vmatprep.subr.bf16.mxu0 0
        %688 = vmatpush1.bf16.msra.mxu0 0
        %689 = vmatprep.subr.bf16.mxu0 0
        %690 = vmatpush1.bf16.msra.mxu0 0
        %691 = vmatprep.subr.bf16.mxu0 0
        %692 = vmatpush1.bf16.msra.mxu0 0
        %693 = vmatprep.subr.bf16.mxu0 0
        %694 = vmatpush1.bf16.msra.mxu0 0
        %695 = vmatprep.mubr.bf16.mxu0 0
        %696 = vmatmul.mubr.bf16.gmra.mrb[0].mxu0 %v662
        %v697 = vpop.f32.mrb[0].mxu0
        %v698 = vadd.f32 0.0, %v697
        %v699 = vpop.f32.mrb[0].mxu0
        %v700 = vadd.f32 0.0, %v699
        %v701 = vpop.f32.mrb[0].mxu0
        %v702 = vadd.f32 0.0, %v701
        %v703 = vpop.f32.mrb[0].mxu0
        %v704 = vadd.f32 0.0, %v703
        %705 = vdwg.mxu0
        %706 = vmatprep.subr.bf16.mxu0 %v629
        %707 = vmatpush1.bf16.msra.mxu0 %v628
        %708 = vmatprep.subr.bf16.mxu0 %v633
        %709 = vmatpush1.bf16.msra.mxu0 %v632
        %710 = vmatprep.subr.bf16.mxu0 %v637
        %711 = vmatpush1.bf16.msra.mxu0 %v636
        %712 = vmatprep.subr.bf16.mxu0 %v641
        %713 = vmatpush1.bf16.msra.mxu0 %v640
        %714 = vmatprep.subr.bf16.mxu0 %v645
        %715 = vmatpush1.bf16.msra.mxu0 %v644
        %716 = vmatprep.subr.bf16.mxu0 %v649
        %717 = vmatpush1.bf16.msra.mxu0 %v648
        %718 = vmatprep.subr.bf16.mxu0 %v653
        %719 = vmatpush1.bf16.msra.mxu0 %v652
        %720 = vmatprep.subr.bf16.mxu0 %v657
        %721 = vmatpush1.bf16.msra.mxu0 %v656
        %722 = vmatprep.subr.bf16.mxu0 0
        %723 = vmatpush1.bf16.msra.mxu0 0
        %724 = vmatprep.subr.bf16.mxu0 0
        %725 = vmatpush1.bf16.msra.mxu0 0
        %726 = vmatprep.subr.bf16.mxu0 0
        %727 = vmatpush1.bf16.msra.mxu0 0
        %728 = vmatprep.subr.bf16.mxu0 0
        %729 = vmatpush1.bf16.msra.mxu0 0
        %730 = vmatprep.subr.bf16.mxu0 0
        %731 = vmatpush1.bf16.msra.mxu0 0
        %732 = vmatprep.subr.bf16.mxu0 0
        %733 = vmatpush1.bf16.msra.mxu0 0
        %734 = vmatprep.subr.bf16.mxu0 0
        %735 = vmatpush1.bf16.msra.mxu0 0
        %736 = vmatprep.subr.bf16.mxu0 0
        %737 = vmatpush1.bf16.msra.mxu0 0
        %738 = vmatprep.mubr.bf16.mxu0 0
        %739 = vmatmul.mubr.bf16.gmra.mrb[0].mxu0 %v662
        %v740 = vpop.f32.mrb[0].mxu0
        %v741 = vadd.f32 0.0, %v740
        %v742 = vpop.f32.mrb[0].mxu0
        %v743 = vadd.f32 0.0, %v742
        %v744 = vpop.f32.mrb[0].mxu0
        %v745 = vadd.f32 0.0, %v744
        %v746 = vpop.f32.mrb[0].mxu0
        %v747 = vadd.f32 0.0, %v746
        %748 = vdwg.mxu0
        %v749 = vadd.f32 %v451, %v698
        %v750 = vadd.f32 %v453, %v700
        %v751 = vadd.f32 %v524, %v741
        %v752 = vadd.f32 %v526, %v743
        %v753 = vadd.f32 %v455, %v702
        %v754 = vadd.f32 %v457, %v704
        %v755 = vadd.f32 %v528, %v745
        %v756 = vadd.f32 %v530, %v747
        %v757 = vxor.u32 %v749, 2147483648
        %v758 = vxor.u32 %v750, 2147483648
        %v759 = vxor.u32 %v751, 2147483648
        %v760 = vxor.u32 %v753, 2147483648
        %v761 = vxor.u32 %v754, 2147483648
        %v762 = vxor.u32 %v755, 2147483648
        %v763 = vmul.f32 %v757, 1.442695
        %v764 = vpow.pop %v763
        %v765 = vmul.f32 %v758, 1.442695
        %v766 = vpow.pop %v765
        %v767 = vmul.f32 %v759, 1.442695
        %v768 = vpow.pop %v767
        %v769 = vmul.f32 %v760, 1.442695
        %v770 = vpow.pop %v769
        %v771 = vmul.f32 %v761, 1.442695
        %v772 = vpow.pop %v771
        %v773 = vmul.f32 %v762, 1.442695
        %v774 = vpow.pop %v773
        %v775 = vadd.f32 %v764, 1.0
        %v776 = vadd.f32 %v766, 1.0
        %v777 = vadd.f32 %v768, 1.0
        %v778 = vadd.f32 %v770, 1.0
        %v779 = vadd.f32 %v772, 1.0
        %v780 = vadd.f32 %v774, 1.0
        %v781 = vrcp.pop %v775
        %v782 = vmul.f32 1.0, %v781
        %v783 = vrcp.pop %v776
        %v784 = vmul.f32 1.0, %v783
        %v785 = vrcp.pop %v777
        %v786 = vmul.f32 1.0, %v785
        %v787 = vrcp.pop %v778
        %v788 = vmul.f32 1.0, %v787
        %v789 = vrcp.pop %v779
        %v790 = vmul.f32 1.0, %v789
        %v791 = vrcp.pop %v780
        %v792 = vmul.f32 1.0, %v791
        %v793 = vtanh.pop %v752
        %v794 = vtanh.pop %v756
        %v795 = vmul.f32 %v784, %v660
        %v796 = vmul.f32 %v790, %v661
        %v797 = vmul.f32 %v782, %v793
        %v798 = vmul.f32 %v788, %v794
        %v799 = vadd.f32 %v795, %v797
        %v800 = vadd.f32 %v796, %v798
        %v801 = vtanh.pop %v799
        %v802 = vtanh.pop %v800
        %v803 = vmul.f32 %v786, %v801
        %v804 = vmul.f32 %v792, %v802
        %v805 = vpack.c.bf16 %v804, %v803
        %806 = vmatprep.subr.bf16.mxu0 %v627
        %807 = vmatpush1.bf16.msra.mxu0 %v626
        %808 = vmatprep.subr.bf16.mxu0 %v631
        %809 = vmatpush1.bf16.msra.mxu0 %v630
        %810 = vmatprep.subr.bf16.mxu0 %v635
        %811 = vmatpush1.bf16.msra.mxu0 %v634
        %812 = vmatprep.subr.bf16.mxu0 %v639
        %813 = vmatpush1.bf16.msra.mxu0 %v638
        %814 = vmatprep.subr.bf16.mxu0 %v643
        %815 = vmatpush1.bf16.msra.mxu0 %v642
        %816 = vmatprep.subr.bf16.mxu0 %v647
        %817 = vmatpush1.bf16.msra.mxu0 %v646
        %818 = vmatprep.subr.bf16.mxu0 %v651
        %819 = vmatpush1.bf16.msra.mxu0 %v650
        %820 = vmatprep.subr.bf16.mxu0 %v655
        %821 = vmatpush1.bf16.msra.mxu0 %v654
        %822 = vmatprep.subr.bf16.mxu0 0
        %823 = vmatpush1.bf16.msra.mxu0 0
        %824 = vmatprep.subr.bf16.mxu0 0
        %825 = vmatpush1.bf16.msra.mxu0 0
        %826 = vmatprep.subr.bf16.mxu0 0
        %827 = vmatpush1.bf16.msra.mxu0 0
        %828 = vmatprep.subr.bf16.mxu0 0
        %829 = vmatpush1.bf16.msra.mxu0 0
        %830 = vmatprep.subr.bf16.mxu0 0
        %831 = vmatpush1.bf16.msra.mxu0 0
        %832 = vmatprep.subr.bf16.mxu0 0
        %833 = vmatpush1.bf16.msra.mxu0 0
        %834 = vmatprep.subr.bf16.mxu0 0
        %835 = vmatpush1.bf16.msra.mxu0 0
        %836 = vmatprep.subr.bf16.mxu0 0
        %837 = vmatpush1.bf16.msra.mxu0 0
        %838 = vmatprep.mubr.bf16.mxu0 0
        %839 = vmatmul.mubr.bf16.gmra.mrb[0].mxu0 %v805
        %v840 = vpop.f32.mrb[0].mxu0
        %v841 = vadd.f32 0.0, %v840
        %v842 = vpop.f32.mrb[0].mxu0
        %v843 = vadd.f32 0.0, %v842
        %v844 = vpop.f32.mrb[0].mxu0
        %v845 = vadd.f32 0.0, %v844
        %v846 = vpop.f32.mrb[0].mxu0
        %v847 = vadd.f32 0.0, %v846
        %848 = vdwg.mxu0
        %849 = vmatprep.subr.bf16.mxu0 %v629
        %850 = vmatpush1.bf16.msra.mxu0 %v628
        %851 = vmatprep.subr.bf16.mxu0 %v633
        %852 = vmatpush1.bf16.msra.mxu0 %v632
        %853 = vmatprep.subr.bf16.mxu0 %v637
        %854 = vmatpush1.bf16.msra.mxu0 %v636
        %855 = vmatprep.subr.bf16.mxu0 %v641
        %856 = vmatpush1.bf16.msra.mxu0 %v640
        %857 = vmatprep.subr.bf16.mxu0 %v645
        %858 = vmatpush1.bf16.msra.mxu0 %v644
        %859 = vmatprep.subr.bf16.mxu0 %v649
        %860 = vmatpush1.bf16.msra.mxu0 %v648
        %861 = vmatprep.subr.bf16.mxu0 %v653
        %862 = vmatpush1.bf16.msra.mxu0 %v652
        %863 = vmatprep.subr.bf16.mxu0 %v657
        %864 = vmatpush1.bf16.msra.mxu0 %v656
        %865 = vmatprep.subr.bf16.mxu0 0
        %866 = vmatpush1.bf16.msra.mxu0 0
        %867 = vmatprep.subr.bf16.mxu0 0
        %868 = vmatpush1.bf16.msra.mxu0 0
        %869 = vmatprep.subr.bf16.mxu0 0
        %870 = vmatpush1.bf16.msra.mxu0 0
        %871 = vmatprep.subr.bf16.mxu0 0
        %872 = vmatpush1.bf16.msra.mxu0 0
        %873 = vmatprep.subr.bf16.mxu0 0
        %874 = vmatpush1.bf16.msra.mxu0 0
        %875 = vmatprep.subr.bf16.mxu0 0
        %876 = vmatpush1.bf16.msra.mxu0 0
        %877 = vmatprep.subr.bf16.mxu0 0
        %878 = vmatpush1.bf16.msra.mxu0 0
        %879 = vmatprep.subr.bf16.mxu0 0
        %880 = vmatpush1.bf16.msra.mxu0 0
        %881 = vmatprep.mubr.bf16.mxu0 0
        %882 = vmatmul.mubr.bf16.gmra.mrb[0].mxu0 %v805
        %v883 = vpop.f32.mrb[0].mxu0
        %v884 = vadd.f32 0.0, %v883
        %v885 = vpop.f32.mrb[0].mxu0
        %v886 = vadd.f32 0.0, %v885
        %v887 = vpop.f32.mrb[0].mxu0
        %v888 = vadd.f32 0.0, %v887
        %v889 = vpop.f32.mrb[0].mxu0
        %v890 = vadd.f32 0.0, %v889
        %891 = vdwg.mxu0
        %v892 = vadd.f32 %v461, %v841
        %v893 = vadd.f32 %v463, %v843
        %v894 = vadd.f32 %v534, %v884
        %v895 = vadd.f32 %v536, %v886
        %v896 = vadd.f32 %v465, %v845
        %v897 = vadd.f32 %v467, %v847
        %v898 = vadd.f32 %v538, %v888
        %v899 = vadd.f32 %v540, %v890
        %v900 = vxor.u32 %v892, 2147483648
        %v901 = vxor.u32 %v893, 2147483648
        %v902 = vxor.u32 %v894, 2147483648
        %v903 = vxor.u32 %v896, 2147483648
        %v904 = vxor.u32 %v897, 2147483648
        %v905 = vxor.u32 %v898, 2147483648
        %v906 = vmul.f32 %v900, 1.442695
        %v907 = vpow.pop %v906
        %v908 = vmul.f32 %v901, 1.442695
        %v909 = vpow.pop %v908
        %v910 = vmul.f32 %v902, 1.442695
        %v911 = vpow.pop %v910
        %v912 = vmul.f32 %v903, 1.442695
        %v913 = vpow.pop %v912
        %v914 = vmul.f32 %v904, 1.442695
        %v915 = vpow.pop %v914
        %v916 = vmul.f32 %v905, 1.442695
        %v917 = vpow.pop %v916
        %v918 = vadd.f32 %v907, 1.0
        %v919 = vadd.f32 %v909, 1.0
        %v920 = vadd.f32 %v911, 1.0
        %v921 = vadd.f32 %v913, 1.0
        %v922 = vadd.f32 %v915, 1.0
        %v923 = vadd.f32 %v917, 1.0
        %v924 = vrcp.pop %v918
        %v925 = vmul.f32 1.0, %v924
        %v926 = vrcp.pop %v919
        %v927 = vmul.f32 1.0, %v926
        %v928 = vrcp.pop %v920
        %v929 = vmul.f32 1.0, %v928
        %v930 = vrcp.pop %v921
        %v931 = vmul.f32 1.0, %v930
        %v932 = vrcp.pop %v922
        %v933 = vmul.f32 1.0, %v932
        %v934 = vrcp.pop %v923
        %v935 = vmul.f32 1.0, %v934
        %v936 = vtanh.pop %v895
        %v937 = vtanh.pop %v899
        %v938 = vmul.f32 %v927, %v799
        %v939 = vmul.f32 %v933, %v800
        %v940 = vmul.f32 %v925, %v936
        %v941 = vmul.f32 %v931, %v937
        %v942 = vadd.f32 %v938, %v940
        %v943 = vadd.f32 %v939, %v941
        %v944 = vtanh.pop %v942
        %v945 = vtanh.pop %v943
        %v946 = vmul.f32 %v929, %v944
        %v947 = vmul.f32 %v935, %v945
        %v948 = vpack.c.bf16 %v947, %v946
        %949 = vmatprep.subr.bf16.mxu0 %v627
        %950 = vmatpush1.bf16.msra.mxu0 %v626
        %951 = vmatprep.subr.bf16.mxu0 %v631
        %952 = vmatpush1.bf16.msra.mxu0 %v630
        %953 = vmatprep.subr.bf16.mxu0 %v635
        %954 = vmatpush1.bf16.msra.mxu0 %v634
        %955 = vmatprep.subr.bf16.mxu0 %v639
        %956 = vmatpush1.bf16.msra.mxu0 %v638
        %957 = vmatprep.subr.bf16.mxu0 %v643
        %958 = vmatpush1.bf16.msra.mxu0 %v642
        %959 = vmatprep.subr.bf16.mxu0 %v647
        %960 = vmatpush1.bf16.msra.mxu0 %v646
        %961 = vmatprep.subr.bf16.mxu0 %v651
        %962 = vmatpush1.bf16.msra.mxu0 %v650
        %963 = vmatprep.subr.bf16.mxu0 %v655
        %964 = vmatpush1.bf16.msra.mxu0 %v654
        %965 = vmatprep.subr.bf16.mxu0 0
        %966 = vmatpush1.bf16.msra.mxu0 0
        %967 = vmatprep.subr.bf16.mxu0 0
        %968 = vmatpush1.bf16.msra.mxu0 0
        %969 = vmatprep.subr.bf16.mxu0 0
        %970 = vmatpush1.bf16.msra.mxu0 0
        %971 = vmatprep.subr.bf16.mxu0 0
        %972 = vmatpush1.bf16.msra.mxu0 0
        %973 = vmatprep.subr.bf16.mxu0 0
        %974 = vmatpush1.bf16.msra.mxu0 0
        %975 = vmatprep.subr.bf16.mxu0 0
        %976 = vmatpush1.bf16.msra.mxu0 0
        %977 = vmatprep.subr.bf16.mxu0 0
        %978 = vmatpush1.bf16.msra.mxu0 0
        %979 = vmatprep.subr.bf16.mxu0 0
        %980 = vmatpush1.bf16.msra.mxu0 0
        %981 = vmatprep.mubr.bf16.mxu0 0
        %982 = vmatmul.mubr.bf16.gmra.mrb[0].mxu0 %v948
        %v983 = vpop.f32.mrb[0].mxu0
        %v984 = vadd.f32 0.0, %v983
        %v985 = vpop.f32.mrb[0].mxu0
        %v986 = vadd.f32 0.0, %v985
        %v987 = vpop.f32.mrb[0].mxu0
        %v988 = vadd.f32 0.0, %v987
        %v989 = vpop.f32.mrb[0].mxu0
        %v990 = vadd.f32 0.0, %v989
        %991 = vdwg.mxu0
        %992 = vmatprep.subr.bf16.mxu0 %v629
        %993 = vmatpush1.bf16.msra.mxu0 %v628
        %994 = vmatprep.subr.bf16.mxu0 %v633
        %995 = vmatpush1.bf16.msra.mxu0 %v632
        %996 = vmatprep.subr.bf16.mxu0 %v637
        %997 = vmatpush1.bf16.msra.mxu0 %v636
        %998 = vmatprep.subr.bf16.mxu0 %v641
        %999 = vmatpush1.bf16.msra.mxu0 %v640
        %1000 = vmatprep.subr.bf16.mxu0 %v645
        %1001 = vmatpush1.bf16.msra.mxu0 %v644
        %1002 = vmatprep.subr.bf16.mxu0 %v649
        %1003 = vmatpush1.bf16.msra.mxu0 %v648
        %1004 = vmatprep.subr.bf16.mxu0 %v653
        %1005 = vmatpush1.bf16.msra.mxu0 %v652
        %1006 = vmatprep.subr.bf16.mxu0 %v657
        %1007 = vmatpush1.bf16.msra.mxu0 %v656
        %1008 = vmatprep.subr.bf16.mxu0 0
        %1009 = vmatpush1.bf16.msra.mxu0 0
        %1010 = vmatprep.subr.bf16.mxu0 0
        %1011 = vmatpush1.bf16.msra.mxu0 0
        %1012 = vmatprep.subr.bf16.mxu0 0
        %1013 = vmatpush1.bf16.msra.mxu0 0
        %1014 = vmatprep.subr.bf16.mxu0 0
        %1015 = vmatpush1.bf16.msra.mxu0 0
        %1016 = vmatprep.subr.bf16.mxu0 0
        %1017 = vmatpush1.bf16.msra.mxu0 0
        %1018 = vmatprep.subr.bf16.mxu0 0
        %1019 = vmatpush1.bf16.msra.mxu0 0
        %1020 = vmatprep.subr.bf16.mxu0 0
        %1021 = vmatpush1.bf16.msra.mxu0 0
        %1022 = vmatprep.subr.bf16.mxu0 0
        %1023 = vmatpush1.bf16.msra.mxu0 0
        %1024 = vmatprep.mubr.bf16.mxu0 0
        %1025 = vmatmul.mubr.bf16.gmra.mrb[0].mxu0 %v948
        %v1026 = vpop.f32.mrb[0].mxu0
        %v1027 = vadd.f32 0.0, %v1026
        %v1028 = vpop.f32.mrb[0].mxu0
        %v1029 = vadd.f32 0.0, %v1028
        %v1030 = vpop.f32.mrb[0].mxu0
        %v1031 = vadd.f32 0.0, %v1030
        %v1032 = vpop.f32.mrb[0].mxu0
        %v1033 = vadd.f32 0.0, %v1032
        %1034 = vdwg.mxu0
        %v1035 = vadd.f32 %v471, %v984
        %v1036 = vadd.f32 %v473, %v986
        %v1037 = vadd.f32 %v544, %v1027
        %v1038 = vadd.f32 %v546, %v1029
        %v1039 = vadd.f32 %v475, %v988
        %v1040 = vadd.f32 %v477, %v990
        %v1041 = vadd.f32 %v548, %v1031
        %v1042 = vadd.f32 %v550, %v1033
        %v1043 = vxor.u32 %v1035, 2147483648
        %v1044 = vxor.u32 %v1036, 2147483648
        %v1045 = vxor.u32 %v1037, 2147483648
        %v1046 = vxor.u32 %v1039, 2147483648
        %v1047 = vxor.u32 %v1040, 2147483648
        %v1048 = vxor.u32 %v1041, 2147483648
        %v1049 = vmul.f32 %v1043, 1.442695
        %v1050 = vpow.pop %v1049
        %v1051 = vmul.f32 %v1044, 1.442695
        %v1052 = vpow.pop %v1051
        %v1053 = vmul.f32 %v1045, 1.442695
        %v1054 = vpow.pop %v1053
        %v1055 = vmul.f32 %v1046, 1.442695
        %v1056 = vpow.pop %v1055
        %v1057 = vmul.f32 %v1047, 1.442695
        %v1058 = vpow.pop %v1057
        %v1059 = vmul.f32 %v1048, 1.442695
        %v1060 = vpow.pop %v1059
        %v1061 = vadd.f32 %v1050, 1.0
        %v1062 = vadd.f32 %v1052, 1.0
        %v1063 = vadd.f32 %v1054, 1.0
        %v1064 = vadd.f32 %v1056, 1.0
        %v1065 = vadd.f32 %v1058, 1.0
        %v1066 = vadd.f32 %v1060, 1.0
        %v1067 = vrcp.pop %v1061
        %v1068 = vmul.f32 1.0, %v1067
        %v1069 = vrcp.pop %v1062
        %v1070 = vmul.f32 1.0, %v1069
        %v1071 = vrcp.pop %v1063
        %v1072 = vmul.f32 1.0, %v1071
        %v1073 = vrcp.pop %v1064
        %v1074 = vmul.f32 1.0, %v1073
        %v1075 = vrcp.pop %v1065
        %v1076 = vmul.f32 1.0, %v1075
        %v1077 = vrcp.pop %v1066
        %v1078 = vmul.f32 1.0, %v1077
        %v1079 = vtanh.pop %v1038
        %v1080 = vtanh.pop %v1042
        %v1081 = vmul.f32 %v1070, %v942
        %v1082 = vmul.f32 %v1076, %v943
        %v1083 = vmul.f32 %v1068, %v1079
        %v1084 = vmul.f32 %v1074, %v1080
        %v1085 = vadd.f32 %v1081, %v1083
        %v1086 = vadd.f32 %v1082, %v1084
        %v1087 = vtanh.pop %v1085
        %v1088 = vtanh.pop %v1086
        %v1089 = vmul.f32 %v1072, %v1087
        %v1090 = vmul.f32 %v1078, %v1088
        %v1091 = vpack.c.bf16 %v1090, %v1089
        %1092 = vmatprep.subr.bf16.mxu0 %v627
        %1093 = vmatpush1.bf16.msra.mxu0 %v626
        %1094 = vmatprep.subr.bf16.mxu0 %v631
        %1095 = vmatpush1.bf16.msra.mxu0 %v630
        %1096 = vmatprep.subr.bf16.mxu0 %v635
        %1097 = vmatpush1.bf16.msra.mxu0 %v634
        %1098 = vmatprep.subr.bf16.mxu0 %v639
        %1099 = vmatpush1.bf16.msra.mxu0 %v638
        %1100 = vmatprep.subr.bf16.mxu0 %v643
        %1101 = vmatpush1.bf16.msra.mxu0 %v642
        %1102 = vmatprep.subr.bf16.mxu0 %v647
        %1103 = vmatpush1.bf16.msra.mxu0 %v646
        %1104 = vmatprep.subr.bf16.mxu0 %v651
        %1105 = vmatpush1.bf16.msra.mxu0 %v650
        %1106 = vmatprep.subr.bf16.mxu0 %v655
        %1107 = vmatpush1.bf16.msra.mxu0 %v654
        %1108 = vmatprep.subr.bf16.mxu0 0
        %1109 = vmatpush1.bf16.msra.mxu0 0
        %1110 = vmatprep.subr.bf16.mxu0 0
        %1111 = vmatpush1.bf16.msra.mxu0 0
        %1112 = vmatprep.subr.bf16.mxu0 0
        %1113 = vmatpush1.bf16.msra.mxu0 0
        %1114 = vmatprep.subr.bf16.mxu0 0
        %1115 = vmatpush1.bf16.msra.mxu0 0
        %1116 = vmatprep.subr.bf16.mxu0 0
        %1117 = vmatpush1.bf16.msra.mxu0 0
        %1118 = vmatprep.subr.bf16.mxu0 0
        %1119 = vmatpush1.bf16.msra.mxu0 0
        %1120 = vmatprep.subr.bf16.mxu0 0
        %1121 = vmatpush1.bf16.msra.mxu0 0
        %1122 = vmatprep.subr.bf16.mxu0 0
        %1123 = vmatpush1.bf16.msra.mxu0 0
        %1124 = vmatprep.mubr.bf16.mxu0 0
        %1125 = vmatmul.mubr.bf16.gmra.mrb[0].mxu0 %v1091
        %v1126 = vpop.f32.mrb[0].mxu0
        %v1127 = vadd.f32 0.0, %v1126
        %v1128 = vpop.f32.mrb[0].mxu0
        %v1129 = vadd.f32 0.0, %v1128
        %v1130 = vpop.f32.mrb[0].mxu0
        %v1131 = vadd.f32 0.0, %v1130
        %v1132 = vpop.f32.mrb[0].mxu0
        %v1133 = vadd.f32 0.0, %v1132
        %1134 = vdwg.mxu0
        %1135 = vmatprep.subr.bf16.mxu0 %v629
        %1136 = vmatpush1.bf16.msra.mxu0 %v628
        %1137 = vmatprep.subr.bf16.mxu0 %v633
        %1138 = vmatpush1.bf16.msra.mxu0 %v632
        %1139 = vmatprep.subr.bf16.mxu0 %v637
        %1140 = vmatpush1.bf16.msra.mxu0 %v636
        %1141 = vmatprep.subr.bf16.mxu0 %v641
        %1142 = vmatpush1.bf16.msra.mxu0 %v640
        %1143 = vmatprep.subr.bf16.mxu0 %v645
        %1144 = vmatpush1.bf16.msra.mxu0 %v644
        %1145 = vmatprep.subr.bf16.mxu0 %v649
        %1146 = vmatpush1.bf16.msra.mxu0 %v648
        %1147 = vmatprep.subr.bf16.mxu0 %v653
        %1148 = vmatpush1.bf16.msra.mxu0 %v652
        %1149 = vmatprep.subr.bf16.mxu0 %v657
        %1150 = vmatpush1.bf16.msra.mxu0 %v656
        %1151 = vmatprep.subr.bf16.mxu0 0
        %1152 = vmatpush1.bf16.msra.mxu0 0
        %1153 = vmatprep.subr.bf16.mxu0 0
        %1154 = vmatpush1.bf16.msra.mxu0 0
        %1155 = vmatprep.subr.bf16.mxu0 0
        %1156 = vmatpush1.bf16.msra.mxu0 0
        %1157 = vmatprep.subr.bf16.mxu0 0
        %1158 = vmatpush1.bf16.msra.mxu0 0
        %1159 = vmatprep.subr.bf16.mxu0 0
        %1160 = vmatpush1.bf16.msra.mxu0 0
        %1161 = vmatprep.subr.bf16.mxu0 0
        %1162 = vmatpush1.bf16.msra.mxu0 0
        %1163 = vmatprep.subr.bf16.mxu0 0
        %1164 = vmatpush1.bf16.msra.mxu0 0
        %1165 = vmatprep.subr.bf16.mxu0 0
        %1166 = vmatpush1.bf16.msra.mxu0 0
        %1167 = vmatprep.mubr.bf16.mxu0 0
        %1168 = vmatmul.mubr.bf16.gmra.mrb[0].mxu0 %v1091
        %v1169 = vpop.f32.mrb[0].mxu0
        %v1170 = vadd.f32 0.0, %v1169
        %v1171 = vpop.f32.mrb[0].mxu0
        %v1172 = vadd.f32 0.0, %v1171
        %v1173 = vpop.f32.mrb[0].mxu0
        %v1174 = vadd.f32 0.0, %v1173
        %v1175 = vpop.f32.mrb[0].mxu0
        %v1176 = vadd.f32 0.0, %v1175
        %1177 = vdwg.mxu0
        %v1178 = vadd.f32 %v481, %v1127
        %v1179 = vadd.f32 %v483, %v1129
        %v1180 = vadd.f32 %v554, %v1170
        %v1181 = vadd.f32 %v556, %v1172
        %v1182 = vadd.f32 %v485, %v1131
        %v1183 = vadd.f32 %v487, %v1133
        %v1184 = vadd.f32 %v558, %v1174
        %v1185 = vadd.f32 %v560, %v1176
        %v1186 = vxor.u32 %v1178, 2147483648
        %v1187 = vxor.u32 %v1179, 2147483648
        %v1188 = vxor.u32 %v1180, 2147483648
        %v1189 = vxor.u32 %v1182, 2147483648
        %v1190 = vxor.u32 %v1183, 2147483648
        %v1191 = vxor.u32 %v1184, 2147483648
        %v1192 = vmul.f32 %v1186, 1.442695
        %v1193 = vpow.pop %v1192
        %v1194 = vmul.f32 %v1187, 1.442695
        %v1195 = vpow.pop %v1194
        %v1196 = vmul.f32 %v1188, 1.442695
        %v1197 = vpow.pop %v1196
        %v1198 = vmul.f32 %v1189, 1.442695
        %v1199 = vpow.pop %v1198
        %v1200 = vmul.f32 %v1190, 1.442695
        %v1201 = vpow.pop %v1200
        %v1202 = vmul.f32 %v1191, 1.442695
        %v1203 = vpow.pop %v1202
        %v1204 = vadd.f32 %v1193, 1.0
        %v1205 = vadd.f32 %v1195, 1.0
        %v1206 = vadd.f32 %v1197, 1.0
        %v1207 = vadd.f32 %v1199, 1.0
        %v1208 = vadd.f32 %v1201, 1.0
        %v1209 = vadd.f32 %v1203, 1.0
        %v1210 = vrcp.pop %v1204
        %v1211 = vmul.f32 1.0, %v1210
        %v1212 = vrcp.pop %v1205
        %v1213 = vmul.f32 1.0, %v1212
        %v1214 = vrcp.pop %v1206
        %v1215 = vmul.f32 1.0, %v1214
        %v1216 = vrcp.pop %v1207
        %v1217 = vmul.f32 1.0, %v1216
        %v1218 = vrcp.pop %v1208
        %v1219 = vmul.f32 1.0, %v1218
        %v1220 = vrcp.pop %v1209
        %v1221 = vmul.f32 1.0, %v1220
        %v1222 = vtanh.pop %v1181
        %v1223 = vtanh.pop %v1185
        %v1224 = vmul.f32 %v1213, %v1085
        %v1225 = vmul.f32 %v1219, %v1086
        %v1226 = vmul.f32 %v1211, %v1222
        %v1227 = vmul.f32 %v1217, %v1223
        %v1228 = vadd.f32 %v1224, %v1226
        %v1229 = vadd.f32 %v1225, %v1227
        %v1230 = vtanh.pop %v1228
        %v1231 = vtanh.pop %v1229
        %v1232 = vmul.f32 %v1215, %v1230
        %v1233 = vmul.f32 %v1221, %v1231
        %1234 = vst [vmem:[#allocation2] sm:$0xff] %v1232
        %1235 = vst [vmem:[#allocation2 + $0x8] sm:$0xff] %v1233
        %1236 = vst [vmem:[#allocation3] sm:$0xff] %v1228
        %1237 = vst [vmem:[#allocation3 + $0x8] sm:$0xff] %v1229
        %p1238 = scmp.eq.s32.totalorder %s20, 1
        // Predicated region
        $region41: #{joint_embeder_forward.6} parent=35 // pred_check
          %p1239 = pneg %p1238
        $region42: #{joint_embeder_forward.6} parent=35 // pred_check_branch
          %1241 = sbr.rel (%p1239) target = $region44
        $region43: #{joint_embeder_forward.6} parent=35 // pred_region
          %1242 = vst [vmem:[%s252] sm:$0xff] %v1232
          %1243 = vst [vmem:[%s252 + $0x8] sm:$0xff] %v1233
        $region44: #{joint_embeder_forward.6} parent=35 // pred_fallthru
          _
        %s1244 = sand.u32 %s141, 1
        %s1245 = sand.u32 %s141, 1
        %s1246 = smul.addr %s1245, 16
        %s1247 = scalar_lea.vmem [#allocation4], %s1246
        // Predicated region
        $region45: #{joint_embeder_forward.6} parent=35 // pred_check
          %p1248 = pneg %p151
        $region46: #{joint_embeder_forward.6} parent=35 // pred_check_branch
          %1250 = sbr.rel (%p1248) target = $region48
        $region47: #{joint_embeder_forward.6} parent=35 // pred_region
          %s1251 = smul.addr %s19, 8
          %s1252 = scalar_lea.vmem %s4, %s1251
          // Predicated region
          $region49: #{joint_embeder_forward.6} parent=47 // pred_check
            _
          $region50: #{joint_embeder_forward.6} parent=47 // pred_check_branch
            %1254 = sbr.rel (0) target = $region52
          $region51: #{joint_embeder_forward.6} parent=47 // pred_region
            // Predicated region
            $region53: #{joint_embeder_forward.6} parent=51 // pred_check
              _
            $region54: #{joint_embeder_forward.6} parent=51 // pred_check_branch
              %1256 = sbr.rel (0) target = $region56
            $region55: #{joint_embeder_forward.6} parent=51 // pred_region
              // Predicated region
              $region68: #{joint_embeder_forward.6} parent=55 // pred_check
                _
              $region69: #{joint_embeder_forward.6} parent=55 // pred_check_branch
                %1273 = sbr.rel (0) target = $region71
              $region70: #{joint_embeder_forward.6} parent=55 // pred_region
                loop: start=0, step=1, limit=1
                $region72: #{joint_embeder_forward.6} parent=70 // loop_pre_header
                  _
                $region73: #{joint_embeder_forward.6} parent=70 // loop_header
                  %s1275 = sphi 0, %s1279
                  %p1276 = scmp.ge.s32.totalorder %s1275, 1
                  %s1280 = sphi %s1247, %s1247
                  %s1281 = sphi %s1252, %s1252
                $region74: #{joint_embeder_forward.6} parent=70 // loop_header_branch
                  %1278 = sbr.rel (%p1276) target = $region78
                $region75: #{joint_embeder_forward.6} parent=70 // loop_body
                  %v1282 = vld [vmem:[%s1280] sm:$0xff]
                  %1283 = vst [vmem:[%s1281] sm:$0xff] %v1282
                  %v1284 = vld [vmem:[%s1280 + $0x8] sm:$0xff]
                  %1285 = vst [vmem:[%s1281 + $0x10] sm:$0xff] %v1284
                $region76: #{joint_embeder_forward.6} parent=70 // loop_footer
                  %s1279 = sadd.s32 1, %s1275
                $region77: #{joint_embeder_forward.6} parent=70 // loop_footer_branch
                  %1274 = sbr.rel target = $region73
                $region78: #{joint_embeder_forward.6} parent=70 // loop_exit
                  _
              $region71: #{joint_embeder_forward.6} parent=55 // pred_fallthru
                _
              // Predicated region
              $region79: #{joint_embeder_forward.6} parent=55 // pred_check
                _
              $region80: #{joint_embeder_forward.6} parent=55 // pred_check_branch
                %1287 = sbr.rel target = $region82
              $region81: #{joint_embeder_forward.6} parent=55 // pred_region
                _
              $region82: #{joint_embeder_forward.6} parent=55 // pred_fallthru
                _
            $region56: #{joint_embeder_forward.6} parent=51 // pred_fallthru
              _
            // Predicated region
            $region57: #{joint_embeder_forward.6} parent=51 // pred_check
              _
            $region58: #{joint_embeder_forward.6} parent=51 // pred_check_branch
              %1258 = sbr.rel target = $region60
            $region59: #{joint_embeder_forward.6} parent=51 // pred_region
              loop: start=0, step=1, limit=1
              $region61: #{joint_embeder_forward.6} parent=59 // loop_pre_header
                _
              $region62: #{joint_embeder_forward.6} parent=59 // loop_header
                %s1261 = sphi 0, %s1265
                %p1262 = scmp.ge.s32.totalorder %s1261, 1
                %s1266 = sphi %s1247, %s1247
                %s1267 = sphi %s1252, %s1252
              $region63: #{joint_embeder_forward.6} parent=59 // loop_header_branch
                %1264 = sbr.rel (%p1262) target = $region67
              $region64: #{joint_embeder_forward.6} parent=59 // loop_body
                %v1268 = vld [vmem:[%s1266] sm:$0xff]
                %1269 = vst [vmem:[%s1267] sm:$0xff] %v1268
                %v1270 = vld [vmem:[%s1266 + $0x8] sm:$0xff]
                %1271 = vst [vmem:[%s1267 + $0x10] sm:$0xff] %v1270
              $region65: #{joint_embeder_forward.6} parent=59 // loop_footer
                %s1265 = sadd.s32 1, %s1261
              $region66: #{joint_embeder_forward.6} parent=59 // loop_footer_branch
                %1260 = sbr.rel target = $region62
              $region67: #{joint_embeder_forward.6} parent=59 // loop_exit
                _
            $region60: #{joint_embeder_forward.6} parent=51 // pred_fallthru
              _
          $region52: #{joint_embeder_forward.6} parent=47 // pred_fallthru
            _
          %1288 = vnop
        $region48: #{joint_embeder_forward.6} parent=35 // pred_fallthru
          _
      $region36: #{joint_embeder_forward.6} parent=5 // pred_fallthru
        _
      %p1289 = scmp.le.s32.totalorder 2, %s10
      // Predicated region
      $region83: #{joint_embeder_forward.6} parent=5 // pred_check
        %p1290 = pneg %p1289
      $region84: #{joint_embeder_forward.6} parent=5 // pred_check_branch
        %1292 = sbr.rel (%p1290) target = $region86
      $region85: #{joint_embeder_forward.6} parent=5 // pred_region
        %s1293 = ssub.s32 %s10, 2
        // Predicated region
        $region87: #{joint_embeder_forward.6} parent=85 // pred_check
          %p1294 = pneg %p157
        $region88: #{joint_embeder_forward.6} parent=85 // pred_check_branch
          %1296 = sbr.rel (%p1294) target = $region90
        $region89: #{joint_embeder_forward.6} parent=85 // pred_region
          %s1297 = sand.u32 %s142, 1
          %s1298 = sand.u32 %s142, 1
          %s1299 = smul.addr %s1298, 16
          %s1300 = scalar_lea.vmem [#allocation4], %s1299
        $region90: #{joint_embeder_forward.6} parent=85 // pred_fallthru
          _
      $region86: #{joint_embeder_forward.6} parent=5 // pred_fallthru
        _
    $region6: #{joint_embeder_forward.6} parent=1 // loop_footer
      %s14 = sadd.s32 1, %s10
    $region7: #{joint_embeder_forward.6} parent=1 // loop_footer_branch
      %9 = sbr.rel target = $region3
    $region8: #{joint_embeder_forward.6} parent=1 // loop_exit
      _

// kernel: joint_embeder_forward.7
$region0: #{joint_embeder_forward.7}
  #allocation0 [shape = 'u32[]', space=smem, size = 0x4, offset = 0x4, fixed_abs, tag = 'smem constant byte address 0x4 - core index']
  #allocation1 [shape = 'u32[144,128]{1,0:T(1,128)}', space=vmem, size = 0x12000, scoped, tag = 'internal scratch']
  %s0 = inlined_call_operand.vmem [shape: f32[8,256], index: 0, kind: input, shape index: {}]
  %s1 = inlined_call_operand.vmem [shape: f32[8,256], index: 1, kind: input, shape index: {}]
  %s2 = inlined_call_operand.vmem [shape: f32[8,16,128], index: 2, kind: input, shape index: {}]
  %s3 = inlined_call_operand.vmem [shape: f32[16,256], index: 3, kind: input, shape index: {}]
  %s4 = inlined_call_operand.vmem [shape: f32[256,256], index: 4, kind: input, shape index: {}]
  %s5 = inlined_call_operand.vmem [shape: f32[256,256], index: 5, kind: input, shape index: {}]
  %s6 = inlined_call_operand.vmem [shape: f32[128,256], index: 6, kind: input, shape index: {}]
  %s7 = inlined_call_operand.vmem [shape: f32[1,256], index: 7, kind: input, shape index: {}]
  %s8 = inlined_call_operand.hbm [shape: f32[1,8], index: 8, kind: output, shape index: {}]
  %s9 = sld [smem:[#allocation0]]
  $region42: #{joint_embeder_forward.7} parent=0
    _
  %s11 = ssub.s32 1, %s9
  %s12 = scalar_select 0, %s11, %s9
  $region1: #{joint_embeder_forward.7} parent=0
    #allocation2 [shape = 'u8[512]{0}', space=vmem, size = 0x400, scoped, tag = 'output window, operand 0, single buffered']
    #allocation3 [shape = 's32[1]{0}', space=sflag, size = 0x4, scoped, tag = 'scoped memory for joint_embeder_forward.7']
    %13 = vsyncpa [#allocation3], 0
    // Predicated region
    $region2: #{joint_embeder_forward.7} parent=1 // pred_check
      _
    $region3: #{joint_embeder_forward.7} parent=1 // pred_check_branch
      %15 = sbr.rel (0) target = $region5
    $region4: #{joint_embeder_forward.7} parent=1 // pred_region
      _
    $region5: #{joint_embeder_forward.7} parent=1 // pred_fallthru
      _
    // Predicated region
    $region6: #{joint_embeder_forward.7} parent=1 // pred_check
      _
    $region7: #{joint_embeder_forward.7} parent=1 // pred_check_branch
      %17 = sbr.rel (0) target = $region9
    $region8: #{joint_embeder_forward.7} parent=1 // pred_region
      _
    $region9: #{joint_embeder_forward.7} parent=1 // pred_fallthru
      _
    // Predicated region
    $region10: #{joint_embeder_forward.7} parent=1 // pred_check
      _
    $region11: #{joint_embeder_forward.7} parent=1 // pred_check_branch
      %19 = sbr.rel (0) target = $region13
    $region12: #{joint_embeder_forward.7} parent=1 // pred_region
      _
    $region13: #{joint_embeder_forward.7} parent=1 // pred_fallthru
      _
    // Predicated region
    $region14: #{joint_embeder_forward.7} parent=1 // pred_check
      _
    $region15: #{joint_embeder_forward.7} parent=1 // pred_check_branch
      %21 = sbr.rel (0) target = $region17
    $region16: #{joint_embeder_forward.7} parent=1 // pred_region
      _
    $region17: #{joint_embeder_forward.7} parent=1 // pred_fallthru
      _
    // Predicated region
    $region18: #{joint_embeder_forward.7} parent=1 // pred_check
      _
    $region19: #{joint_embeder_forward.7} parent=1 // pred_check_branch
      %23 = sbr.rel (0) target = $region21
    $region20: #{joint_embeder_forward.7} parent=1 // pred_region
      _
    $region21: #{joint_embeder_forward.7} parent=1 // pred_fallthru
      _
    // Predicated region
    $region22: #{joint_embeder_forward.7} parent=1 // pred_check
      _
    $region23: #{joint_embeder_forward.7} parent=1 // pred_check_branch
      %25 = sbr.rel (0) target = $region25
    $region24: #{joint_embeder_forward.7} parent=1 // pred_region
      _
    $region25: #{joint_embeder_forward.7} parent=1 // pred_fallthru
      _
    // Predicated region
    $region26: #{joint_embeder_forward.7} parent=1 // pred_check
      _
    $region27: #{joint_embeder_forward.7} parent=1 // pred_check_branch
      %27 = sbr.rel (0) target = $region29
    $region28: #{joint_embeder_forward.7} parent=1 // pred_region
      _
    $region29: #{joint_embeder_forward.7} parent=1 // pred_fallthru
      _
    // Predicated region
    $region30: #{joint_embeder_forward.7} parent=1 // pred_check
      _
    $region31: #{joint_embeder_forward.7} parent=1 // pred_check_branch
      %29 = sbr.rel (0) target = $region33
    $region32: #{joint_embeder_forward.7} parent=1 // pred_region
      _
    $region33: #{joint_embeder_forward.7} parent=1 // pred_fallthru
      _
    %v31 = vld [vmem:[%s2] sm:$0xff]
    %v32 = vld [vmem:[%s2 + $0x8] sm:$0xff]
    %v33 = vld [vmem:[%s2 + $0x10] sm:$0xff]
    %v34 = vld [vmem:[%s2 + $0x18] sm:$0xff]
    %v35 = vld [vmem:[%s2 + $0x20] sm:$0xff]
    %v36 = vld [vmem:[%s2 + $0x28] sm:$0xff]
    %v37 = vld [vmem:[%s2 + $0x30] sm:$0xff]
    %v38 = vld [vmem:[%s2 + $0x38] sm:$0xff]
    %v39 = vld [vmem:[%s2 + $0x40] sm:$0xff]
    %v40 = vld [vmem:[%s2 + $0x48] sm:$0xff]
    %v41 = vld [vmem:[%s2 + $0x50] sm:$0xff]
    %v42 = vld [vmem:[%s2 + $0x58] sm:$0xff]
    %v43 = vld [vmem:[%s2 + $0x60] sm:$0xff]
    %v44 = vld [vmem:[%s2 + $0x68] sm:$0xff]
    %v45 = vld [vmem:[%s2 + $0x70] sm:$0xff]
    %v46 = vld [vmem:[%s2 + $0x78] sm:$0xff]
    %v47 = vmax.f32 %v31, %v32
    %v48 = vrot.slane %v47, 4
    %v49 = vmax.f32 %v47, %v48
    %v50 = vrot.slane %v49, 2
    %v51 = vmax.f32 %v49, %v50
    %v52 = vrot.slane %v51, 1
    %v53 = vmax.f32 %v51, %v52
    %v54 = vmax.f32 %v33, %v34
    %v55 = vrot.slane %v54, 4
    %v56 = vmax.f32 %v54, %v55
    %v57 = vrot.slane %v56, 2
    %v58 = vmax.f32 %v56, %v57
    %v59 = vrot.slane %v58, 1
    %v60 = vmax.f32 %v58, %v59
    %v61 = vmax.f32 %v35, %v36
    %v62 = vrot.slane %v61, 4
    %v63 = vmax.f32 %v61, %v62
    %v64 = vrot.slane %v63, 2
    %v65 = vmax.f32 %v63, %v64
    %v66 = vrot.slane %v65, 1
    %v67 = vmax.f32 %v65, %v66
    %v68 = vmax.f32 %v37, %v38
    %v69 = vrot.slane %v68, 4
    %v70 = vmax.f32 %v68, %v69
    %v71 = vrot.slane %v70, 2
    %v72 = vmax.f32 %v70, %v71
    %v73 = vrot.slane %v72, 1
    %v74 = vmax.f32 %v72, %v73
    %v75 = vmax.f32 %v39, %v40
    %v76 = vrot.slane %v75, 4
    %v77 = vmax.f32 %v75, %v76
    %v78 = vrot.slane %v77, 2
    %v79 = vmax.f32 %v77, %v78
    %v80 = vrot.slane %v79, 1
    %v81 = vmax.f32 %v79, %v80
    %v82 = vmax.f32 %v41, %v42
    %v83 = vrot.slane %v82, 4
    %v84 = vmax.f32 %v82, %v83
    %v85 = vrot.slane %v84, 2
    %v86 = vmax.f32 %v84, %v85
    %v87 = vrot.slane %v86, 1
    %v88 = vmax.f32 %v86, %v87
    %v89 = vmax.f32 %v43, %v44
    %v90 = vrot.slane %v89, 4
    %v91 = vmax.f32 %v89, %v90
    %v92 = vrot.slane %v91, 2
    %v93 = vmax.f32 %v91, %v92
    %v94 = vrot.slane %v93, 1
    %v95 = vmax.f32 %v93, %v94
    %v96 = vmax.f32 %v45, %v46
    %v97 = vrot.slane %v96, 4
    %v98 = vmax.f32 %v96, %v97
    %v99 = vrot.slane %v98, 2
    %v100 = vmax.f32 %v98, %v99
    %v101 = vrot.slane %v100, 1
    %v102 = vmax.f32 %v100, %v101
    %v103 = vtanh.pop %v53
    %v104 = vtanh.pop %v60
    %v105 = vtanh.pop %v67
    %v106 = vtanh.pop %v74
    %v107 = vtanh.pop %v81
    %v108 = vtanh.pop %v88
    %v109 = vtanh.pop %v95
    %v110 = vtanh.pop %v102
    %v111 = vld [vmem:[%s0] sm:$0xff]
    %v112 = vld [vmem:[%s0 + $0x8] sm:$0xff]
    %v113 = vpack.c.bf16 %v111, %v111
    %v114 = vpack.c.bf16 %v112, %v112
    %v115 = vld [vmem:[%s4] sm:$0xff]
    %v116 = vld [vmem:[%s4 + $0x8] sm:$0xff]
    %v117 = vld [vmem:[%s4 + $0x10] sm:$0xff]
    %v118 = vld [vmem:[%s4 + $0x18] sm:$0xff]
    %v119 = vld [vmem:[%s4 + $0x20] sm:$0xff]
    %v120 = vld [vmem:[%s4 + $0x28] sm:$0xff]
    %v121 = vld [vmem:[%s4 + $0x30] sm:$0xff]
    %v122 = vld [vmem:[%s4 + $0x38] sm:$0xff]
    %v123 = vld [vmem:[%s4 + $0x40] sm:$0xff]
    %v124 = vld [vmem:[%s4 + $0x48] sm:$0xff]
    %v125 = vld [vmem:[%s4 + $0x50] sm:$0xff]
    %v126 = vld [vmem:[%s4 + $0x58] sm:$0xff]
    %v127 = vld [vmem:[%s4 + $0x60] sm:$0xff]
    %v128 = vld [vmem:[%s4 + $0x68] sm:$0xff]
    %v129 = vld [vmem:[%s4 + $0x70] sm:$0xff]
    %v130 = vld [vmem:[%s4 + $0x78] sm:$0xff]
    %v131 = vld [vmem:[%s4 + $0x80] sm:$0xff]
    %v132 = vld [vmem:[%s4 + $0x88] sm:$0xff]
    %v133 = vld [vmem:[%s4 + $0x90] sm:$0xff]
    %v134 = vld [vmem:[%s4 + $0x98] sm:$0xff]
    %v135 = vld [vmem:[%s4 + $0xa0] sm:$0xff]
    %v136 = vld [vmem:[%s4 + $0xa8] sm:$0xff]
    %v137 = vld [vmem:[%s4 + $0xb0] sm:$0xff]
    %v138 = vld [vmem:[%s4 + $0xb8] sm:$0xff]
    %v139 = vld [vmem:[%s4 + $0xc0] sm:$0xff]
    %v140 = vld [vmem:[%s4 + $0xc8] sm:$0xff]
    %v141 = vld [vmem:[%s4 + $0xd0] sm:$0xff]
    %v142 = vld [vmem:[%s4 + $0xd8] sm:$0xff]
    %v143 = vld [vmem:[%s4 + $0xe0] sm:$0xff]
    %v144 = vld [vmem:[%s4 + $0xe8] sm:$0xff]
    %v145 = vld [vmem:[%s4 + $0xf0] sm:$0xff]
    %v146 = vld [vmem:[%s4 + $0xf8] sm:$0xff]
    %v147 = vld [vmem:[%s4 + $0x100] sm:$0xff]
    %v148 = vld [vmem:[%s4 + $0x108] sm:$0xff]
    %v149 = vld [vmem:[%s4 + $0x110] sm:$0xff]
    %v150 = vld [vmem:[%s4 + $0x118] sm:$0xff]
    %v151 = vld [vmem:[%s4 + $0x120] sm:$0xff]
    %v152 = vld [vmem:[%s4 + $0x128] sm:$0xff]
    %v153 = vld [vmem:[%s4 + $0x130] sm:$0xff]
    %v154 = vld [vmem:[%s4 + $0x138] sm:$0xff]
    %v155 = vld [vmem:[%s4 + $0x140] sm:$0xff]
    %v156 = vld [vmem:[%s4 + $0x148] sm:$0xff]
    %v157 = vld [vmem:[%s4 + $0x150] sm:$0xff]
    %v158 = vld [vmem:[%s4 + $0x158] sm:$0xff]
    %v159 = vld [vmem:[%s4 + $0x160] sm:$0xff]
    %v160 = vld [vmem:[%s4 + $0x168] sm:$0xff]
    %v161 = vld [vmem:[%s4 + $0x170] sm:$0xff]
    %v162 = vld [vmem:[%s4 + $0x178] sm:$0xff]
    %v163 = vld [vmem:[%s4 + $0x180] sm:$0xff]
    %v164 = vld [vmem:[%s4 + $0x188] sm:$0xff]
    %v165 = vld [vmem:[%s4 + $0x190] sm:$0xff]
    %v166 = vld [vmem:[%s4 + $0x198] sm:$0xff]
    %v167 = vld [vmem:[%s4 + $0x1a0] sm:$0xff]
    %v168 = vld [vmem:[%s4 + $0x1a8] sm:$0xff]
    %v169 = vld [vmem:[%s4 + $0x1b0] sm:$0xff]
    %v170 = vld [vmem:[%s4 + $0x1b8] sm:$0xff]
    %v171 = vld [vmem:[%s4 + $0x1c0] sm:$0xff]
    %v172 = vld [vmem:[%s4 + $0x1c8] sm:$0xff]
    %v173 = vld [vmem:[%s4 + $0x1d0] sm:$0xff]
    %v174 = vld [vmem:[%s4 + $0x1d8] sm:$0xff]
    %v175 = vld [vmem:[%s4 + $0x1e0] sm:$0xff]
    %v176 = vld [vmem:[%s4 + $0x1e8] sm:$0xff]
    %v177 = vld [vmem:[%s4 + $0x1f0] sm:$0xff]
    %v178 = vld [vmem:[%s4 + $0x1f8] sm:$0xff]
    %v179 = vpack.c.bf16 %v117, %v115
    %v180 = vpack.c.bf16 %v118, %v116
    %v181 = vpack.c.bf16 %v121, %v119
    %v182 = vpack.c.bf16 %v122, %v120
    %v183 = vpack.c.bf16 %v125, %v123
    %v184 = vpack.c.bf16 %v126, %v124
    %v185 = vpack.c.bf16 %v129, %v127
    %v186 = vpack.c.bf16 %v130, %v128
    %v187 = vpack.c.bf16 %v133, %v131
    %v188 = vpack.c.bf16 %v134, %v132
    %v189 = vpack.c.bf16 %v137, %v135
    %v190 = vpack.c.bf16 %v138, %v136
    %v191 = vpack.c.bf16 %v141, %v139
    %v192 = vpack.c.bf16 %v142, %v140
    %v193 = vpack.c.bf16 %v145, %v143
    %v194 = vpack.c.bf16 %v146, %v144
    %v195 = vpack.c.bf16 %v149, %v147
    %v196 = vpack.c.bf16 %v150, %v148
    %v197 = vpack.c.bf16 %v153, %v151
    %v198 = vpack.c.bf16 %v154, %v152
    %v199 = vpack.c.bf16 %v157, %v155
    %v200 = vpack.c.bf16 %v158, %v156
    %v201 = vpack.c.bf16 %v161, %v159
    %v202 = vpack.c.bf16 %v162, %v160
    %v203 = vpack.c.bf16 %v165, %v163
    %v204 = vpack.c.bf16 %v166, %v164
    %v205 = vpack.c.bf16 %v169, %v167
    %v206 = vpack.c.bf16 %v170, %v168
    %v207 = vpack.c.bf16 %v173, %v171
    %v208 = vpack.c.bf16 %v174, %v172
    %v209 = vpack.c.bf16 %v177, %v175
    %v210 = vpack.c.bf16 %v178, %v176
    %v211 = vld [vmem:[%s1] sm:$0xff]
    %v212 = vld [vmem:[%s1 + $0x8] sm:$0xff]
    %v213 = vpack.c.bf16 %v211, %v211
    %v214 = vpack.c.bf16 %v212, %v212
    %v215 = vld [vmem:[%s5] sm:$0xff]
    %v216 = vld [vmem:[%s5 + $0x8] sm:$0xff]
    %v217 = vld [vmem:[%s5 + $0x10] sm:$0xff]
    %v218 = vld [vmem:[%s5 + $0x18] sm:$0xff]
    %v219 = vld [vmem:[%s5 + $0x20] sm:$0xff]
    %v220 = vld [vmem:[%s5 + $0x28] sm:$0xff]
    %v221 = vld [vmem:[%s5 + $0x30] sm:$0xff]
    %v222 = vld [vmem:[%s5 + $0x38] sm:$0xff]
    %v223 = vld [vmem:[%s5 + $0x40] sm:$0xff]
    %v224 = vld [vmem:[%s5 + $0x48] sm:$0xff]
    %v225 = vld [vmem:[%s5 + $0x50] sm:$0xff]
    %v226 = vld [vmem:[%s5 + $0x58] sm:$0xff]
    %v227 = vld [vmem:[%s5 + $0x60] sm:$0xff]
    %v228 = vld [vmem:[%s5 + $0x68] sm:$0xff]
    %v229 = vld [vmem:[%s5 + $0x70] sm:$0xff]
    %v230 = vld [vmem:[%s5 + $0x78] sm:$0xff]
    %v231 = vld [vmem:[%s5 + $0x80] sm:$0xff]
    %v232 = vld [vmem:[%s5 + $0x88] sm:$0xff]
    %v233 = vld [vmem:[%s5 + $0x90] sm:$0xff]
    %v234 = vld [vmem:[%s5 + $0x98] sm:$0xff]
    %v235 = vld [vmem:[%s5 + $0xa0] sm:$0xff]
    %v236 = vld [vmem:[%s5 + $0xa8] sm:$0xff]
    %v237 = vld [vmem:[%s5 + $0xb0] sm:$0xff]
    %v238 = vld [vmem:[%s5 + $0xb8] sm:$0xff]
    %v239 = vld [vmem:[%s5 + $0xc0] sm:$0xff]
    %v240 = vld [vmem:[%s5 + $0xc8] sm:$0xff]
    %v241 = vld [vmem:[%s5 + $0xd0] sm:$0xff]
    %v242 = vld [vmem:[%s5 + $0xd8] sm:$0xff]
    %v243 = vld [vmem:[%s5 + $0xe0] sm:$0xff]
    %v244 = vld [vmem:[%s5 + $0xe8] sm:$0xff]
    %v245 = vld [vmem:[%s5 + $0xf0] sm:$0xff]
    %v246 = vld [vmem:[%s5 + $0xf8] sm:$0xff]
    %v247 = vld [vmem:[%s5 + $0x100] sm:$0xff]
    %v248 = vld [vmem:[%s5 + $0x108] sm:$0xff]
    %v249 = vld [vmem:[%s5 + $0x110] sm:$0xff]
    %v250 = vld [vmem:[%s5 + $0x118] sm:$0xff]
    %v251 = vld [vmem:[%s5 + $0x120] sm:$0xff]
    %v252 = vld [vmem:[%s5 + $0x128] sm:$0xff]
    %v253 = vld [vmem:[%s5 + $0x130] sm:$0xff]
    %v254 = vld [vmem:[%s5 + $0x138] sm:$0xff]
    %v255 = vld [vmem:[%s5 + $0x140] sm:$0xff]
    %v256 = vld [vmem:[%s5 + $0x148] sm:$0xff]
    %v257 = vld [vmem:[%s5 + $0x150] sm:$0xff]
    %v258 = vld [vmem:[%s5 + $0x158] sm:$0xff]
    %v259 = vld [vmem:[%s5 + $0x160] sm:$0xff]
    %v260 = vld [vmem:[%s5 + $0x168] sm:$0xff]
    %v261 = vld [vmem:[%s5 + $0x170] sm:$0xff]
    %v262 = vld [vmem:[%s5 + $0x178] sm:$0xff]
    %v263 = vld [vmem:[%s5 + $0x180] sm:$0xff]
    %v264 = vld [vmem:[%s5 + $0x188] sm:$0xff]
    %v265 = vld [vmem:[%s5 + $0x190] sm:$0xff]
    %v266 = vld [vmem:[%s5 + $0x198] sm:$0xff]
    %v267 = vld [vmem:[%s5 + $0x1a0] sm:$0xff]
    %v268 = vld [vmem:[%s5 + $0x1a8] sm:$0xff]
    %v269 = vld [vmem:[%s5 + $0x1b0] sm:$0xff]
    %v270 = vld [vmem:[%s5 + $0x1b8] sm:$0xff]
    %v271 = vld [vmem:[%s5 + $0x1c0] sm:$0xff]
    %v272 = vld [vmem:[%s5 + $0x1c8] sm:$0xff]
    %v273 = vld [vmem:[%s5 + $0x1d0] sm:$0xff]
    %v274 = vld [vmem:[%s5 + $0x1d8] sm:$0xff]
    %v275 = vld [vmem:[%s5 + $0x1e0] sm:$0xff]
    %v276 = vld [vmem:[%s5 + $0x1e8] sm:$0xff]
    %v277 = vld [vmem:[%s5 + $0x1f0] sm:$0xff]
    %v278 = vld [vmem:[%s5 + $0x1f8] sm:$0xff]
    %v279 = vpack.c.bf16 %v217, %v215
    %v280 = vpack.c.bf16 %v218, %v216
    %v281 = vpack.c.bf16 %v221, %v219
    %v282 = vpack.c.bf16 %v222, %v220
    %v283 = vpack.c.bf16 %v225, %v223
    %v284 = vpack.c.bf16 %v226, %v224
    %v285 = vpack.c.bf16 %v229, %v227
    %v286 = vpack.c.bf16 %v230, %v228
    %v287 = vpack.c.bf16 %v233, %v231
    %v288 = vpack.c.bf16 %v234, %v232
    %v289 = vpack.c.bf16 %v237, %v235
    %v290 = vpack.c.bf16 %v238, %v236
    %v291 = vpack.c.bf16 %v241, %v239
    %v292 = vpack.c.bf16 %v242, %v240
    %v293 = vpack.c.bf16 %v245, %v243
    %v294 = vpack.c.bf16 %v246, %v244
    %v295 = vpack.c.bf16 %v249, %v247
    %v296 = vpack.c.bf16 %v250, %v248
    %v297 = vpack.c.bf16 %v253, %v251
    %v298 = vpack.c.bf16 %v254, %v252
    %v299 = vpack.c.bf16 %v257, %v255
    %v300 = vpack.c.bf16 %v258, %v256
    %v301 = vpack.c.bf16 %v261, %v259
    %v302 = vpack.c.bf16 %v262, %v260
    %v303 = vpack.c.bf16 %v265, %v263
    %v304 = vpack.c.bf16 %v266, %v264
    %v305 = vpack.c.bf16 %v269, %v267
    %v306 = vpack.c.bf16 %v270, %v268
    %v307 = vpack.c.bf16 %v273, %v271
    %v308 = vpack.c.bf16 %v274, %v272
    %v309 = vpack.c.bf16 %v277, %v275
    %v310 = vpack.c.bf16 %v278, %v276
    %311 = vmatprep.subr.bf16.mxu0 %v280
    %312 = vmatpush1.bf16.msra.mxu0 %v279
    %313 = vmatprep.subr.bf16.mxu0 %v282
    %314 = vmatpush1.bf16.msra.mxu0 %v281
    %315 = vmatprep.subr.bf16.mxu0 %v284
    %316 = vmatpush1.bf16.msra.mxu0 %v283
    %317 = vmatprep.subr.bf16.mxu0 %v286
    %318 = vmatpush1.bf16.msra.mxu0 %v285
    %319 = vmatprep.subr.bf16.mxu0 %v288
    %320 = vmatpush1.bf16.msra.mxu0 %v287
    %321 = vmatprep.subr.bf16.mxu0 %v290
    %322 = vmatpush1.bf16.msra.mxu0 %v289
    %323 = vmatprep.subr.bf16.mxu0 %v292
    %324 = vmatpush1.bf16.msra.mxu0 %v291
    %325 = vmatprep.subr.bf16.mxu0 %v294
    %326 = vmatpush1.bf16.msra.mxu0 %v293
    %327 = vmatprep.subr.bf16.mxu0 %v296
    %328 = vmatpush1.bf16.msra.mxu0 %v295
    %329 = vmatprep.subr.bf16.mxu0 %v298
    %330 = vmatpush1.bf16.msra.mxu0 %v297
    %331 = vmatprep.subr.bf16.mxu0 %v300
    %332 = vmatpush1.bf16.msra.mxu0 %v299
    %333 = vmatprep.subr.bf16.mxu0 %v302
    %334 = vmatpush1.bf16.msra.mxu0 %v301
    %335 = vmatprep.subr.bf16.mxu0 %v304
    %336 = vmatpush1.bf16.msra.mxu0 %v303
    %337 = vmatprep.subr.bf16.mxu0 %v306
    %338 = vmatpush1.bf16.msra.mxu0 %v305
    %339 = vmatprep.subr.bf16.mxu0 %v308
    %340 = vmatpush1.bf16.msra.mxu0 %v307
    %341 = vmatprep.subr.bf16.mxu0 %v310
    %342 = vmatpush1.bf16.msra.mxu0 %v309
    %343 = vmatprep.mubr.bf16.mxu0 %v214
    %344 = vmatmul.mubr.bf16.gmra.mrb[0].mxu0 %v213
    %v345 = vpop.f32.mrb[0].mxu0
    %v346 = vadd.f32 0.0, %v345
    %v347 = vpop.f32.mrb[0].mxu0
    %v348 = vadd.f32 0.0, %v347
    %v349 = vpop.f32.mrb[0].mxu0
    %v350 = vpop.f32.mrb[0].mxu0
    %351 = vdwg.mxu0
    %352 = vmatprep.subr.bf16.mxu0 %v180
    %353 = vmatpush1.bf16.msra.mxu0 %v179
    %354 = vmatprep.subr.bf16.mxu0 %v182
    %355 = vmatpush1.bf16.msra.mxu0 %v181
    %356 = vmatprep.subr.bf16.mxu0 %v184
    %357 = vmatpush1.bf16.msra.mxu0 %v183
    %358 = vmatprep.subr.bf16.mxu0 %v186
    %359 = vmatpush1.bf16.msra.mxu0 %v185
    %360 = vmatprep.subr.bf16.mxu0 %v188
    %361 = vmatpush1.bf16.msra.mxu0 %v187
    %362 = vmatprep.subr.bf16.mxu0 %v190
    %363 = vmatpush1.bf16.msra.mxu0 %v189
    %364 = vmatprep.subr.bf16.mxu0 %v192
    %365 = vmatpush1.bf16.msra.mxu0 %v191
    %366 = vmatprep.subr.bf16.mxu0 %v194
    %367 = vmatpush1.bf16.msra.mxu0 %v193
    %368 = vmatprep.subr.bf16.mxu0 %v196
    %369 = vmatpush1.bf16.msra.mxu0 %v195
    %370 = vmatprep.subr.bf16.mxu0 %v198
    %371 = vmatpush1.bf16.msra.mxu0 %v197
    %372 = vmatprep.subr.bf16.mxu0 %v200
    %373 = vmatpush1.bf16.msra.mxu0 %v199
    %374 = vmatprep.subr.bf16.mxu0 %v202
    %375 = vmatpush1.bf16.msra.mxu0 %v201
    %376 = vmatprep.subr.bf16.mxu0 %v204
    %377 = vmatpush1.bf16.msra.mxu0 %v203
    %378 = vmatprep.subr.bf16.mxu0 %v206
    %379 = vmatpush1.bf16.msra.mxu0 %v205
    %380 = vmatprep.subr.bf16.mxu0 %v208
    %381 = vmatpush1.bf16.msra.mxu0 %v207
    %382 = vmatprep.subr.bf16.mxu0 %v210
    %383 = vmatpush1.bf16.msra.mxu0 %v209
    %384 = vmatprep.mubr.bf16.mxu0 %v114
    %385 = vmatmul.mubr.bf16.gmra.mrb[0].mxu0 %v113
    %v386 = vpop.f32.mrb[0].mxu0
    %v387 = vadd.f32 %v346, %v386
    %v388 = vpop.f32.mrb[0].mxu0
    %v389 = vadd.f32 %v348, %v388
    %v390 = vpop.f32.mrb[0].mxu0
    %v391 = vpop.f32.mrb[0].mxu0
    %392 = vdwg.mxu0
    %v393 = vpack.c.bf16 %v103, %v103
    %v394 = vpack.c.bf16 %v104, %v104
    %v395 = vpack.c.bf16 %v105, %v105
    %v396 = vpack.c.bf16 %v106, %v106
    %v397 = vpack.c.bf16 %v107, %v107
    %v398 = vpack.c.bf16 %v108, %v108
    %v399 = vpack.c.bf16 %v109, %v109
    %v400 = vpack.c.bf16 %v110, %v110
    %v401 = vld [vmem:[%s6] sm:$0xff]
    %v402 = vld [vmem:[%s6 + $0x8] sm:$0xff]
    %v403 = vld [vmem:[%s6 + $0x10] sm:$0xff]
    %v404 = vld [vmem:[%s6 + $0x18] sm:$0xff]
    %v405 = vld [vmem:[%s6 + $0x20] sm:$0xff]
    %v406 = vld [vmem:[%s6 + $0x28] sm:$0xff]
    %v407 = vld [vmem:[%s6 + $0x30] sm:$0xff]
    %v408 = vld [vmem:[%s6 + $0x38] sm:$0xff]
    %v409 = vld [vmem:[%s6 + $0x40] sm:$0xff]
    %v410 = vld [vmem:[%s6 + $0x48] sm:$0xff]
    %v411 = vld [vmem:[%s6 + $0x50] sm:$0xff]
    %v412 = vld [vmem:[%s6 + $0x58] sm:$0xff]
    %v413 = vld [vmem:[%s6 + $0x60] sm:$0xff]
    %v414 = vld [vmem:[%s6 + $0x68] sm:$0xff]
    %v415 = vld [vmem:[%s6 + $0x70] sm:$0xff]
    %v416 = vld [vmem:[%s6 + $0x78] sm:$0xff]
    %v417 = vld [vmem:[%s6 + $0x80] sm:$0xff]
    %v418 = vld [vmem:[%s6 + $0x88] sm:$0xff]
    %v419 = vld [vmem:[%s6 + $0x90] sm:$0xff]
    %v420 = vld [vmem:[%s6 + $0x98] sm:$0xff]
    %v421 = vld [vmem:[%s6 + $0xa0] sm:$0xff]
    %v422 = vld [vmem:[%s6 + $0xa8] sm:$0xff]
    %v423 = vld [vmem:[%s6 + $0xb0] sm:$0xff]
    %v424 = vld [vmem:[%s6 + $0xb8] sm:$0xff]
    %v425 = vld [vmem:[%s6 + $0xc0] sm:$0xff]
    %v426 = vld [vmem:[%s6 + $0xc8] sm:$0xff]
    %v427 = vld [vmem:[%s6 + $0xd0] sm:$0xff]
    %v428 = vld [vmem:[%s6 + $0xd8] sm:$0xff]
    %v429 = vld [vmem:[%s6 + $0xe0] sm:$0xff]
    %v430 = vld [vmem:[%s6 + $0xe8] sm:$0xff]
    %v431 = vld [vmem:[%s6 + $0xf0] sm:$0xff]
    %v432 = vld [vmem:[%s6 + $0xf8] sm:$0xff]
    %v433 = vpack.c.bf16 %v403, %v401
    %v434 = vpack.c.bf16 %v404, %v402
    %v435 = vpack.c.bf16 %v407, %v405
    %v436 = vpack.c.bf16 %v408, %v406
    %v437 = vpack.c.bf16 %v411, %v409
    %v438 = vpack.c.bf16 %v412, %v410
    %v439 = vpack.c.bf16 %v415, %v413
    %v440 = vpack.c.bf16 %v416, %v414
    %v441 = vpack.c.bf16 %v419, %v417
    %v442 = vpack.c.bf16 %v420, %v418
    %v443 = vpack.c.bf16 %v423, %v421
    %v444 = vpack.c.bf16 %v424, %v422
    %v445 = vpack.c.bf16 %v427, %v425
    %v446 = vpack.c.bf16 %v428, %v426
    %v447 = vpack.c.bf16 %v431, %v429
    %v448 = vpack.c.bf16 %v432, %v430
    %v457 = vunpack.c.l.b16 %v393
    %v458 = vunpack.c.l.b16 %v394
    %v459 = vunpack.c.l.b16 %v395
    %v460 = vunpack.c.l.b16 %v396
    %v461 = vunpack.c.l.b16 %v397
    %v462 = vunpack.c.l.b16 %v398
    %v463 = vunpack.c.l.b16 %v399
    %v464 = vunpack.c.l.b16 %v400
    %vm465 = vcmask 1041409
    %v466 = vsel %vm465, %v458, %v457
    %vm467 = vcmask 1042434
    %v468 = vsel %vm467, %v459, %v466
    %vm469 = vcmask 1043459
    %v470 = vsel %vm469, %v460, %v468
    %vm471 = vcmask 1044484
    %v472 = vsel %vm471, %v461, %v470
    %vm473 = vcmask 1045509
    %v474 = vsel %vm473, %v462, %v472
    %vm475 = vcmask 1046534
    %v476 = vsel %vm475, %v463, %v474
    %vm477 = vcmask 1047559
    %v478 = vsel %vm477, %v464, %v476
    %v479 = vpack.c.b16 %v478, %v478
    %481 = vmatprep.subr.bf16.mxu0 %v434
    %482 = vmatpush1.bf16.msra.mxu0 %v433
    %483 = vmatprep.subr.bf16.mxu0 %v436
    %484 = vmatpush1.bf16.msra.mxu0 %v435
    %485 = vmatprep.subr.bf16.mxu0 %v438
    %486 = vmatpush1.bf16.msra.mxu0 %v437
    %487 = vmatprep.subr.bf16.mxu0 %v440
    %488 = vmatpush1.bf16.msra.mxu0 %v439
    %489 = vmatprep.subr.bf16.mxu0 %v442
    %490 = vmatpush1.bf16.msra.mxu0 %v441
    %491 = vmatprep.subr.bf16.mxu0 %v444
    %492 = vmatpush1.bf16.msra.mxu0 %v443
    %493 = vmatprep.subr.bf16.mxu0 %v446
    %494 = vmatpush1.bf16.msra.mxu0 %v445
    %495 = vmatprep.subr.bf16.mxu0 %v448
    %496 = vmatpush1.bf16.msra.mxu0 %v447
    %497 = vmatprep.subr.bf16.mxu0 0
    %498 = vmatpush1.bf16.msra.mxu0 0
    %499 = vmatprep.subr.bf16.mxu0 0
    %500 = vmatpush1.bf16.msra.mxu0 0
    %501 = vmatprep.subr.bf16.mxu0 0
    %502 = vmatpush1.bf16.msra.mxu0 0
    %503 = vmatprep.subr.bf16.mxu0 0
    %504 = vmatpush1.bf16.msra.mxu0 0
    %505 = vmatprep.subr.bf16.mxu0 0
    %506 = vmatpush1.bf16.msra.mxu0 0
    %507 = vmatprep.subr.bf16.mxu0 0
    %508 = vmatpush1.bf16.msra.mxu0 0
    %509 = vmatprep.subr.bf16.mxu0 0
    %510 = vmatpush1.bf16.msra.mxu0 0
    %511 = vmatprep.subr.bf16.mxu0 0
    %512 = vmatpush1.bf16.msra.mxu0 0
    %513 = vmatprep.mubr.bf16.mxu0 0
    %514 = vmatmul.mubr.bf16.gmra.mrb[0].mxu0 %v479
    %v515 = vpop.f32.mrb[0].mxu0
    %v516 = vadd.f32 0.0, %v515
    %v517 = vpop.f32.mrb[0].mxu0
    %v518 = vadd.f32 0.0, %v517
    %v519 = vpop.f32.mrb[0].mxu0
    %v520 = vpop.f32.mrb[0].mxu0
    %521 = vdwg.mxu0
    %v522 = vadd.f32 %v387, %v516
    %v523 = vadd.f32 %v389, %v518
    %v524 = vld [vmem:[%s7] sm:$0x3]
    %v526 = vlaneseq
    %v527 = vshrl.u32 %v526, 7
    %v528 = vsub.s32 0, %v527
    %v529 = vrot.slane %v524, %v528
    %v530 = vlaneseq
    %v531 = vshrl.u32 %v530, 7
    %v532 = vsub.s32 1, %v531
    %v533 = vrot.slane %v524, %v532
    %v536 = vadd.f32 %v522, %v529
    %v537 = vadd.f32 %v523, %v533
    %v538 = vtanh.pop %v536
    %v539 = vtanh.pop %v537
    %v540 = vld [vmem:[%s3] sm:$0xff]
    %v541 = vld [vmem:[%s3 + $0x8] sm:$0xff]
    %v542 = vld [vmem:[%s3 + $0x10] sm:$0xff]
    %v543 = vld [vmem:[%s3 + $0x18] sm:$0xff]
    %v544 = vmul.f32 %v538, %v540
    %v545 = vmul.f32 %v539, %v541
    %v546 = vadd.f32 %v544, %v545
    %547 = vadd.xlane.f32.xlu0 %v546
    %v548 = vpop.xlane.xlu0 %547
    %v549 = vmul.f32 %v538, %v538
    %v550 = vmul.f32 %v539, %v539
    %v551 = vadd.f32 %v549, %v550
    %552 = vadd.xlane.f32.xlu0 %v551
    %v553 = vpop.xlane.xlu0 %552
    %v554 = vrsqrt.pop %v553
    %v555 = vmul.f32 %v553, %v554
    %vm556 = vcmp.eq.f32.partialorder %v553, inf
    %v557 = vsel %vm556, %v553, %v555
    %vm558 = vcmp.eq.f32.partialorder %v553, 0.0
    %v559 = vand.u32 %v553, 2147483648
    %v560 = vsel %vm558, %v559, %v557
    %v561 = vmax.f32 %v560, 1e-08
    %v562 = vmul.f32 %v540, %v540
    %v563 = vmul.f32 %v541, %v541
    %v564 = vadd.f32 %v562, %v563
    %565 = vadd.xlane.f32.xlu0 %v564
    %v566 = vpop.xlane.xlu0 %565
    %v567 = vrsqrt.pop %v566
    %v568 = vmul.f32 %v566, %v567
    %vm569 = vcmp.eq.f32.partialorder %v566, inf
    %v570 = vsel %vm569, %v566, %v568
    %vm571 = vcmp.eq.f32.partialorder %v566, 0.0
    %v572 = vand.u32 %v566, 2147483648
    %v573 = vsel %vm571, %v572, %v570
    %v574 = vmax.f32 %v573, 1e-08
    %v575 = vmul.f32 %v561, %v574
    %v576 = vrcp.pop %v575
    %v577 = vmul.f32 %v548, %v576
    %v578 = vmul.f32 %v538, %v542
    %v579 = vmul.f32 %v539, %v543
    %v580 = vadd.f32 %v578, %v579
    %581 = vadd.xlane.f32.xlu0 %v580
    %v582 = vpop.xlane.xlu0 %581
    %v583 = vmul.f32 %v542, %v542
    %v584 = vmul.f32 %v543, %v543
    %v585 = vadd.f32 %v583, %v584
    %586 = vadd.xlane.f32.xlu0 %v585
    %v587 = vpop.xlane.xlu0 %586
    %v588 = vrsqrt.pop %v587
    %v589 = vmul.f32 %v587, %v588
    %vm590 = vcmp.eq.f32.partialorder %v587, inf
    %v591 = vsel %vm590, %v587, %v589
    %vm592 = vcmp.eq.f32.partialorder %v587, 0.0
    %v593 = vand.u32 %v587, 2147483648
    %v594 = vsel %vm592, %v593, %v591
    %v595 = vmax.f32 %v594, 1e-08
    %v596 = vmul.f32 %v561, %v595
    %v597 = vrcp.pop %v596
    %v598 = vmul.f32 %v582, %v597
    %v599 = vsub.f32 0.6, %v577
    %v600 = vadd.f32 %v599, %v598
    %v601 = vmax.f32 %v600, 1e-06
    %v603 = vlaneseq
    %v604 = vand.u32 %v603, 127
    %v605 = vlaneseq
    %v606 = vshrl.u32 %v605, 7
    %v607 = vsub.s32 %v604, %v606
    %v608 = vrot.slane %v601, %v607
    %vm610 = vcmask 57344
    %611 = vst.msk [vmem:[#allocation2] sm:$0x1] %vm610, %v608
    // Predicated region
    $region34: #{joint_embeder_forward.7} parent=1 // pred_check
      _
    $region35: #{joint_embeder_forward.7} parent=1 // pred_check_branch
      %613 = sbr.rel (0) target = $region37
    $region36: #{joint_embeder_forward.7} parent=1 // pred_region
      %s615 = ssub.s32 16, 16
      %616 = vsyncadd [#allocation3], %s615
      %s618 = sshll.u32 [#allocation2], 4
      %s619 = int_to_ptr.vmem [resolvable:$true] %s618
      %621 = dma.vmem_to_hbm [thread:$0]  %s619, 16, %s8, [#allocation3]
    $region37: #{joint_embeder_forward.7} parent=1 // pred_fallthru
      _
    // Predicated region
    $region38: #{joint_embeder_forward.7} parent=1 // pred_check
      _
    $region39: #{joint_embeder_forward.7} parent=1 // pred_check_branch
      %623 = sbr.rel (0) target = $region41
    $region40: #{joint_embeder_forward.7} parent=1 // pred_region
      %624 = dma.done [#allocation3], 16
    $region41: #{joint_embeder_forward.7} parent=1 // pred_fallthru
      _
    %625 = vsyncpa [#allocation3], 1

</llo_original>
